<compile_context>
chip_gen: v7x
topology: tpu7x:2x2x1
jax: 0.10.0
libtpu: 0.0.40
codegen_flags: <defaults>
</compile_context>

<pallas_src>
import functools

import jax
import jax.numpy as jnp
from jax.experimental import pallas as pl
from jax.experimental.pallas import tpu as pltpu


# bf16 feeds the native bf16 MXU on v6e/v7x (and helps v5e); accumulation and
# all BN/ReLU math remain f32.  Flip to jnp.float32 for bitwise-tight numerics.
COMPUTE_DTYPE = jnp.bfloat16


# ----------------------------------------------------------------------------
# Conv3d (3x3x3, stride 1, 'same' padding) + fused BN batch-stat partials
# ----------------------------------------------------------------------------

def _conv3d_kernel(xn_ref, x0_ref, w_ref, scale_ref, shift_ref,
                   y_ref, sum_ref, sq_ref, ring_ref, acc_ref,
                   *, D, H, W, fuse_input_bn_relu):
    """One (batch n, depth d) output plane of a 3x3x3 'same' conv.

    xn_ref  : (H, W, Cin)      source plane at depth min(d+1, D-1)
    x0_ref  : (H, W, Cin)      source plane at depth 0 (read only at d == 0)
    w_ref   : (3, 9*Cin, Cout) tap-folded filter bank (kd major; rows (kh,kw,c))
    scale/shift : (1, 1, Cin)  input-side BN coefficients (conv2 only)
    y_ref   : (H, W, Cout)     raw conv output plane
    sum_ref/sq_ref : (1, Cout) per-(n, d) partial channel sums / sums of squares
    ring_ref: (3, H+2, W+2, Cin) rolling window of processed, padded planes
    acc_ref : (H*W, Cout) f32  matmul accumulator
    """
    d = pl.program_id(1)
    cin = xn_ref.shape[-1]
    cout = y_ref.shape[-1]

    def store_plane(raw, slot):
        # Process a freshly arrived plane ONCE: (BN1 + ReLU for conv2) ->
        # spatial zero-pad -> single bf16 cast -> ring slot.
        p = raw.astype(jnp.float32)
        if fuse_input_bn_relu:
            p = jnp.maximum(p * scale_ref[...] + shift_ref[...], 0.0)
        zr = jnp.zeros((1, W, cin), p.dtype)
        p = jnp.concatenate([zr, p, zr], axis=0)              # (H+2, W,   C)
        zc = jnp.zeros((H + 2, 1, cin), p.dtype)
        p = jnp.concatenate([zc, p, zc], axis=1)              # (H+2, W+2, C)
        ring_ref[slot] = p.astype(COMPUTE_DTYPE)

    @pl.when(d == 0)
    def _prime():                                  # start of each n's D sweep
        store_plane(x0_ref[...], 0)                # plane 0 -> ring[0]

    @pl.when(d + 1 < D)
    def _fetch_next():                             # plane d+1 -> ring[(d+1)%3]
        store_plane(xn_ref[...], (d + 1) % 3)

    def tap_matmul(slot, kd):
        # im2col for one kd: 9 static-offset window reads of the padded plane,
        # lane-concatenated into a (H*W, 9*Cin) slab -> ONE bf16 MXU matmul
        # with a fully dense contraction dimension.
        plane = ring_ref[slot]                                 # (H+2, W+2, C)
        wins = [plane[kh:kh + H, kw:kw + W, :]
                for kh in range(3) for kw in range(3)]
        slab = jnp.concatenate(wins, axis=-1).reshape(H * W, 9 * cin)
        return jnp.dot(slab, w_ref[kd], preferred_element_type=jnp.float32)

    # TODO(synk): for large H*W (>= 512) tile the H*W rows of the accumulator
    # so it stays vreg-resident; at the shapes used here it is 8 vregs.
    acc_ref[...] = tap_matmul(d % 3, 1)            # center plane, always valid

    @pl.when(d > 0)                                # skip all-zero plane at d==0
    def _kd0():
        acc_ref[...] += tap_matmul((d - 1) % 3, 0)

    @pl.when(d + 1 < D)                            # skip all-zero plane at d==D-1
    def _kd2():
        acc_ref[...] += tap_matmul((d + 1) % 3, 2)

    acc = acc_ref[...]
    y_ref[...] = acc.reshape(H, W, cout).astype(y_ref.dtype)
    # Per-(n, d) BN partials ride on the conv epilogue (reduced in the wrapper).
    sum_ref[...] = jnp.sum(acc, axis=0, keepdims=True)
    sq_ref[...] = jnp.sum(acc * acc, axis=0, keepdims=True)


def _conv_vmem_limit(H, W, cin, cout, kdim, in_bytes, out_bytes):
    need = 2 * 2 * H * W * cin * in_bytes          # 2 input specs, double-buffered
    need += 2 * H * W * cout * out_bytes           # output block, double-buffered
    need += 2 * 3 * kdim * cout * 2                # bf16 weights (resident)
    need += 3 * (H + 2) * (W + 2) * cin * 2        # bf16 ring scratch
    need += H * W * cout * 4                       # f32 accumulator
    return int(min(max(2 * need, 16 * 2**20), 48 * 2**20))


def conv3d_bn_stats(x, w_folded, scale_in, shift_in, *,
                    fuse_input_bn_relu, out_dtype):
    """3x3x3 'same' conv over an NDHWC input at real channel width.

    x        : (N, D, H, W, Cin)
    w_folded : (3, 9*Cin, Cout) tap-folded bf16 filter bank
    scale_in / shift_in : (1, 1, Cin) input-side BN coefficients (conv2 only)

    Returns (y, part_sum, part_sumsq):
      y          : (N, D, H, W, Cout) raw conv output (no bias; see module note)
      part_sum   : (N, D, 1, Cout) per-(n, d) channel sums (for BN batch stats)
      part_sumsq : (N, D, 1, Cout) per-(n, d) channel sums of squares
    """
    N, D, H, W, cin = x.shape
    kdim, cout = w_folded.shape[1], w_folded.shape[2]

    kernel = functools.partial(_conv3d_kernel, D=D, H=H, W=W,
                               fuse_input_bn_relu=fuse_input_bn_relu)
    vmem_limit = _conv_vmem_limit(H, W, cin, cout, kdim,
                                  jnp.dtype(x.dtype).itemsize,
                                  jnp.dtype(out_dtype).itemsize)

    return pl.pallas_call(
        kernel,
        out_shape=(
            jax.ShapeDtypeStruct((N, D, H, W, cout), out_dtype),
            jax.ShapeDtypeStruct((N, D, 1, cout), jnp.float32),
            jax.ShapeDtypeStruct((N, D, 1, cout), jnp.float32),
        ),
        grid_spec=pltpu.PrefetchScalarGridSpec(
            num_scalar_prefetch=0,
            grid=(N, D),
            in_specs=[
                # "next plane" stream: changes every step -> each plane is
                # fetched exactly once per n (Pallas elides unchanged blocks).
                pl.BlockSpec((None, None, H, W, cin),
                             lambda n, d: (n, jnp.minimum(d + 1, D - 1), 0, 0, 0)),
                # plane 0 (priming at d == 0; constant in d -> fetched once per n)
                pl.BlockSpec((None, None, H, W, cin),
                             lambda n, d: (n, 0, 0, 0, 0)),
                # constant index maps => fetched once, resident in VMEM
                pl.BlockSpec((3, kdim, cout), lambda n, d: (0, 0, 0)),
                pl.BlockSpec((1, 1, cin), lambda n, d: (0, 0, 0)),
                pl.BlockSpec((1, 1, cin), lambda n, d: (0, 0, 0)),
            ],
            out_specs=(
                pl.BlockSpec((None, None, H, W, cout),
                             lambda n, d: (n, d, 0, 0, 0)),
                pl.BlockSpec((None, None, 1, cout), lambda n, d: (n, d, 0, 0)),
                pl.BlockSpec((None, None, 1, cout), lambda n, d: (n, d, 0, 0)),
            ),
            scratch_shapes=[
                pltpu.VMEM((3, H + 2, W + 2, cin), COMPUTE_DTYPE),
                pltpu.VMEM((H * W, cout), jnp.float32),
            ],
        ),
        compiler_params=pltpu.CompilerParams(
            # N is independent (megacore-shardable); D carries the rolling
            # window in VMEM scratch, so it must stay serial.
            dimension_semantics=("parallel", "arbitrary"),
            vmem_limit_bytes=vmem_limit),
    )(x, x, w_folded, scale_in, shift_in)


# ----------------------------------------------------------------------------
# Final fused BatchNorm + ReLU (module output), lane-dense layout
# ----------------------------------------------------------------------------

def _bn_relu_kernel(x_ref, scale_ref, shift_ref, o_ref):
    o_ref[...] = jnp.maximum(x_ref[...] * scale_ref[...] + shift_ref[...], 0.0)


def bn_relu_lane_dense(y, scale, shift, *, block_rows=256):
    """y: (N, D, H, W, C); per-channel scale/shift; returns same shape, f32.

    The (H, W, C) trailing dims are flattened into the lane axis so the
    HBM-bound elementwise pass runs with lane-dense (multiple-of-128) tiles
    even though the real channel count is small.
    """
    N, D, H, W, C = y.shape
    M, F = N * D, H * W * C
    y2 = y.reshape(M, F).astype(jnp.float32)
    scale_row = jnp.tile(scale.reshape(1, C), (1, H * W)).reshape(1, F)
    shift_row = jnp.tile(shift.reshape(1, C), (1, H * W)).reshape(1, F)
    tm = min(block_rows, M)
    out = pl.pallas_call(
        _bn_relu_kernel,
        out_shape=jax.ShapeDtypeStruct((M, F), jnp.float32),
        grid_spec=pltpu.PrefetchScalarGridSpec(
            num_scalar_prefetch=0,
            grid=(pl.cdiv(M, tm),),
            in_specs=[
                pl.BlockSpec((tm, F), lambda i: (i, 0)),
                pl.BlockSpec((1, F), lambda i: (0, 0)),
                pl.BlockSpec((1, F), lambda i: (0, 0)),
            ],
            out_specs=pl.BlockSpec((tm, F), lambda i: (i, 0)),
        ),
        compiler_params=pltpu.CompilerParams(
            dimension_semantics=("parallel",),
            vmem_limit_bytes=int(min(max(6 * tm * F * 4, 16 * 2**20),
                                     48 * 2**20))),
    )(y2, scale_row, shift_row)
    return out.reshape(N, D, H, W, C)


# ----------------------------------------------------------------------------
# Glue: BN coefficient folding, weight layout, parameters, forward pass
# ----------------------------------------------------------------------------

def bn_scale_shift(part_sum, part_sq, count, gamma, beta, eps=1e-5):
    """Fold training-mode BatchNorm (batch stats) into per-channel scale/shift."""
    s = jnp.sum(part_sum, axis=(0, 1, 2))            # (C,)
    sq = jnp.sum(part_sq, axis=(0, 1, 2))            # (C,)
    mean = s / count
    var = jnp.maximum(sq / count - mean * mean, 0.0)  # guard fp cancellation
    scale = gamma / jnp.sqrt(var + eps)
    shift = beta - mean * scale
    return scale, shift


def _fold_conv3d_weight(w):
    """PyTorch (O, Cin, kd, kh, kw) -> (3, 9*Cin, O): kd-major, rows (kh, kw, c)."""
    o, c = w.shape[0], w.shape[1]
    wm = jnp.transpose(w, (2, 3, 4, 1, 0)).reshape(3, 9 * c, o)
    return wm.astype(COMPUTE_DTYPE)


def init_params(key, in_ch, out_ch):
    k1, k2 = jax.random.split(key)
    w1 = 0.1 * jax.random.normal(k1, (out_ch, in_ch, 3, 3, 3), jnp.float32)
    w2 = 0.1 * jax.random.normal(k2, (out_ch, out_ch, 3, 3, 3), jnp.float32)
    # Conv3d bias omitted: exact no-op under the following training-mode BN.
    return {
        "w1": _fold_conv3d_weight(w1),
        "w2": _fold_conv3d_weight(w2),
        "gamma1": jnp.ones((out_ch,), jnp.float32),   # BatchNorm3d init
        "beta1": jnp.zeros((out_ch,), jnp.float32),
        "gamma2": jnp.ones((out_ch,), jnp.float32),
        "beta2": jnp.zeros((out_ch,), jnp.float32),
    }


def double_conv_forward(x_ncdhw, params):
    """Forward pass of DoubleConv.  Input/output in PyTorch NCDHW layout."""
    N, Cin, D, H, W = x_ncdhw.shape
    out_ch = params["w2"].shape[-1]
    count = N * D * H * W                 # elements per channel for BN stats

    # NCDHW -> NDHWC (channels last); real channel width, no lane padding.
    x = jnp.transpose(x_ncdhw, (0, 2, 3, 4, 1)).astype(jnp.float32)

    ones = jnp.ones((1, 1, Cin), jnp.float32)
    zeros = jnp.zeros((1, 1, Cin), jnp.float32)

    # conv1: raw output stored in bf16 (re-normalized downstream, so rounding
    # the pre-BN activation is benign) + per-(n, d) BN1 partials.
    y1, s1, q1 = conv3d_bn_stats(x, params["w1"], ones, zeros,
                                 fuse_input_bn_relu=False,
                                 out_dtype=jnp.bfloat16)
    scale1, shift1 = bn_scale_shift(s1, q1, count,
                                    params["gamma1"], params["beta1"])

    # conv2: BN1 + ReLU applied on the load path (the normalized activation
    # never touches HBM), plus fused BN2 partial-stat accumulation.
    y2, s2, q2 = conv3d_bn_stats(y1, params["w2"],
                                 scale1.reshape(1, 1, -1),
                                 shift1.reshape(1, 1, -1),
                                 fuse_input_bn_relu=True,
                                 out_dtype=jnp.float32)
    scale2, shift2 = bn_scale_shift(s2, q2, count,
                                    params["gamma2"], params["beta2"])

    # final BN2 + ReLU (module output), lane-dense elementwise pass
    a2 = bn_relu_lane_dense(y2, scale2, shift2)

    assert a2.shape[-1] == out_ch
    return jnp.transpose(a2, (0, 4, 1, 2, 3))        # back to NCDHW


if __name__ == "__main__":
    # Small 3D volume consistent with Conv3d/BatchNorm3d: NCDHW = (2, 4, 8, 8, 8)
    N, IN_CH, OUT_CH, D, H, W = 2, 4, 8, 8, 8, 8

    key = jax.random.PRNGKey(0)
    kx, kp = jax.random.split(key)
    x = jax.random.normal(kx, (N, IN_CH, D, H, W), jnp.float32)
    params = init_params(kp, IN_CH, OUT_CH)

    fwd = jax.jit(functools.partial(double_conv_forward, params=params))
    out = jax.block_until_ready(fwd(x))

    assert out.shape == (N, OUT_CH, D, H, W), out.shape
    assert bool(jnp.all(out >= 0.0)), "ReLU output must be non-negative"
    assert bool(jnp.all(jnp.isfinite(out)))
    print("KERNEL_OK")
</pallas_src>

<mosaic_0001>
module attributes {stable_mosaic.version = 11 : i64} {
  func.func @_conv3d_kernel(%arg0: i32, %arg1: i32, %arg2: memref<1x1x8x8x4xf32, #tpu.memory_space<vmem>>, %arg3: memref<1x1x8x8x4xf32, #tpu.memory_space<vmem>>, %arg4: memref<3x36x8xbf16, #tpu.memory_space<vmem>>, %arg5: memref<1x1x4xf32, #tpu.memory_space<vmem>>, %arg6: memref<1x1x4xf32, #tpu.memory_space<vmem>>, %arg7: memref<1x1x8x8x8xbf16, #tpu.memory_space<vmem>>, %arg8: memref<1x1x1x8xf32, #tpu.memory_space<vmem>>, %arg9: memref<1x1x1x8xf32, #tpu.memory_space<vmem>>, %arg10: memref<3x10x10x4xbf16, #tpu.memory_space<vmem>>, %arg11: memref<64x8xf32, #tpu.memory_space<vmem>>) attributes {dimension_semantics = [#tpu.dimension_semantics<parallel>, #tpu.dimension_semantics<arbitrary>], iteration_bounds = array<i64: 2, 8>, scalar_prefetch = 0 : i64, scratch_operands = 2 : i64, tpu.core_type = #tpu.core_type<tc>, window_params = [{transform_indices = @transform_0, window_bounds = array<i64: 1, 1, 8, 8, 4>}, {transform_indices = @transform_1, window_bounds = array<i64: 1, 1, 8, 8, 4>}, {pipeline_mode = #tpu.pipeline_mode<synchronous>, transform_indices = @transform_2, window_bounds = array<i64: 3, 36, 8>}, {pipeline_mode = #tpu.pipeline_mode<synchronous>, transform_indices = @transform_3, window_bounds = array<i64: 1, 1, 4>}, {pipeline_mode = #tpu.pipeline_mode<synchronous>, transform_indices = @transform_4, window_bounds = array<i64: 1, 1, 4>}, {transform_indices = @transform_5, window_bounds = array<i64: 1, 1, 8, 8, 8>}, {transform_indices = @transform_6, window_bounds = array<i64: 1, 1, 1, 8>}, {transform_indices = @transform_7, window_bounds = array<i64: 1, 1, 1, 8>}]} {
    %c0_i32 = arith.constant 0 : i32
    %0 = arith.cmpi eq, %arg1, %c0_i32 : i32
    %1 = arith.extui %0 : i1 to i32
    %c0_i32_0 = arith.constant 0 : i32
    %2 = arith.cmpi ne, %1, %c0_i32_0 : i32
    scf.if %2 {
      %c0_35 = arith.constant 0 : index
      %c0_36 = arith.constant 0 : index
      %c0_37 = arith.constant 0 : index
      %c0_38 = arith.constant 0 : index
      %c0_39 = arith.constant 0 : index
      %59 = vector.load %arg3[%c0_35, %c0_36, %c0_37, %c0_38, %c0_39] : memref<1x1x8x8x4xf32, #tpu.memory_space<vmem>>, vector<1x1x8x8x4xf32>
      %60 = vector.shape_cast %59 : vector<1x1x8x8x4xf32> to vector<8x8x4xf32>
      %cst_40 = arith.constant 0.000000e+00 : f32
      %61 = vector.broadcast %cst_40 : f32 to vector<1x8x4xf32>
      %62 = tpu.concatenate %61, %60, %61 in 0 : vector<1x8x4xf32>, vector<8x8x4xf32>, vector<1x8x4xf32> -> vector<10x8x4xf32>
      %cst_41 = arith.constant 0.000000e+00 : f32
      %63 = vector.broadcast %cst_41 : f32 to vector<10x1x4xf32>
      %64 = tpu.concatenate %63, %62, %63 in 1 : vector<10x1x4xf32>, vector<10x8x4xf32>, vector<10x1x4xf32> -> vector<10x10x4xf32>
      %65 = arith.truncf %64 : vector<10x10x4xf32> to vector<10x10x4xbf16>
      %c0_42 = arith.constant 0 : index
      %c0_43 = arith.constant 0 : index
      %c0_44 = arith.constant 0 : index
      %c0_45 = arith.constant 0 : index
      %66 = vector.load %arg10[%c0_42, %c0_43, %c0_44, %c0_45] : memref<3x10x10x4xbf16, #tpu.memory_space<vmem>>, vector<1x10x10x4xbf16>
      %67 = vector.shape_cast %66 : vector<1x10x10x4xbf16> to vector<10x10x4xbf16>
      %68 = vector.shape_cast %65 : vector<10x10x4xbf16> to vector<1x10x10x4xbf16>
      tpu.vector_store %arg10[%c0_42, %c0_43, %c0_44, %c0_45], %68 {strides = array<i32>} : memref<3x10x10x4xbf16, #tpu.memory_space<vmem>>, vector<1x10x10x4xbf16>,
    } else {
    }
    %c1_i32 = arith.constant 1 : i32
    %3 = arith.addi %arg1, %c1_i32 : i32
    %c8_i32 = arith.constant 8 : i32
    %4 = arith.cmpi slt, %3, %c8_i32 : i32
    %5 = arith.extui %4 : i1 to i32
    %c0_i32_1 = arith.constant 0 : i32
    %6 = arith.cmpi ne, %5, %c0_i32_1 : i32
    scf.if %6 {
      %c0_35 = arith.constant 0 : index
      %c0_36 = arith.constant 0 : index
      %c0_37 = arith.constant 0 : index
      %c0_38 = arith.constant 0 : index
      %c0_39 = arith.constant 0 : index
      %59 = vector.load %arg2[%c0_35, %c0_36, %c0_37, %c0_38, %c0_39] : memref<1x1x8x8x4xf32, #tpu.memory_space<vmem>>, vector<1x1x8x8x4xf32>
      %60 = vector.shape_cast %59 : vector<1x1x8x8x4xf32> to vector<8x8x4xf32>
      %c1_i32_40 = arith.constant 1 : i32
      %61 = arith.addi %arg1, %c1_i32_40 : i32
      %c3_i32_41 = arith.constant 3 : i32
      %c0_i32_42 = arith.constant 0 : i32
      %62 = arith.cmpi eq, %c3_i32_41, %c0_i32_42 : i32
      %c1_i32_43 = arith.constant 1 : i32
      %63 = arith.select %62, %c1_i32_43, %c3_i32_41 : i32
      %64 = arith.remsi %61, %63 : i32
      %c0_i32_44 = arith.constant 0 : i32
      %65 = arith.cmpi ne, %64, %c0_i32_44 : i32
      %c0_i32_45 = arith.constant 0 : i32
      %66 = arith.cmpi slt, %64, %c0_i32_45 : i32
      %c0_i32_46 = arith.constant 0 : i32
      %67 = arith.cmpi slt, %63, %c0_i32_46 : i32
      %68 = arith.xori %66, %67 : i1
      %69 = arith.andi %68, %65 : i1
      %70 = arith.addi %64, %63 : i32
      %71 = arith.select %69, %70, %64 : i32
      %cst_47 = arith.constant 0.000000e+00 : f32
      %72 = vector.broadcast %cst_47 : f32 to vector<1x8x4xf32>
      %73 = tpu.concatenate %72, %60, %72 in 0 : vector<1x8x4xf32>, vector<8x8x4xf32>, vector<1x8x4xf32> -> vector<10x8x4xf32>
      %cst_48 = arith.constant 0.000000e+00 : f32
      %74 = vector.broadcast %cst_48 : f32 to vector<10x1x4xf32>
      %75 = tpu.concatenate %74, %73, %74 in 1 : vector<10x1x4xf32>, vector<10x8x4xf32>, vector<10x1x4xf32> -> vector<10x10x4xf32>
      %76 = arith.truncf %75 : vector<10x10x4xf32> to vector<10x10x4xbf16>
      %77 = arith.index_cast %71 : i32 to index
      %c0_49 = arith.constant 0 : index
      %c0_50 = arith.constant 0 : index
      %c0_51 = arith.constant 0 : index
      %78 = vector.load %arg10[%77, %c0_49, %c0_50, %c0_51] : memref<3x10x10x4xbf16, #tpu.memory_space<vmem>>, vector<1x10x10x4xbf16>
      %79 = vector.shape_cast %78 : vector<1x10x10x4xbf16> to vector<10x10x4xbf16>
      %80 = vector.shape_cast %76 : vector<10x10x4xbf16> to vector<1x10x10x4xbf16>
      tpu.vector_store %arg10[%77, %c0_49, %c0_50, %c0_51], %80 {strides = array<i32>} : memref<3x10x10x4xbf16, #tpu.memory_space<vmem>>, vector<1x10x10x4xbf16>,
    } else {
    }
    %c3_i32 = arith.constant 3 : i32
    %c0_i32_2 = arith.constant 0 : i32
    %7 = arith.cmpi eq, %c3_i32, %c0_i32_2 : i32
    %c1_i32_3 = arith.constant 1 : i32
    %8 = arith.select %7, %c1_i32_3, %c3_i32 : i32
    %9 = arith.remsi %arg1, %8 : i32
    %c0_i32_4 = arith.constant 0 : i32
    %10 = arith.cmpi ne, %9, %c0_i32_4 : i32
    %c0_i32_5 = arith.constant 0 : i32
    %11 = arith.cmpi slt, %9, %c0_i32_5 : i32
    %c0_i32_6 = arith.constant 0 : i32
    %12 = arith.cmpi slt, %8, %c0_i32_6 : i32
    %13 = arith.xori %11, %12 : i1
    %14 = arith.andi %13, %10 : i1
    %15 = arith.addi %9, %8 : i32
    %16 = arith.select %14, %15, %9 : i32
    %17 = arith.index_cast %16 : i32 to index
    %c0 = arith.constant 0 : index
    %c0_7 = arith.constant 0 : index
    %c0_8 = arith.constant 0 : index
    %18 = vector.load %arg10[%17, %c0, %c0_7, %c0_8] : memref<3x10x10x4xbf16, #tpu.memory_space<vmem>>, vector<1x10x10x4xbf16>
    %19 = vector.shape_cast %18 : vector<1x10x10x4xbf16> to vector<10x10x4xbf16>
    %20 = vector.extract_strided_slice %19 {offsets = [0, 0, 0], sizes = [8, 8, 4], strides = [1, 1, 1]} : vector<10x10x4xbf16> to vector<8x8x4xbf16>
    %21 = vector.extract_strided_slice %19 {offsets = [0, 1, 0], sizes = [8, 8, 4], strides = [1, 1, 1]} : vector<10x10x4xbf16> to vector<8x8x4xbf16>
    %22 = vector.extract_strided_slice %19 {offsets = [0, 2, 0], sizes = [8, 8, 4], strides = [1, 1, 1]} : vector<10x10x4xbf16> to vector<8x8x4xbf16>
    %23 = vector.extract_strided_slice %19 {offsets = [1, 0, 0], sizes = [8, 8, 4], strides = [1, 1, 1]} : vector<10x10x4xbf16> to vector<8x8x4xbf16>
    %24 = vector.extract_strided_slice %19 {offsets = [1, 1, 0], sizes = [8, 8, 4], strides = [1, 1, 1]} : vector<10x10x4xbf16> to vector<8x8x4xbf16>
    %25 = vector.extract_strided_slice %19 {offsets = [1, 2, 0], sizes = [8, 8, 4], strides = [1, 1, 1]} : vector<10x10x4xbf16> to vector<8x8x4xbf16>
    %26 = vector.extract_strided_slice %19 {offsets = [2, 0, 0], sizes = [8, 8, 4], strides = [1, 1, 1]} : vector<10x10x4xbf16> to vector<8x8x4xbf16>
    %27 = vector.extract_strided_slice %19 {offsets = [2, 1, 0], sizes = [8, 8, 4], strides = [1, 1, 1]} : vector<10x10x4xbf16> to vector<8x8x4xbf16>
    %28 = vector.extract_strided_slice %19 {offsets = [2, 2, 0], sizes = [8, 8, 4], strides = [1, 1, 1]} : vector<10x10x4xbf16> to vector<8x8x4xbf16>
    %29 = tpu.concatenate %20, %21, %22, %23, %24, %25, %26, %27, %28 in 2 : vector<8x8x4xbf16>, vector<8x8x4xbf16>, vector<8x8x4xbf16>, vector<8x8x4xbf16>, vector<8x8x4xbf16>, vector<8x8x4xbf16>, vector<8x8x4xbf16>, vector<8x8x4xbf16>, vector<8x8x4xbf16> -> vector<8x8x36xbf16>
    %30 = vector.shape_cast %29 : vector<8x8x36xbf16> to vector<64x36xbf16>
    %c1 = arith.constant 1 : index
    %c0_9 = arith.constant 0 : index
    %c0_10 = arith.constant 0 : index
    %31 = vector.load %arg4[%c1, %c0_9, %c0_10] : memref<3x36x8xbf16, #tpu.memory_space<vmem>>, vector<1x36x8xbf16>
    %32 = vector.shape_cast %31 : vector<1x36x8xbf16> to vector<36x8xbf16>
    %cst = arith.constant dense<0.000000e+00> : vector<64x8xf32>
    %33 = tpu.matmul %30, %32, %cst {dimension_numbers = #tpu.dot_dimension_numbers<[1], [0], [0], [1], [0, 0, 1, 1], [], []>} : vector<64x36xbf16>, vector<36x8xbf16>, vector<64x8xf32> -> vector<64x8xf32>
    %c0_11 = arith.constant 0 : index
    %c0_12 = arith.constant 0 : index
    %34 = vector.load %arg11[%c0_11, %c0_12] : memref<64x8xf32, #tpu.memory_space<vmem>>, vector<64x8xf32>
    tpu.vector_store %arg11[%c0_11, %c0_12], %33 {strides = array<i32>} : memref<64x8xf32, #tpu.memory_space<vmem>>, vector<64x8xf32>,
    %c0_i32_13 = arith.constant 0 : i32
    %35 = arith.cmpi sgt, %arg1, %c0_i32_13 : i32
    %36 = arith.extui %35 : i1 to i32
    %c0_i32_14 = arith.constant 0 : i32
    %37 = arith.cmpi ne, %36, %c0_i32_14 : i32
    scf.if %37 {
      %c0_35 = arith.constant 0 : index
      %c0_36 = arith.constant 0 : index
      %59 = vector.load %arg11[%c0_35, %c0_36] : memref<64x8xf32, #tpu.memory_space<vmem>>, vector<64x8xf32>
      %c1_i32_37 = arith.constant 1 : i32
      %60 = arith.subi %arg1, %c1_i32_37 : i32
      %c3_i32_38 = arith.constant 3 : i32
      %c0_i32_39 = arith.constant 0 : i32
      %61 = arith.cmpi eq, %c3_i32_38, %c0_i32_39 : i32
      %c1_i32_40 = arith.constant 1 : i32
      %62 = arith.select %61, %c1_i32_40, %c3_i32_38 : i32
      %63 = arith.remsi %60, %62 : i32
      %c0_i32_41 = arith.constant 0 : i32
      %64 = arith.cmpi ne, %63, %c0_i32_41 : i32
      %c0_i32_42 = arith.constant 0 : i32
      %65 = arith.cmpi slt, %63, %c0_i32_42 : i32
      %c0_i32_43 = arith.constant 0 : i32
      %66 = arith.cmpi slt, %62, %c0_i32_43 : i32
      %67 = arith.xori %65, %66 : i1
      %68 = arith.andi %67, %64 : i1
      %69 = arith.addi %63, %62 : i32
      %70 = arith.select %68, %69, %63 : i32
      %71 = arith.index_cast %70 : i32 to index
      %c0_44 = arith.constant 0 : index
      %c0_45 = arith.constant 0 : index
      %c0_46 = arith.constant 0 : index
      %72 = vector.load %arg10[%71, %c0_44, %c0_45, %c0_46] : memref<3x10x10x4xbf16, #tpu.memory_space<vmem>>, vector<1x10x10x4xbf16>
      %73 = vector.shape_cast %72 : vector<1x10x10x4xbf16> to vector<10x10x4xbf16>
      %74 = vector.extract_strided_slice %73 {offsets = [0, 0, 0], sizes = [8, 8, 4], strides = [1, 1, 1]} : vector<10x10x4xbf16> to vector<8x8x4xbf16>
      %75 = vector.extract_strided_slice %73 {offsets = [0, 1, 0], sizes = [8, 8, 4], strides = [1, 1, 1]} : vector<10x10x4xbf16> to vector<8x8x4xbf16>
      %76 = vector.extract_strided_slice %73 {offsets = [0, 2, 0], sizes = [8, 8, 4], strides = [1, 1, 1]} : vector<10x10x4xbf16> to vector<8x8x4xbf16>
      %77 = vector.extract_strided_slice %73 {offsets = [1, 0, 0], sizes = [8, 8, 4], strides = [1, 1, 1]} : vector<10x10x4xbf16> to vector<8x8x4xbf16>
      %78 = vector.extract_strided_slice %73 {offsets = [1, 1, 0], sizes = [8, 8, 4], strides = [1, 1, 1]} : vector<10x10x4xbf16> to vector<8x8x4xbf16>
      %79 = vector.extract_strided_slice %73 {offsets = [1, 2, 0], sizes = [8, 8, 4], strides = [1, 1, 1]} : vector<10x10x4xbf16> to vector<8x8x4xbf16>
      %80 = vector.extract_strided_slice %73 {offsets = [2, 0, 0], sizes = [8, 8, 4], strides = [1, 1, 1]} : vector<10x10x4xbf16> to vector<8x8x4xbf16>
      %81 = vector.extract_strided_slice %73 {offsets = [2, 1, 0], sizes = [8, 8, 4], strides = [1, 1, 1]} : vector<10x10x4xbf16> to vector<8x8x4xbf16>
      %82 = vector.extract_strided_slice %73 {offsets = [2, 2, 0], sizes = [8, 8, 4], strides = [1, 1, 1]} : vector<10x10x4xbf16> to vector<8x8x4xbf16>
      %83 = tpu.concatenate %74, %75, %76, %77, %78, %79, %80, %81, %82 in 2 : vector<8x8x4xbf16>, vector<8x8x4xbf16>, vector<8x8x4xbf16>, vector<8x8x4xbf16>, vector<8x8x4xbf16>, vector<8x8x4xbf16>, vector<8x8x4xbf16>, vector<8x8x4xbf16>, vector<8x8x4xbf16> -> vector<8x8x36xbf16>
      %84 = vector.shape_cast %83 : vector<8x8x36xbf16> to vector<64x36xbf16>
      %c0_47 = arith.constant 0 : index
      %c0_48 = arith.constant 0 : index
      %c0_49 = arith.constant 0 : index
      %85 = vector.load %arg4[%c0_47, %c0_48, %c0_49] : memref<3x36x8xbf16, #tpu.memory_space<vmem>>, vector<1x36x8xbf16>
      %86 = vector.shape_cast %85 : vector<1x36x8xbf16> to vector<36x8xbf16>
      %cst_50 = arith.constant dense<0.000000e+00> : vector<64x8xf32>
      %87 = tpu.matmul %84, %86, %cst_50 {dimension_numbers = #tpu.dot_dimension_numbers<[1], [0], [0], [1], [0, 0, 1, 1], [], []>} : vector<64x36xbf16>, vector<36x8xbf16>, vector<64x8xf32> -> vector<64x8xf32>
      %88 = arith.addf %59, %87 : vector<64x8xf32>
      %c0_51 = arith.constant 0 : index
      %c0_52 = arith.constant 0 : index
      %89 = vector.load %arg11[%c0_51, %c0_52] : memref<64x8xf32, #tpu.memory_space<vmem>>, vector<64x8xf32>
      tpu.vector_store %arg11[%c0_51, %c0_52], %88 {strides = array<i32>} : memref<64x8xf32, #tpu.memory_space<vmem>>, vector<64x8xf32>,
    } else {
    }
    %c1_i32_15 = arith.constant 1 : i32
    %38 = arith.addi %arg1, %c1_i32_15 : i32
    %c8_i32_16 = arith.constant 8 : i32
    %39 = arith.cmpi slt, %38, %c8_i32_16 : i32
    %40 = arith.extui %39 : i1 to i32
    %c0_i32_17 = arith.constant 0 : i32
    %41 = arith.cmpi ne, %40, %c0_i32_17 : i32
    scf.if %41 {
      %c0_35 = arith.constant 0 : index
      %c0_36 = arith.constant 0 : index
      %59 = vector.load %arg11[%c0_35, %c0_36] : memref<64x8xf32, #tpu.memory_space<vmem>>, vector<64x8xf32>
      %c1_i32_37 = arith.constant 1 : i32
      %60 = arith.addi %arg1, %c1_i32_37 : i32
      %c3_i32_38 = arith.constant 3 : i32
      %c0_i32_39 = arith.constant 0 : i32
      %61 = arith.cmpi eq, %c3_i32_38, %c0_i32_39 : i32
      %c1_i32_40 = arith.constant 1 : i32
      %62 = arith.select %61, %c1_i32_40, %c3_i32_38 : i32
      %63 = arith.remsi %60, %62 : i32
      %c0_i32_41 = arith.constant 0 : i32
      %64 = arith.cmpi ne, %63, %c0_i32_41 : i32
      %c0_i32_42 = arith.constant 0 : i32
      %65 = arith.cmpi slt, %63, %c0_i32_42 : i32
      %c0_i32_43 = arith.constant 0 : i32
      %66 = arith.cmpi slt, %62, %c0_i32_43 : i32
      %67 = arith.xori %65, %66 : i1
      %68 = arith.andi %67, %64 : i1
      %69 = arith.addi %63, %62 : i32
      %70 = arith.select %68, %69, %63 : i32
      %71 = arith.index_cast %70 : i32 to index
      %c0_44 = arith.constant 0 : index
      %c0_45 = arith.constant 0 : index
      %c0_46 = arith.constant 0 : index
      %72 = vector.load %arg10[%71, %c0_44, %c0_45, %c0_46] : memref<3x10x10x4xbf16, #tpu.memory_space<vmem>>, vector<1x10x10x4xbf16>
      %73 = vector.shape_cast %72 : vector<1x10x10x4xbf16> to vector<10x10x4xbf16>
      %74 = vector.extract_strided_slice %73 {offsets = [0, 0, 0], sizes = [8, 8, 4], strides = [1, 1, 1]} : vector<10x10x4xbf16> to vector<8x8x4xbf16>
      %75 = vector.extract_strided_slice %73 {offsets = [0, 1, 0], sizes = [8, 8, 4], strides = [1, 1, 1]} : vector<10x10x4xbf16> to vector<8x8x4xbf16>
      %76 = vector.extract_strided_slice %73 {offsets = [0, 2, 0], sizes = [8, 8, 4], strides = [1, 1, 1]} : vector<10x10x4xbf16> to vector<8x8x4xbf16>
      %77 = vector.extract_strided_slice %73 {offsets = [1, 0, 0], sizes = [8, 8, 4], strides = [1, 1, 1]} : vector<10x10x4xbf16> to vector<8x8x4xbf16>
      %78 = vector.extract_strided_slice %73 {offsets = [1, 1, 0], sizes = [8, 8, 4], strides = [1, 1, 1]} : vector<10x10x4xbf16> to vector<8x8x4xbf16>
      %79 = vector.extract_strided_slice %73 {offsets = [1, 2, 0], sizes = [8, 8, 4], strides = [1, 1, 1]} : vector<10x10x4xbf16> to vector<8x8x4xbf16>
      %80 = vector.extract_strided_slice %73 {offsets = [2, 0, 0], sizes = [8, 8, 4], strides = [1, 1, 1]} : vector<10x10x4xbf16> to vector<8x8x4xbf16>
      %81 = vector.extract_strided_slice %73 {offsets = [2, 1, 0], sizes = [8, 8, 4], strides = [1, 1, 1]} : vector<10x10x4xbf16> to vector<8x8x4xbf16>
      %82 = vector.extract_strided_slice %73 {offsets = [2, 2, 0], sizes = [8, 8, 4], strides = [1, 1, 1]} : vector<10x10x4xbf16> to vector<8x8x4xbf16>
      %83 = tpu.concatenate %74, %75, %76, %77, %78, %79, %80, %81, %82 in 2 : vector<8x8x4xbf16>, vector<8x8x4xbf16>, vector<8x8x4xbf16>, vector<8x8x4xbf16>, vector<8x8x4xbf16>, vector<8x8x4xbf16>, vector<8x8x4xbf16>, vector<8x8x4xbf16>, vector<8x8x4xbf16> -> vector<8x8x36xbf16>
      %84 = vector.shape_cast %83 : vector<8x8x36xbf16> to vector<64x36xbf16>
      %c2 = arith.constant 2 : index
      %c0_47 = arith.constant 0 : index
      %c0_48 = arith.constant 0 : index
      %85 = vector.load %arg4[%c2, %c0_47, %c0_48] : memref<3x36x8xbf16, #tpu.memory_space<vmem>>, vector<1x36x8xbf16>
      %86 = vector.shape_cast %85 : vector<1x36x8xbf16> to vector<36x8xbf16>
      %cst_49 = arith.constant dense<0.000000e+00> : vector<64x8xf32>
      %87 = tpu.matmul %84, %86, %cst_49 {dimension_numbers = #tpu.dot_dimension_numbers<[1], [0], [0], [1], [0, 0, 1, 1], [], []>} : vector<64x36xbf16>, vector<36x8xbf16>, vector<64x8xf32> -> vector<64x8xf32>
      %88 = arith.addf %59, %87 : vector<64x8xf32>
      %c0_50 = arith.constant 0 : index
      %c0_51 = arith.constant 0 : index
      %89 = vector.load %arg11[%c0_50, %c0_51] : memref<64x8xf32, #tpu.memory_space<vmem>>, vector<64x8xf32>
      tpu.vector_store %arg11[%c0_50, %c0_51], %88 {strides = array<i32>} : memref<64x8xf32, #tpu.memory_space<vmem>>, vector<64x8xf32>,
    } else {
    }
    %c0_18 = arith.constant 0 : index
    %c0_19 = arith.constant 0 : index
    %42 = vector.load %arg11[%c0_18, %c0_19] : memref<64x8xf32, #tpu.memory_space<vmem>>, vector<64x8xf32>
    %43 = vector.shape_cast %42 : vector<64x8xf32> to vector<8x8x8xf32>
    %44 = arith.truncf %43 : vector<8x8x8xf32> to vector<8x8x8xbf16>
    %c0_20 = arith.constant 0 : index
    %c0_21 = arith.constant 0 : index
    %c0_22 = arith.constant 0 : index
    %c0_23 = arith.constant 0 : index
    %c0_24 = arith.constant 0 : index
    %45 = vector.load %arg7[%c0_20, %c0_21, %c0_22, %c0_23, %c0_24] : memref<1x1x8x8x8xbf16, #tpu.memory_space<vmem>>, vector<1x1x8x8x8xbf16>
    %46 = vector.shape_cast %45 : vector<1x1x8x8x8xbf16> to vector<8x8x8xbf16>
    %47 = vector.shape_cast %44 : vector<8x8x8xbf16> to vector<1x1x8x8x8xbf16>
    tpu.vector_store %arg7[%c0_20, %c0_21, %c0_22, %c0_23, %c0_24], %47 {strides = array<i32>} : memref<1x1x8x8x8xbf16, #tpu.memory_space<vmem>>, vector<1x1x8x8x8xbf16>,
    %cst_25 = arith.constant dense<0.000000e+00> : vector<8xf32>
    %48 = vector.multi_reduction <add>, %42, %cst_25 [0] : vector<64x8xf32> to vector<8xf32>
    %49 = vector.shape_cast %48 : vector<8xf32> to vector<1x8xf32>
    %c0_26 = arith.constant 0 : index
    %c0_27 = arith.constant 0 : index
    %c0_28 = arith.constant 0 : index
    %c0_29 = arith.constant 0 : index
    %50 = vector.load %arg8[%c0_26, %c0_27, %c0_28, %c0_29] : memref<1x1x1x8xf32, #tpu.memory_space<vmem>>, vector<1x1x1x8xf32>
    %51 = vector.shape_cast %50 : vector<1x1x1x8xf32> to vector<1x8xf32>
    %52 = vector.shape_cast %49 : vector<1x8xf32> to vector<1x1x1x8xf32>
    tpu.vector_store %arg8[%c0_26, %c0_27, %c0_28, %c0_29], %52 {strides = array<i32>} : memref<1x1x1x8xf32, #tpu.memory_space<vmem>>, vector<1x1x1x8xf32>,
    %53 = arith.mulf %42, %42 : vector<64x8xf32>
    %cst_30 = arith.constant dense<0.000000e+00> : vector<8xf32>
    %54 = vector.multi_reduction <add>, %53, %cst_30 [0] : vector<64x8xf32> to vector<8xf32>
    %55 = vector.shape_cast %54 : vector<8xf32> to vector<1x8xf32>
    %c0_31 = arith.constant 0 : index
    %c0_32 = arith.constant 0 : index
    %c0_33 = arith.constant 0 : index
    %c0_34 = arith.constant 0 : index
    %56 = vector.load %arg9[%c0_31, %c0_32, %c0_33, %c0_34] : memref<1x1x1x8xf32, #tpu.memory_space<vmem>>, vector<1x1x1x8xf32>
    %57 = vector.shape_cast %56 : vector<1x1x1x8xf32> to vector<1x8xf32>
    %58 = vector.shape_cast %55 : vector<1x8xf32> to vector<1x1x1x8xf32>
    tpu.vector_store %arg9[%c0_31, %c0_32, %c0_33, %c0_34], %58 {strides = array<i32>} : memref<1x1x1x8xf32, #tpu.memory_space<vmem>>, vector<1x1x1x8xf32>,
    return
  }
  func.func @transform_0(%arg0: i32, %arg1: i32) -> (i32, i32, i32, i32, i32) {
    %c1_i32 = arith.constant 1 : i32
    %0 = arith.addi %arg1, %c1_i32 : i32
    %c7_i32 = arith.constant 7 : i32
    %1 = arith.minsi %0, %c7_i32 : i32
    %c0_i32 = arith.constant 0 : i32
    %c0_i32_0 = arith.constant 0 : i32
    %c0_i32_1 = arith.constant 0 : i32
    %c0_i32_2 = arith.constant 0 : i32
    return %arg0, %1, %c0_i32, %c0_i32_0, %c0_i32_1 : i32, i32, i32, i32, i32
  }
  func.func @transform_1(%arg0: i32, %arg1: i32) -> (i32, i32, i32, i32, i32) {
    %c0_i32 = arith.constant 0 : i32
    %c0_i32_0 = arith.constant 0 : i32
    %c0_i32_1 = arith.constant 0 : i32
    %c0_i32_2 = arith.constant 0 : i32
    %c0_i32_3 = arith.constant 0 : i32
    return %arg0, %c0_i32, %c0_i32_0, %c0_i32_1, %c0_i32_2 : i32, i32, i32, i32, i32
  }
  func.func @transform_2(%arg0: i32, %arg1: i32) -> (i32, i32, i32) {
    %c0_i32 = arith.constant 0 : i32
    %c0_i32_0 = arith.constant 0 : i32
    %c0_i32_1 = arith.constant 0 : i32
    %c0_i32_2 = arith.constant 0 : i32
    return %c0_i32, %c0_i32_0, %c0_i32_1 : i32, i32, i32
  }
  func.func @transform_3(%arg0: i32, %arg1: i32) -> (i32, i32, i32) {
    %c0_i32 = arith.constant 0 : i32
    %c0_i32_0 = arith.constant 0 : i32
    %c0_i32_1 = arith.constant 0 : i32
    %c0_i32_2 = arith.constant 0 : i32
    return %c0_i32, %c0_i32_0, %c0_i32_1 : i32, i32, i32
  }
  func.func @transform_4(%arg0: i32, %arg1: i32) -> (i32, i32, i32) {
    %c0_i32 = arith.constant 0 : i32
    %c0_i32_0 = arith.constant 0 : i32
    %c0_i32_1 = arith.constant 0 : i32
    %c0_i32_2 = arith.constant 0 : i32
    return %c0_i32, %c0_i32_0, %c0_i32_1 : i32, i32, i32
  }
  func.func @transform_5(%arg0: i32, %arg1: i32) -> (i32, i32, i32, i32, i32) {
    %c0_i32 = arith.constant 0 : i32
    %c0_i32_0 = arith.constant 0 : i32
    %c0_i32_1 = arith.constant 0 : i32
    %c0_i32_2 = arith.constant 0 : i32
    return %arg0, %arg1, %c0_i32, %c0_i32_0, %c0_i32_1 : i32, i32, i32, i32, i32
  }
  func.func @transform_6(%arg0: i32, %arg1: i32) -> (i32, i32, i32, i32) {
    %c0_i32 = arith.constant 0 : i32
    %c0_i32_0 = arith.constant 0 : i32
    %c0_i32_1 = arith.constant 0 : i32
    return %arg0, %arg1, %c0_i32, %c0_i32_0 : i32, i32, i32, i32
  }
  func.func @transform_7(%arg0: i32, %arg1: i32) -> (i32, i32, i32, i32) {
    %c0_i32 = arith.constant 0 : i32
    %c0_i32_0 = arith.constant 0 : i32
    %c0_i32_1 = arith.constant 0 : i32
    return %arg0, %arg1, %c0_i32, %c0_i32_0 : i32, i32, i32, i32
  }
}

module attributes {stable_mosaic.version = 11 : i64} {
  func.func @_conv3d_kernel(%arg0: i32, %arg1: i32, %arg2: memref<1x1x8x8x8xbf16, #tpu.memory_space<vmem>>, %arg3: memref<1x1x8x8x8xbf16, #tpu.memory_space<vmem>>, %arg4: memref<3x72x8xbf16, #tpu.memory_space<vmem>>, %arg5: memref<1x1x8xf32, #tpu.memory_space<vmem>>, %arg6: memref<1x1x8xf32, #tpu.memory_space<vmem>>, %arg7: memref<1x1x8x8x8xf32, #tpu.memory_space<vmem>>, %arg8: memref<1x1x1x8xf32, #tpu.memory_space<vmem>>, %arg9: memref<1x1x1x8xf32, #tpu.memory_space<vmem>>, %arg10: memref<3x10x10x8xbf16, #tpu.memory_space<vmem>>, %arg11: memref<64x8xf32, #tpu.memory_space<vmem>>) attributes {dimension_semantics = [#tpu.dimension_semantics<parallel>, #tpu.dimension_semantics<arbitrary>], iteration_bounds = array<i64: 2, 8>, scalar_prefetch = 0 : i64, scratch_operands = 2 : i64, tpu.core_type = #tpu.core_type<tc>, window_params = [{transform_indices = @transform_0, window_bounds = array<i64: 1, 1, 8, 8, 8>}, {transform_indices = @transform_1, window_bounds = array<i64: 1, 1, 8, 8, 8>}, {pipeline_mode = #tpu.pipeline_mode<synchronous>, transform_indices = @transform_2, window_bounds = array<i64: 3, 72, 8>}, {pipeline_mode = #tpu.pipeline_mode<synchronous>, transform_indices = @transform_3, window_bounds = array<i64: 1, 1, 8>}, {pipeline_mode = #tpu.pipeline_mode<synchronous>, transform_indices = @transform_4, window_bounds = array<i64: 1, 1, 8>}, {transform_indices = @transform_5, window_bounds = array<i64: 1, 1, 8, 8, 8>}, {transform_indices = @transform_6, window_bounds = array<i64: 1, 1, 1, 8>}, {transform_indices = @transform_7, window_bounds = array<i64: 1, 1, 1, 8>}]} {
    %c0_i32 = arith.constant 0 : i32
    %0 = arith.cmpi eq, %arg1, %c0_i32 : i32
    %1 = arith.extui %0 : i1 to i32
    %c0_i32_0 = arith.constant 0 : i32
    %2 = arith.cmpi ne, %1, %c0_i32_0 : i32
    scf.if %2 {
      %c0_35 = arith.constant 0 : index
      %c0_36 = arith.constant 0 : index
      %c0_37 = arith.constant 0 : index
      %c0_38 = arith.constant 0 : index
      %c0_39 = arith.constant 0 : index
      %58 = vector.load %arg3[%c0_35, %c0_36, %c0_37, %c0_38, %c0_39] : memref<1x1x8x8x8xbf16, #tpu.memory_space<vmem>>, vector<1x1x8x8x8xbf16>
      %59 = vector.shape_cast %58 : vector<1x1x8x8x8xbf16> to vector<8x8x8xbf16>
      %60 = arith.extf %59 : vector<8x8x8xbf16> to vector<8x8x8xf32>
      %c0_40 = arith.constant 0 : index
      %c0_41 = arith.constant 0 : index
      %c0_42 = arith.constant 0 : index
      %61 = vector.load %arg5[%c0_40, %c0_41, %c0_42] : memref<1x1x8xf32, #tpu.memory_space<vmem>>, vector<1x1x8xf32>
      %62 = vector.broadcast %61 : vector<1x1x8xf32> to vector<8x8x8xf32>
      %63 = arith.mulf %60, %62 : vector<8x8x8xf32>
      %c0_43 = arith.constant 0 : index
      %c0_44 = arith.constant 0 : index
      %c0_45 = arith.constant 0 : index
      %64 = vector.load %arg6[%c0_43, %c0_44, %c0_45] : memref<1x1x8xf32, #tpu.memory_space<vmem>>, vector<1x1x8xf32>
      %65 = vector.broadcast %64 : vector<1x1x8xf32> to vector<8x8x8xf32>
      %66 = arith.addf %63, %65 : vector<8x8x8xf32>
      %cst_46 = arith.constant 0.000000e+00 : f32
      %67 = vector.broadcast %cst_46 : f32 to vector<8x8x8xf32>
      %68 = arith.maximumf %66, %67 : vector<8x8x8xf32>
      %cst_47 = arith.constant 0.000000e+00 : f32
      %69 = vector.broadcast %cst_47 : f32 to vector<1x8x8xf32>
      %70 = tpu.concatenate %69, %68, %69 in 0 : vector<1x8x8xf32>, vector<8x8x8xf32>, vector<1x8x8xf32> -> vector<10x8x8xf32>
      %cst_48 = arith.constant 0.000000e+00 : f32
      %71 = vector.broadcast %cst_48 : f32 to vector<10x1x8xf32>
      %72 = tpu.concatenate %71, %70, %71 in 1 : vector<10x1x8xf32>, vector<10x8x8xf32>, vector<10x1x8xf32> -> vector<10x10x8xf32>
      %73 = arith.truncf %72 : vector<10x10x8xf32> to vector<10x10x8xbf16>
      %c0_49 = arith.constant 0 : index
      %c0_50 = arith.constant 0 : index
      %c0_51 = arith.constant 0 : index
      %c0_52 = arith.constant 0 : index
      %74 = vector.load %arg10[%c0_49, %c0_50, %c0_51, %c0_52] : memref<3x10x10x8xbf16, #tpu.memory_space<vmem>>, vector<1x10x10x8xbf16>
      %75 = vector.shape_cast %74 : vector<1x10x10x8xbf16> to vector<10x10x8xbf16>
      %76 = vector.shape_cast %73 : vector<10x10x8xbf16> to vector<1x10x10x8xbf16>
      tpu.vector_store %arg10[%c0_49, %c0_50, %c0_51, %c0_52], %76 {strides = array<i32>} : memref<3x10x10x8xbf16, #tpu.memory_space<vmem>>, vector<1x10x10x8xbf16>,
    } else {
    }
    %c1_i32 = arith.constant 1 : i32
    %3 = arith.addi %arg1, %c1_i32 : i32
    %c8_i32 = arith.constant 8 : i32
    %4 = arith.cmpi slt, %3, %c8_i32 : i32
    %5 = arith.extui %4 : i1 to i32
    %c0_i32_1 = arith.constant 0 : i32
    %6 = arith.cmpi ne, %5, %c0_i32_1 : i32
    scf.if %6 {
      %c0_35 = arith.constant 0 : index
      %c0_36 = arith.constant 0 : index
      %c0_37 = arith.constant 0 : index
      %c0_38 = arith.constant 0 : index
      %c0_39 = arith.constant 0 : index
      %58 = vector.load %arg2[%c0_35, %c0_36, %c0_37, %c0_38, %c0_39] : memref<1x1x8x8x8xbf16, #tpu.memory_space<vmem>>, vector<1x1x8x8x8xbf16>
      %59 = vector.shape_cast %58 : vector<1x1x8x8x8xbf16> to vector<8x8x8xbf16>
      %c1_i32_40 = arith.constant 1 : i32
      %60 = arith.addi %arg1, %c1_i32_40 : i32
      %c3_i32_41 = arith.constant 3 : i32
      %c0_i32_42 = arith.constant 0 : i32
      %61 = arith.cmpi eq, %c3_i32_41, %c0_i32_42 : i32
      %c1_i32_43 = arith.constant 1 : i32
      %62 = arith.select %61, %c1_i32_43, %c3_i32_41 : i32
      %63 = arith.remsi %60, %62 : i32
      %c0_i32_44 = arith.constant 0 : i32
      %64 = arith.cmpi ne, %63, %c0_i32_44 : i32
      %c0_i32_45 = arith.constant 0 : i32
      %65 = arith.cmpi slt, %63, %c0_i32_45 : i32
      %c0_i32_46 = arith.constant 0 : i32
      %66 = arith.cmpi slt, %62, %c0_i32_46 : i32
      %67 = arith.xori %65, %66 : i1
      %68 = arith.andi %67, %64 : i1
      %69 = arith.addi %63, %62 : i32
      %70 = arith.select %68, %69, %63 : i32
      %71 = arith.extf %59 : vector<8x8x8xbf16> to vector<8x8x8xf32>
      %c0_47 = arith.constant 0 : index
      %c0_48 = arith.constant 0 : index
      %c0_49 = arith.constant 0 : index
      %72 = vector.load %arg5[%c0_47, %c0_48, %c0_49] : memref<1x1x8xf32, #tpu.memory_space<vmem>>, vector<1x1x8xf32>
      %73 = vector.broadcast %72 : vector<1x1x8xf32> to vector<8x8x8xf32>
      %74 = arith.mulf %71, %73 : vector<8x8x8xf32>
      %c0_50 = arith.constant 0 : index
      %c0_51 = arith.constant 0 : index
      %c0_52 = arith.constant 0 : index
      %75 = vector.load %arg6[%c0_50, %c0_51, %c0_52] : memref<1x1x8xf32, #tpu.memory_space<vmem>>, vector<1x1x8xf32>
      %76 = vector.broadcast %75 : vector<1x1x8xf32> to vector<8x8x8xf32>
      %77 = arith.addf %74, %76 : vector<8x8x8xf32>
      %cst_53 = arith.constant 0.000000e+00 : f32
      %78 = vector.broadcast %cst_53 : f32 to vector<8x8x8xf32>
      %79 = arith.maximumf %77, %78 : vector<8x8x8xf32>
      %cst_54 = arith.constant 0.000000e+00 : f32
      %80 = vector.broadcast %cst_54 : f32 to vector<1x8x8xf32>
      %81 = tpu.concatenate %80, %79, %80 in 0 : vector<1x8x8xf32>, vector<8x8x8xf32>, vector<1x8x8xf32> -> vector<10x8x8xf32>
      %cst_55 = arith.constant 0.000000e+00 : f32
      %82 = vector.broadcast %cst_55 : f32 to vector<10x1x8xf32>
      %83 = tpu.concatenate %82, %81, %82 in 1 : vector<10x1x8xf32>, vector<10x8x8xf32>, vector<10x1x8xf32> -> vector<10x10x8xf32>
      %84 = arith.truncf %83 : vector<10x10x8xf32> to vector<10x10x8xbf16>
      %85 = arith.index_cast %70 : i32 to index
      %c0_56 = arith.constant 0 : index
      %c0_57 = arith.constant 0 : index
      %c0_58 = arith.constant 0 : index
      %86 = vector.load %arg10[%85, %c0_56, %c0_57, %c0_58] : memref<3x10x10x8xbf16, #tpu.memory_space<vmem>>, vector<1x10x10x8xbf16>
      %87 = vector.shape_cast %86 : vector<1x10x10x8xbf16> to vector<10x10x8xbf16>
      %88 = vector.shape_cast %84 : vector<10x10x8xbf16> to vector<1x10x10x8xbf16>
      tpu.vector_store %arg10[%85, %c0_56, %c0_57, %c0_58], %88 {strides = array<i32>} : memref<3x10x10x8xbf16, #tpu.memory_space<vmem>>, vector<1x10x10x8xbf16>,
    } else {
    }
    %c3_i32 = arith.constant 3 : i32
    %c0_i32_2 = arith.constant 0 : i32
    %7 = arith.cmpi eq, %c3_i32, %c0_i32_2 : i32
    %c1_i32_3 = arith.constant 1 : i32
    %8 = arith.select %7, %c1_i32_3, %c3_i32 : i32
    %9 = arith.remsi %arg1, %8 : i32
    %c0_i32_4 = arith.constant 0 : i32
    %10 = arith.cmpi ne, %9, %c0_i32_4 : i32
    %c0_i32_5 = arith.constant 0 : i32
    %11 = arith.cmpi slt, %9, %c0_i32_5 : i32
    %c0_i32_6 = arith.constant 0 : i32
    %12 = arith.cmpi slt, %8, %c0_i32_6 : i32
    %13 = arith.xori %11, %12 : i1
    %14 = arith.andi %13, %10 : i1
    %15 = arith.addi %9, %8 : i32
    %16 = arith.select %14, %15, %9 : i32
    %17 = arith.index_cast %16 : i32 to index
    %c0 = arith.constant 0 : index
    %c0_7 = arith.constant 0 : index
    %c0_8 = arith.constant 0 : index
    %18 = vector.load %arg10[%17, %c0, %c0_7, %c0_8] : memref<3x10x10x8xbf16, #tpu.memory_space<vmem>>, vector<1x10x10x8xbf16>
    %19 = vector.shape_cast %18 : vector<1x10x10x8xbf16> to vector<10x10x8xbf16>
    %20 = vector.extract_strided_slice %19 {offsets = [0, 0, 0], sizes = [8, 8, 8], strides = [1, 1, 1]} : vector<10x10x8xbf16> to vector<8x8x8xbf16>
    %21 = vector.extract_strided_slice %19 {offsets = [0, 1, 0], sizes = [8, 8, 8], strides = [1, 1, 1]} : vector<10x10x8xbf16> to vector<8x8x8xbf16>
    %22 = vector.extract_strided_slice %19 {offsets = [0, 2, 0], sizes = [8, 8, 8], strides = [1, 1, 1]} : vector<10x10x8xbf16> to vector<8x8x8xbf16>
    %23 = vector.extract_strided_slice %19 {offsets = [1, 0, 0], sizes = [8, 8, 8], strides = [1, 1, 1]} : vector<10x10x8xbf16> to vector<8x8x8xbf16>
    %24 = vector.extract_strided_slice %19 {offsets = [1, 1, 0], sizes = [8, 8, 8], strides = [1, 1, 1]} : vector<10x10x8xbf16> to vector<8x8x8xbf16>
    %25 = vector.extract_strided_slice %19 {offsets = [1, 2, 0], sizes = [8, 8, 8], strides = [1, 1, 1]} : vector<10x10x8xbf16> to vector<8x8x8xbf16>
    %26 = vector.extract_strided_slice %19 {offsets = [2, 0, 0], sizes = [8, 8, 8], strides = [1, 1, 1]} : vector<10x10x8xbf16> to vector<8x8x8xbf16>
    %27 = vector.extract_strided_slice %19 {offsets = [2, 1, 0], sizes = [8, 8, 8], strides = [1, 1, 1]} : vector<10x10x8xbf16> to vector<8x8x8xbf16>
    %28 = vector.extract_strided_slice %19 {offsets = [2, 2, 0], sizes = [8, 8, 8], strides = [1, 1, 1]} : vector<10x10x8xbf16> to vector<8x8x8xbf16>
    %29 = tpu.concatenate %20, %21, %22, %23, %24, %25, %26, %27, %28 in 2 : vector<8x8x8xbf16>, vector<8x8x8xbf16>, vector<8x8x8xbf16>, vector<8x8x8xbf16>, vector<8x8x8xbf16>, vector<8x8x8xbf16>, vector<8x8x8xbf16>, vector<8x8x8xbf16>, vector<8x8x8xbf16> -> vector<8x8x72xbf16>
    %30 = vector.shape_cast %29 : vector<8x8x72xbf16> to vector<64x72xbf16>
    %c1 = arith.constant 1 : index
    %c0_9 = arith.constant 0 : index
    %c0_10 = arith.constant 0 : index
    %31 = vector.load %arg4[%c1, %c0_9, %c0_10] : memref<3x72x8xbf16, #tpu.memory_space<vmem>>, vector<1x72x8xbf16>
    %32 = vector.shape_cast %31 : vector<1x72x8xbf16> to vector<72x8xbf16>
    %cst = arith.constant dense<0.000000e+00> : vector<64x8xf32>
    %33 = tpu.matmul %30, %32, %cst {dimension_numbers = #tpu.dot_dimension_numbers<[1], [0], [0], [1], [0, 0, 1, 1], [], []>} : vector<64x72xbf16>, vector<72x8xbf16>, vector<64x8xf32> -> vector<64x8xf32>
    %c0_11 = arith.constant 0 : index
    %c0_12 = arith.constant 0 : index
    %34 = vector.load %arg11[%c0_11, %c0_12] : memref<64x8xf32, #tpu.memory_space<vmem>>, vector<64x8xf32>
    tpu.vector_store %arg11[%c0_11, %c0_12], %33 {strides = array<i32>} : memref<64x8xf32, #tpu.memory_space<vmem>>, vector<64x8xf32>,
    %c0_i32_13 = arith.constant 0 : i32
    %35 = arith.cmpi sgt, %arg1, %c0_i32_13 : i32
    %36 = arith.extui %35 : i1 to i32
    %c0_i32_14 = arith.constant 0 : i32
    %37 = arith.cmpi ne, %36, %c0_i32_14 : i32
    scf.if %37 {
      %c0_35 = arith.constant 0 : index
      %c0_36 = arith.constant 0 : index
      %58 = vector.load %arg11[%c0_35, %c0_36] : memref<64x8xf32, #tpu.memory_space<vmem>>, vector<64x8xf32>
      %c1_i32_37 = arith.constant 1 : i32
      %59 = arith.subi %arg1, %c1_i32_37 : i32
      %c3_i32_38 = arith.constant 3 : i32
      %c0_i32_39 = arith.constant 0 : i32
      %60 = arith.cmpi eq, %c3_i32_38, %c0_i32_39 : i32
      %c1_i32_40 = arith.constant 1 : i32
      %61 = arith.select %60, %c1_i32_40, %c3_i32_38 : i32
      %62 = arith.remsi %59, %61 : i32
      %c0_i32_41 = arith.constant 0 : i32
      %63 = arith.cmpi ne, %62, %c0_i32_41 : i32
      %c0_i32_42 = arith.constant 0 : i32
      %64 = arith.cmpi slt, %62, %c0_i32_42 : i32
      %c0_i32_43 = arith.constant 0 : i32
      %65 = arith.cmpi slt, %61, %c0_i32_43 : i32
      %66 = arith.xori %64, %65 : i1
      %67 = arith.andi %66, %63 : i1
      %68 = arith.addi %62, %61 : i32
      %69 = arith.select %67, %68, %62 : i32
      %70 = arith.index_cast %69 : i32 to index
      %c0_44 = arith.constant 0 : index
      %c0_45 = arith.constant 0 : index
      %c0_46 = arith.constant 0 : index
      %71 = vector.load %arg10[%70, %c0_44, %c0_45, %c0_46] : memref<3x10x10x8xbf16, #tpu.memory_space<vmem>>, vector<1x10x10x8xbf16>
      %72 = vector.shape_cast %71 : vector<1x10x10x8xbf16> to vector<10x10x8xbf16>
      %73 = vector.extract_strided_slice %72 {offsets = [0, 0, 0], sizes = [8, 8, 8], strides = [1, 1, 1]} : vector<10x10x8xbf16> to vector<8x8x8xbf16>
      %74 = vector.extract_strided_slice %72 {offsets = [0, 1, 0], sizes = [8, 8, 8], strides = [1, 1, 1]} : vector<10x10x8xbf16> to vector<8x8x8xbf16>
      %75 = vector.extract_strided_slice %72 {offsets = [0, 2, 0], sizes = [8, 8, 8], strides = [1, 1, 1]} : vector<10x10x8xbf16> to vector<8x8x8xbf16>
      %76 = vector.extract_strided_slice %72 {offsets = [1, 0, 0], sizes = [8, 8, 8], strides = [1, 1, 1]} : vector<10x10x8xbf16> to vector<8x8x8xbf16>
      %77 = vector.extract_strided_slice %72 {offsets = [1, 1, 0], sizes = [8, 8, 8], strides = [1, 1, 1]} : vector<10x10x8xbf16> to vector<8x8x8xbf16>
      %78 = vector.extract_strided_slice %72 {offsets = [1, 2, 0], sizes = [8, 8, 8], strides = [1, 1, 1]} : vector<10x10x8xbf16> to vector<8x8x8xbf16>
      %79 = vector.extract_strided_slice %72 {offsets = [2, 0, 0], sizes = [8, 8, 8], strides = [1, 1, 1]} : vector<10x10x8xbf16> to vector<8x8x8xbf16>
      %80 = vector.extract_strided_slice %72 {offsets = [2, 1, 0], sizes = [8, 8, 8], strides = [1, 1, 1]} : vector<10x10x8xbf16> to vector<8x8x8xbf16>
      %81 = vector.extract_strided_slice %72 {offsets = [2, 2, 0], sizes = [8, 8, 8], strides = [1, 1, 1]} : vector<10x10x8xbf16> to vector<8x8x8xbf16>
      %82 = tpu.concatenate %73, %74, %75, %76, %77, %78, %79, %80, %81 in 2 : vector<8x8x8xbf16>, vector<8x8x8xbf16>, vector<8x8x8xbf16>, vector<8x8x8xbf16>, vector<8x8x8xbf16>, vector<8x8x8xbf16>, vector<8x8x8xbf16>, vector<8x8x8xbf16>, vector<8x8x8xbf16> -> vector<8x8x72xbf16>
      %83 = vector.shape_cast %82 : vector<8x8x72xbf16> to vector<64x72xbf16>
      %c0_47 = arith.constant 0 : index
      %c0_48 = arith.constant 0 : index
      %c0_49 = arith.constant 0 : index
      %84 = vector.load %arg4[%c0_47, %c0_48, %c0_49] : memref<3x72x8xbf16, #tpu.memory_space<vmem>>, vector<1x72x8xbf16>
      %85 = vector.shape_cast %84 : vector<1x72x8xbf16> to vector<72x8xbf16>
      %cst_50 = arith.constant dense<0.000000e+00> : vector<64x8xf32>
      %86 = tpu.matmul %83, %85, %cst_50 {dimension_numbers = #tpu.dot_dimension_numbers<[1], [0], [0], [1], [0, 0, 1, 1], [], []>} : vector<64x72xbf16>, vector<72x8xbf16>, vector<64x8xf32> -> vector<64x8xf32>
      %87 = arith.addf %58, %86 : vector<64x8xf32>
      %c0_51 = arith.constant 0 : index
      %c0_52 = arith.constant 0 : index
      %88 = vector.load %arg11[%c0_51, %c0_52] : memref<64x8xf32, #tpu.memory_space<vmem>>, vector<64x8xf32>
      tpu.vector_store %arg11[%c0_51, %c0_52], %87 {strides = array<i32>} : memref<64x8xf32, #tpu.memory_space<vmem>>, vector<64x8xf32>,
    } else {
    }
    %c1_i32_15 = arith.constant 1 : i32
    %38 = arith.addi %arg1, %c1_i32_15 : i32
    %c8_i32_16 = arith.constant 8 : i32
    %39 = arith.cmpi slt, %38, %c8_i32_16 : i32
    %40 = arith.extui %39 : i1 to i32
    %c0_i32_17 = arith.constant 0 : i32
    %41 = arith.cmpi ne, %40, %c0_i32_17 : i32
    scf.if %41 {
      %c0_35 = arith.constant 0 : index
      %c0_36 = arith.constant 0 : index
      %58 = vector.load %arg11[%c0_35, %c0_36] : memref<64x8xf32, #tpu.memory_space<vmem>>, vector<64x8xf32>
      %c1_i32_37 = arith.constant 1 : i32
      %59 = arith.addi %arg1, %c1_i32_37 : i32
      %c3_i32_38 = arith.constant 3 : i32
      %c0_i32_39 = arith.constant 0 : i32
      %60 = arith.cmpi eq, %c3_i32_38, %c0_i32_39 : i32
      %c1_i32_40 = arith.constant 1 : i32
      %61 = arith.select %60, %c1_i32_40, %c3_i32_38 : i32
      %62 = arith.remsi %59, %61 : i32
      %c0_i32_41 = arith.constant 0 : i32
      %63 = arith.cmpi ne, %62, %c0_i32_41 : i32
      %c0_i32_42 = arith.constant 0 : i32
      %64 = arith.cmpi slt, %62, %c0_i32_42 : i32
      %c0_i32_43 = arith.constant 0 : i32
      %65 = arith.cmpi slt, %61, %c0_i32_43 : i32
      %66 = arith.xori %64, %65 : i1
      %67 = arith.andi %66, %63 : i1
      %68 = arith.addi %62, %61 : i32
      %69 = arith.select %67, %68, %62 : i32
      %70 = arith.index_cast %69 : i32 to index
      %c0_44 = arith.constant 0 : index
      %c0_45 = arith.constant 0 : index
      %c0_46 = arith.constant 0 : index
      %71 = vector.load %arg10[%70, %c0_44, %c0_45, %c0_46] : memref<3x10x10x8xbf16, #tpu.memory_space<vmem>>, vector<1x10x10x8xbf16>
      %72 = vector.shape_cast %71 : vector<1x10x10x8xbf16> to vector<10x10x8xbf16>
      %73 = vector.extract_strided_slice %72 {offsets = [0, 0, 0], sizes = [8, 8, 8], strides = [1, 1, 1]} : vector<10x10x8xbf16> to vector<8x8x8xbf16>
      %74 = vector.extract_strided_slice %72 {offsets = [0, 1, 0], sizes = [8, 8, 8], strides = [1, 1, 1]} : vector<10x10x8xbf16> to vector<8x8x8xbf16>
      %75 = vector.extract_strided_slice %72 {offsets = [0, 2, 0], sizes = [8, 8, 8], strides = [1, 1, 1]} : vector<10x10x8xbf16> to vector<8x8x8xbf16>
      %76 = vector.extract_strided_slice %72 {offsets = [1, 0, 0], sizes = [8, 8, 8], strides = [1, 1, 1]} : vector<10x10x8xbf16> to vector<8x8x8xbf16>
      %77 = vector.extract_strided_slice %72 {offsets = [1, 1, 0], sizes = [8, 8, 8], strides = [1, 1, 1]} : vector<10x10x8xbf16> to vector<8x8x8xbf16>
      %78 = vector.extract_strided_slice %72 {offsets = [1, 2, 0], sizes = [8, 8, 8], strides = [1, 1, 1]} : vector<10x10x8xbf16> to vector<8x8x8xbf16>
      %79 = vector.extract_strided_slice %72 {offsets = [2, 0, 0], sizes = [8, 8, 8], strides = [1, 1, 1]} : vector<10x10x8xbf16> to vector<8x8x8xbf16>
      %80 = vector.extract_strided_slice %72 {offsets = [2, 1, 0], sizes = [8, 8, 8], strides = [1, 1, 1]} : vector<10x10x8xbf16> to vector<8x8x8xbf16>
      %81 = vector.extract_strided_slice %72 {offsets = [2, 2, 0], sizes = [8, 8, 8], strides = [1, 1, 1]} : vector<10x10x8xbf16> to vector<8x8x8xbf16>
      %82 = tpu.concatenate %73, %74, %75, %76, %77, %78, %79, %80, %81 in 2 : vector<8x8x8xbf16>, vector<8x8x8xbf16>, vector<8x8x8xbf16>, vector<8x8x8xbf16>, vector<8x8x8xbf16>, vector<8x8x8xbf16>, vector<8x8x8xbf16>, vector<8x8x8xbf16>, vector<8x8x8xbf16> -> vector<8x8x72xbf16>
      %83 = vector.shape_cast %82 : vector<8x8x72xbf16> to vector<64x72xbf16>
      %c2 = arith.constant 2 : index
      %c0_47 = arith.constant 0 : index
      %c0_48 = arith.constant 0 : index
      %84 = vector.load %arg4[%c2, %c0_47, %c0_48] : memref<3x72x8xbf16, #tpu.memory_space<vmem>>, vector<1x72x8xbf16>
      %85 = vector.shape_cast %84 : vector<1x72x8xbf16> to vector<72x8xbf16>
      %cst_49 = arith.constant dense<0.000000e+00> : vector<64x8xf32>
      %86 = tpu.matmul %83, %85, %cst_49 {dimension_numbers = #tpu.dot_dimension_numbers<[1], [0], [0], [1], [0, 0, 1, 1], [], []>} : vector<64x72xbf16>, vector<72x8xbf16>, vector<64x8xf32> -> vector<64x8xf32>
      %87 = arith.addf %58, %86 : vector<64x8xf32>
      %c0_50 = arith.constant 0 : index
      %c0_51 = arith.constant 0 : index
      %88 = vector.load %arg11[%c0_50, %c0_51] : memref<64x8xf32, #tpu.memory_space<vmem>>, vector<64x8xf32>
      tpu.vector_store %arg11[%c0_50, %c0_51], %87 {strides = array<i32>} : memref<64x8xf32, #tpu.memory_space<vmem>>, vector<64x8xf32>,
    } else {
    }
    %c0_18 = arith.constant 0 : index
    %c0_19 = arith.constant 0 : index
    %42 = vector.load %arg11[%c0_18, %c0_19] : memref<64x8xf32, #tpu.memory_space<vmem>>, vector<64x8xf32>
    %43 = vector.shape_cast %42 : vector<64x8xf32> to vector<8x8x8xf32>
    %c0_20 = arith.constant 0 : index
    %c0_21 = arith.constant 0 : index
    %c0_22 = arith.constant 0 : index
    %c0_23 = arith.constant 0 : index
    %c0_24 = arith.constant 0 : index
    %44 = vector.load %arg7[%c0_20, %c0_21, %c0_22, %c0_23, %c0_24] : memref<1x1x8x8x8xf32, #tpu.memory_space<vmem>>, vector<1x1x8x8x8xf32>
    %45 = vector.shape_cast %44 : vector<1x1x8x8x8xf32> to vector<8x8x8xf32>
    %46 = vector.shape_cast %43 : vector<8x8x8xf32> to vector<1x1x8x8x8xf32>
    tpu.vector_store %arg7[%c0_20, %c0_21, %c0_22, %c0_23, %c0_24], %46 {strides = array<i32>} : memref<1x1x8x8x8xf32, #tpu.memory_space<vmem>>, vector<1x1x8x8x8xf32>,
    %cst_25 = arith.constant dense<0.000000e+00> : vector<8xf32>
    %47 = vector.multi_reduction <add>, %42, %cst_25 [0] : vector<64x8xf32> to vector<8xf32>
    %48 = vector.shape_cast %47 : vector<8xf32> to vector<1x8xf32>
    %c0_26 = arith.constant 0 : index
    %c0_27 = arith.constant 0 : index
    %c0_28 = arith.constant 0 : index
    %c0_29 = arith.constant 0 : index
    %49 = vector.load %arg8[%c0_26, %c0_27, %c0_28, %c0_29] : memref<1x1x1x8xf32, #tpu.memory_space<vmem>>, vector<1x1x1x8xf32>
    %50 = vector.shape_cast %49 : vector<1x1x1x8xf32> to vector<1x8xf32>
    %51 = vector.shape_cast %48 : vector<1x8xf32> to vector<1x1x1x8xf32>
    tpu.vector_store %arg8[%c0_26, %c0_27, %c0_28, %c0_29], %51 {strides = array<i32>} : memref<1x1x1x8xf32, #tpu.memory_space<vmem>>, vector<1x1x1x8xf32>,
    %52 = arith.mulf %42, %42 : vector<64x8xf32>
    %cst_30 = arith.constant dense<0.000000e+00> : vector<8xf32>
    %53 = vector.multi_reduction <add>, %52, %cst_30 [0] : vector<64x8xf32> to vector<8xf32>
    %54 = vector.shape_cast %53 : vector<8xf32> to vector<1x8xf32>
    %c0_31 = arith.constant 0 : index
    %c0_32 = arith.constant 0 : index
    %c0_33 = arith.constant 0 : index
    %c0_34 = arith.constant 0 : index
    %55 = vector.load %arg9[%c0_31, %c0_32, %c0_33, %c0_34] : memref<1x1x1x8xf32, #tpu.memory_space<vmem>>, vector<1x1x1x8xf32>
    %56 = vector.shape_cast %55 : vector<1x1x1x8xf32> to vector<1x8xf32>
    %57 = vector.shape_cast %54 : vector<1x8xf32> to vector<1x1x1x8xf32>
    tpu.vector_store %arg9[%c0_31, %c0_32, %c0_33, %c0_34], %57 {strides = array<i32>} : memref<1x1x1x8xf32, #tpu.memory_space<vmem>>, vector<1x1x1x8xf32>,
    return
  }
  func.func @transform_0(%arg0: i32, %arg1: i32) -> (i32, i32, i32, i32, i32) {
    %c1_i32 = arith.constant 1 : i32
    %0 = arith.addi %arg1, %c1_i32 : i32
    %c7_i32 = arith.constant 7 : i32
    %1 = arith.minsi %0, %c7_i32 : i32
    %c0_i32 = arith.constant 0 : i32
    %c0_i32_0 = arith.constant 0 : i32
    %c0_i32_1 = arith.constant 0 : i32
    %c0_i32_2 = arith.constant 0 : i32
    return %arg0, %1, %c0_i32, %c0_i32_0, %c0_i32_1 : i32, i32, i32, i32, i32
  }
  func.func @transform_1(%arg0: i32, %arg1: i32) -> (i32, i32, i32, i32, i32) {
    %c0_i32 = arith.constant 0 : i32
    %c0_i32_0 = arith.constant 0 : i32
    %c0_i32_1 = arith.constant 0 : i32
    %c0_i32_2 = arith.constant 0 : i32
    %c0_i32_3 = arith.constant 0 : i32
    return %arg0, %c0_i32, %c0_i32_0, %c0_i32_1, %c0_i32_2 : i32, i32, i32, i32, i32
  }
  func.func @transform_2(%arg0: i32, %arg1: i32) -> (i32, i32, i32) {
    %c0_i32 = arith.constant 0 : i32
    %c0_i32_0 = arith.constant 0 : i32
    %c0_i32_1 = arith.constant 0 : i32
    %c0_i32_2 = arith.constant 0 : i32
    return %c0_i32, %c0_i32_0, %c0_i32_1 : i32, i32, i32
  }
  func.func @transform_3(%arg0: i32, %arg1: i32) -> (i32, i32, i32) {
    %c0_i32 = arith.constant 0 : i32
    %c0_i32_0 = arith.constant 0 : i32
    %c0_i32_1 = arith.constant 0 : i32
    %c0_i32_2 = arith.constant 0 : i32
    return %c0_i32, %c0_i32_0, %c0_i32_1 : i32, i32, i32
  }
  func.func @transform_4(%arg0: i32, %arg1: i32) -> (i32, i32, i32) {
    %c0_i32 = arith.constant 0 : i32
    %c0_i32_0 = arith.constant 0 : i32
    %c0_i32_1 = arith.constant 0 : i32
    %c0_i32_2 = arith.constant 0 : i32
    return %c0_i32, %c0_i32_0, %c0_i32_1 : i32, i32, i32
  }
  func.func @transform_5(%arg0: i32, %arg1: i32) -> (i32, i32, i32, i32, i32) {
    %c0_i32 = arith.constant 0 : i32
    %c0_i32_0 = arith.constant 0 : i32
    %c0_i32_1 = arith.constant 0 : i32
    %c0_i32_2 = arith.constant 0 : i32
    return %arg0, %arg1, %c0_i32, %c0_i32_0, %c0_i32_1 : i32, i32, i32, i32, i32
  }
  func.func @transform_6(%arg0: i32, %arg1: i32) -> (i32, i32, i32, i32) {
    %c0_i32 = arith.constant 0 : i32
    %c0_i32_0 = arith.constant 0 : i32
    %c0_i32_1 = arith.constant 0 : i32
    return %arg0, %arg1, %c0_i32, %c0_i32_0 : i32, i32, i32, i32
  }
  func.func @transform_7(%arg0: i32, %arg1: i32) -> (i32, i32, i32, i32) {
    %c0_i32 = arith.constant 0 : i32
    %c0_i32_0 = arith.constant 0 : i32
    %c0_i32_1 = arith.constant 0 : i32
    return %arg0, %arg1, %c0_i32, %c0_i32_0 : i32, i32, i32, i32
  }
}

module attributes {stable_mosaic.version = 11 : i64} {
  func.func @_bn_relu_kernel(%arg0: i32, %arg1: memref<16x512xf32, #tpu.memory_space<vmem>>, %arg2: memref<1x512xf32, #tpu.memory_space<vmem>>, %arg3: memref<1x512xf32, #tpu.memory_space<vmem>>, %arg4: memref<16x512xf32, #tpu.memory_space<vmem>>) attributes {dimension_semantics = [#tpu.dimension_semantics<parallel>], iteration_bounds = array<i64: 1>, scalar_prefetch = 0 : i64, scratch_operands = 0 : i64, tpu.core_type = #tpu.core_type<tc>, window_params = [{transform_indices = @transform_0, window_bounds = array<i64: 16, 512>}, {pipeline_mode = #tpu.pipeline_mode<synchronous>, transform_indices = @transform_1, window_bounds = array<i64: 1, 512>}, {pipeline_mode = #tpu.pipeline_mode<synchronous>, transform_indices = @transform_2, window_bounds = array<i64: 1, 512>}, {transform_indices = @transform_3, window_bounds = array<i64: 16, 512>}]} {
    %c0 = arith.constant 0 : index
    %c0_0 = arith.constant 0 : index
    %0 = vector.load %arg1[%c0, %c0_0] : memref<16x512xf32, #tpu.memory_space<vmem>>, vector<16x512xf32>
    %c0_1 = arith.constant 0 : index
    %c0_2 = arith.constant 0 : index
    %1 = vector.load %arg2[%c0_1, %c0_2] : memref<1x512xf32, #tpu.memory_space<vmem>>, vector<1x512xf32>
    %2 = vector.broadcast %1 : vector<1x512xf32> to vector<16x512xf32>
    %3 = arith.mulf %0, %2 : vector<16x512xf32>
    %c0_3 = arith.constant 0 : index
    %c0_4 = arith.constant 0 : index
    %4 = vector.load %arg3[%c0_3, %c0_4] : memref<1x512xf32, #tpu.memory_space<vmem>>, vector<1x512xf32>
    %5 = vector.broadcast %4 : vector<1x512xf32> to vector<16x512xf32>
    %6 = arith.addf %3, %5 : vector<16x512xf32>
    %cst = arith.constant 0.000000e+00 : f32
    %7 = vector.broadcast %cst : f32 to vector<16x512xf32>
    %8 = arith.maximumf %6, %7 : vector<16x512xf32>
    %c0_5 = arith.constant 0 : index
    %c0_6 = arith.constant 0 : index
    %9 = vector.load %arg4[%c0_5, %c0_6] : memref<16x512xf32, #tpu.memory_space<vmem>>, vector<16x512xf32>
    tpu.vector_store %arg4[%c0_5, %c0_6], %8 {strides = array<i32>} : memref<16x512xf32, #tpu.memory_space<vmem>>, vector<16x512xf32>,
    return
  }
  func.func @transform_0(%arg0: i32) -> (i32, i32) {
    %c0_i32 = arith.constant 0 : i32
    %c0_i32_0 = arith.constant 0 : i32
    return %arg0, %c0_i32 : i32, i32
  }
  func.func @transform_1(%arg0: i32) -> (i32, i32) {
    %c0_i32 = arith.constant 0 : i32
    %c0_i32_0 = arith.constant 0 : i32
    %c0_i32_1 = arith.constant 0 : i32
    return %c0_i32, %c0_i32_0 : i32, i32
  }
  func.func @transform_2(%arg0: i32) -> (i32, i32) {
    %c0_i32 = arith.constant 0 : i32
    %c0_i32_0 = arith.constant 0 : i32
    %c0_i32_1 = arith.constant 0 : i32
    return %c0_i32, %c0_i32_0 : i32, i32
  }
  func.func @transform_3(%arg0: i32) -> (i32, i32) {
    %c0_i32 = arith.constant 0 : i32
    %c0_i32_0 = arith.constant 0 : i32
    return %arg0, %c0_i32 : i32, i32
  }
}

</mosaic_0001>

<llo_original>
// kernel: double_conv_forward.3
$region0: #{double_conv_forward.3}
  #allocation0 [shape = 'u32[]', space=smem, size = 0x4, offset = 0x4, fixed_abs, tag = 'smem constant byte address 0x4 - core index']
  #allocation1 [shape = 'u32[144,128]{1,0:T(1,128)}', space=vmem, size = 0x12000, scoped, tag = 'internal scratch']
  #allocation2 [shape = 'bf16[3,10,10,4]{3,2,1,0:T(8,128)(2,1)}', space=vmem, size = 0x1e000, scoped, tag = 'scratch operand']
  #allocation3 [shape = 'f32[64,8]{1,0:T(8,128)}', space=vmem, size = 0x8000, scoped, tag = 'scratch operand']
  %s0 = inlined_call_operand.vmem [shape: f32[2,8,8,8,4], index: 0, kind: input, shape index: {}, may-alias: {0,1}]
  %s1 = inlined_call_operand.vmem [shape: f32[2,8,8,8,4], index: 1, kind: input, shape index: {}, may-alias: {0,1}]
  %s2 = inlined_call_operand.vmem [shape: bf16[3,36,8], index: 2, kind: input, shape index: {}]
  %s3 = inlined_call_operand.vmem [shape: f32[1,1,4], index: 3, kind: input, shape index: {}]
  %s4 = inlined_call_operand.vmem [shape: f32[1,1,4], index: 4, kind: input, shape index: {}]
  %s5 = inlined_call_operand.vmem [shape: bf16[2,8,8,8,8], index: 5, kind: output, shape index: {0}]
  %s6 = inlined_call_operand.vmem [shape: f32[2,8,1,8], index: 6, kind: output, shape index: {1}]
  %s7 = inlined_call_operand.vmem [shape: f32[2,8,1,8], index: 7, kind: output, shape index: {2}]
  %8 = xla_tuple %s5, %s6, %s7
  %s9 = sld [smem:[#allocation0]]
  $region85: #{double_conv_forward.3} parent=0
    _
  %s11 = ssub.s32 1, %s9
  %s12 = scalar_select 0, %s11, %s9
  loop: start=0, step=1, limit=18
  $region2: #{double_conv_forward.3} parent=0 // loop_pre_header
    _
  $region3: #{double_conv_forward.3} parent=0 // loop_header
    %s14 = sphi 0, %s18
    %p15 = scmp.ge.s32.totalorder %s14, 18
    %s21 = sphi 0, %s33
    %s22 = sphi 0, %s29
    %s23 = sphi 0, %s21
    %s24 = sphi 0, %s22
    %s25 = sphi 0, %s23
    %s26 = sphi 0, %s24
    %s44 = sphi 0, %s46
    %s47 = sphi 0, %s44
    %s48 = sphi 0, %s47
    %s64 = sphi 0, %s48
    %s70 = sphi 0, %s72
    %s73 = sphi 0, %s70
    %s74 = sphi 0, %s73
    %s90 = sphi 0, %s74
    %s94 = sphi 0, %s94
    %s96 = sphi 0, %s94
    %s97 = sphi 0, %s96
    %s111 = sphi 0, %s97
    %s115 = sphi 0, %s115
    %s117 = sphi 0, %s115
    %s118 = sphi 0, %s117
    %s132 = sphi 0, %s118
    %s136 = sphi 0, %s136
    %s138 = sphi 0, %s136
    %s139 = sphi 0, %s138
    %s153 = sphi 0, %s139
    %s161 = sphi 0, %s163
    %s164 = sphi 0, %s161
    %s165 = sphi 0, %s164
    %s181 = sphi 0, %s165
    %s189 = sphi 0, %s191
    %s192 = sphi 0, %s189
    %s193 = sphi 0, %s192
    %s209 = sphi 0, %s193
    %s217 = sphi 0, %s219
    %s220 = sphi 0, %s217
    %s221 = sphi 0, %s220
    %s237 = sphi 0, %s221
  $region4: #{double_conv_forward.3} parent=0 // loop_header_branch
    %17 = sbr.rel (%p15) target = $region8
  $region5: #{double_conv_forward.3} parent=0 // loop_body
    %s19 = ssub.s32 %s14, 1
    %s20 = ssub.s32 %s14, 2
    %s27 = sadd.s32 1, %s22
    %p28 = scmp.ge.s32.totalorder %s27, 8
    %s29 = scalar_select %p28, 0, %s27
    %s30 = sadd.s32 1, %s21
    %s31 = scalar_select %p28, %s30, %s21
    %p32 = scmp.ge.s32.totalorder %s31, 2
    %s33 = scalar_select %p32, 0, %s31
    %s34 = sadd.s32 %s22, 1
    %p35 = scmp.lt.s32.totalorder %s34, 7
    %s36 = scalar_select %p35, %s34, 7
    %s37 = sadd.s32 %s29, 1
    %p38 = scmp.lt.s32.totalorder %s37, 7
    %s39 = scalar_select %p38, %s37, 7
    %s40 = ssub.s32 %s21, %s33
    %s41 = ssub.s32 %s36, %s39
    %s42 = sor.u32 %s40, %s41
    %p43 = scmp.eq.s32.totalorder %s42, 0
    %s45 = sadd.s32 %s44, 1
    %s46 = scalar_select %p43, %s44, %s45
    %p49 = pneg %p43
    %p50 = scmp.eq.s32.totalorder %s14, 15
    %p51 = por %p49, %p50
    %p52 = scmp.ne.s32.totalorder %s44, %s47
    %p53 = scmp.eq.s32.totalorder %s14, 0
    %p54 = por %p52, %p53
    %p55 = scmp.ne.s32.totalorder %s44, %s47
    %p56 = scmp.eq.s32.totalorder %s19, 15
    %p57 = por %p55, %p56
    %p58 = scmp.ne.s32.totalorder %s47, %s48
    %p59 = scmp.eq.s32.totalorder %s19, 0
    %p60 = por %p58, %p59
    %p61 = scmp.ne.s32.totalorder %s47, %s48
    %p62 = scmp.eq.s32.totalorder %s20, 15
    %p63 = por %p61, %p62
    %p65 = scmp.ne.s32.totalorder %s48, %s64
    %p66 = scmp.eq.s32.totalorder %s20, 0
    %p67 = por %p65, %p66
    %s68 = ssub.s32 %s21, %s33
    %p69 = scmp.eq.s32.totalorder %s68, 0
    %s71 = sadd.s32 %s70, 1
    %s72 = scalar_select %p69, %s70, %s71
    %p75 = pneg %p69
    %p76 = scmp.eq.s32.totalorder %s14, 15
    %p77 = por %p75, %p76
    %p78 = scmp.ne.s32.totalorder %s70, %s73
    %p79 = scmp.eq.s32.totalorder %s14, 0
    %p80 = por %p78, %p79
    %p81 = scmp.ne.s32.totalorder %s70, %s73
    %p82 = scmp.eq.s32.totalorder %s19, 15
    %p83 = por %p81, %p82
    %p84 = scmp.ne.s32.totalorder %s73, %s74
    %p85 = scmp.eq.s32.totalorder %s19, 0
    %p86 = por %p84, %p85
    %p87 = scmp.ne.s32.totalorder %s73, %s74
    %p88 = scmp.eq.s32.totalorder %s20, 15
    %p89 = por %p87, %p88
    %p91 = scmp.ne.s32.totalorder %s74, %s90
    %p92 = scmp.eq.s32.totalorder %s20, 0
    %p93 = por %p91, %p92
    %s95 = sadd.s32 %s94, 1
    %p98 = scmp.eq.s32.totalorder %s14, 15
    %p99 = scmp.ne.s32.totalorder %s94, %s96
    %p100 = scmp.eq.s32.totalorder %s14, 0
    %p101 = por %p99, %p100
    %p102 = scmp.ne.s32.totalorder %s94, %s96
    %p103 = scmp.eq.s32.totalorder %s19, 15
    %p104 = por %p102, %p103
    %p105 = scmp.ne.s32.totalorder %s96, %s97
    %p106 = scmp.eq.s32.totalorder %s19, 0
    %p107 = por %p105, %p106
    %p108 = scmp.ne.s32.totalorder %s96, %s97
    %p109 = scmp.eq.s32.totalorder %s20, 15
    %p110 = por %p108, %p109
    %p112 = scmp.ne.s32.totalorder %s97, %s111
    %p113 = scmp.eq.s32.totalorder %s20, 0
    %p114 = por %p112, %p113
    %s116 = sadd.s32 %s115, 1
    %p119 = scmp.eq.s32.totalorder %s14, 15
    %p120 = scmp.ne.s32.totalorder %s115, %s117
    %p121 = scmp.eq.s32.totalorder %s14, 0
    %p122 = por %p120, %p121
    %p123 = scmp.ne.s32.totalorder %s115, %s117
    %p124 = scmp.eq.s32.totalorder %s19, 15
    %p125 = por %p123, %p124
    %p126 = scmp.ne.s32.totalorder %s117, %s118
    %p127 = scmp.eq.s32.totalorder %s19, 0
    %p128 = por %p126, %p127
    %p129 = scmp.ne.s32.totalorder %s117, %s118
    %p130 = scmp.eq.s32.totalorder %s20, 15
    %p131 = por %p129, %p130
    %p133 = scmp.ne.s32.totalorder %s118, %s132
    %p134 = scmp.eq.s32.totalorder %s20, 0
    %p135 = por %p133, %p134
    %s137 = sadd.s32 %s136, 1
    %p140 = scmp.eq.s32.totalorder %s14, 15
    %p141 = scmp.ne.s32.totalorder %s136, %s138
    %p142 = scmp.eq.s32.totalorder %s14, 0
    %p143 = por %p141, %p142
    %p144 = scmp.ne.s32.totalorder %s136, %s138
    %p145 = scmp.eq.s32.totalorder %s19, 15
    %p146 = por %p144, %p145
    %p147 = scmp.ne.s32.totalorder %s138, %s139
    %p148 = scmp.eq.s32.totalorder %s19, 0
    %p149 = por %p147, %p148
    %p150 = scmp.ne.s32.totalorder %s138, %s139
    %p151 = scmp.eq.s32.totalorder %s20, 15
    %p152 = por %p150, %p151
    %p154 = scmp.ne.s32.totalorder %s139, %s153
    %p155 = scmp.eq.s32.totalorder %s20, 0
    %p156 = por %p154, %p155
    %s157 = ssub.s32 %s21, %s33
    %s158 = ssub.s32 %s22, %s29
    %s159 = sor.u32 %s157, %s158
    %p160 = scmp.eq.s32.totalorder %s159, 0
    %s162 = sadd.s32 %s161, 1
    %s163 = scalar_select %p160, %s161, %s162
    %p166 = pneg %p160
    %p167 = scmp.eq.s32.totalorder %s14, 15
    %p168 = por %p166, %p167
    %p169 = scmp.ne.s32.totalorder %s161, %s164
    %p170 = scmp.eq.s32.totalorder %s14, 0
    %p171 = por %p169, %p170
    %p172 = scmp.ne.s32.totalorder %s161, %s164
    %p173 = scmp.eq.s32.totalorder %s19, 15
    %p174 = por %p172, %p173
    %p175 = scmp.ne.s32.totalorder %s164, %s165
    %p176 = scmp.eq.s32.totalorder %s19, 0
    %p177 = por %p175, %p176
    %p178 = scmp.ne.s32.totalorder %s164, %s165
    %p179 = scmp.eq.s32.totalorder %s20, 15
    %p180 = por %p178, %p179
    %p182 = scmp.ne.s32.totalorder %s165, %s181
    %p183 = scmp.eq.s32.totalorder %s20, 0
    %p184 = por %p182, %p183
    %s185 = ssub.s32 %s21, %s33
    %s186 = ssub.s32 %s22, %s29
    %s187 = sor.u32 %s185, %s186
    %p188 = scmp.eq.s32.totalorder %s187, 0
    %s190 = sadd.s32 %s189, 1
    %s191 = scalar_select %p188, %s189, %s190
    %p194 = pneg %p188
    %p195 = scmp.eq.s32.totalorder %s14, 15
    %p196 = por %p194, %p195
    %p197 = scmp.ne.s32.totalorder %s189, %s192
    %p198 = scmp.eq.s32.totalorder %s14, 0
    %p199 = por %p197, %p198
    %p200 = scmp.ne.s32.totalorder %s189, %s192
    %p201 = scmp.eq.s32.totalorder %s19, 15
    %p202 = por %p200, %p201
    %p203 = scmp.ne.s32.totalorder %s192, %s193
    %p204 = scmp.eq.s32.totalorder %s19, 0
    %p205 = por %p203, %p204
    %p206 = scmp.ne.s32.totalorder %s192, %s193
    %p207 = scmp.eq.s32.totalorder %s20, 15
    %p208 = por %p206, %p207
    %p210 = scmp.ne.s32.totalorder %s193, %s209
    %p211 = scmp.eq.s32.totalorder %s20, 0
    %p212 = por %p210, %p211
    %s213 = ssub.s32 %s21, %s33
    %s214 = ssub.s32 %s22, %s29
    %s215 = sor.u32 %s213, %s214
    %p216 = scmp.eq.s32.totalorder %s215, 0
    %s218 = sadd.s32 %s217, 1
    %s219 = scalar_select %p216, %s217, %s218
    %p222 = pneg %p216
    %p223 = scmp.eq.s32.totalorder %s14, 15
    %p224 = por %p222, %p223
    %p225 = scmp.ne.s32.totalorder %s217, %s220
    %p226 = scmp.eq.s32.totalorder %s14, 0
    %p227 = por %p225, %p226
    %p228 = scmp.ne.s32.totalorder %s217, %s220
    %p229 = scmp.eq.s32.totalorder %s19, 15
    %p230 = por %p228, %p229
    %p231 = scmp.ne.s32.totalorder %s220, %s221
    %p232 = scmp.eq.s32.totalorder %s19, 0
    %p233 = por %p231, %p232
    %p234 = scmp.ne.s32.totalorder %s220, %s221
    %p235 = scmp.eq.s32.totalorder %s20, 15
    %p236 = por %p234, %p235
    %p238 = scmp.ne.s32.totalorder %s221, %s237
    %p239 = scmp.eq.s32.totalorder %s20, 0
    %p240 = por %p238, %p239
    %p241 = scmp.le.s32.totalorder 1, %s14
    %p242 = scmp.lt.s32.totalorder %s14, 17
    %p243 = pnand %p241, %p242
    %p244 = pneg %p243
    // Predicated region
    $region9: #{double_conv_forward.3} parent=5 // pred_check
      _
    $region10: #{double_conv_forward.3} parent=5 // pred_check_branch
      %246 = sbr.rel (%p243) target = $region12
    $region11: #{double_conv_forward.3} parent=5 // pred_region
      %s247 = ssub.s32 %s14, 1
      // Predicated region
      $region13: #{double_conv_forward.3} parent=11 // pred_check
        %p248 = pneg %p107
      $region14: #{double_conv_forward.3} parent=11 // pred_check_branch
        %250 = sbr.rel (%p248) target = $region16
      $region15: #{double_conv_forward.3} parent=11 // pred_region
        _
      $region16: #{double_conv_forward.3} parent=11 // pred_fallthru
        _
      // Predicated region
      $region17: #{double_conv_forward.3} parent=11 // pred_check
        %p251 = pneg %p128
      $region18: #{double_conv_forward.3} parent=11 // pred_check_branch
        %253 = sbr.rel (%p251) target = $region20
      $region19: #{double_conv_forward.3} parent=11 // pred_region
        _
      $region20: #{double_conv_forward.3} parent=11 // pred_fallthru
        _
      // Predicated region
      $region21: #{double_conv_forward.3} parent=11 // pred_check
        %p254 = pneg %p149
      $region22: #{double_conv_forward.3} parent=11 // pred_check_branch
        %256 = sbr.rel (%p254) target = $region24
      $region23: #{double_conv_forward.3} parent=11 // pred_region
        _
      $region24: #{double_conv_forward.3} parent=11 // pred_fallthru
        _
    $region12: #{double_conv_forward.3} parent=5 // pred_fallthru
      _
    %p257 = scmp.lt.s32.totalorder %s14, 16
    // Predicated region
    $region25: #{double_conv_forward.3} parent=5 // pred_check
      %p258 = pneg %p257
    $region26: #{double_conv_forward.3} parent=5 // pred_check_branch
      %260 = sbr.rel (%p258) target = $region28
    $region27: #{double_conv_forward.3} parent=5 // pred_region
      // Predicated region
      $region29: #{double_conv_forward.3} parent=27 // pred_check
        %p261 = pneg %p54
      $region30: #{double_conv_forward.3} parent=27 // pred_check_branch
        %263 = sbr.rel (%p261) target = $region32
      $region31: #{double_conv_forward.3} parent=27 // pred_region
        %s264 = sadd.s32 %s22, 1
        %p265 = scmp.lt.s32.totalorder %s264, 7
        %s266 = scalar_select %p265, %s264, 7
        %p267 = scmp.lt.s32.totalorder %s21, 1
        %s268 = scalar_select %p267, %s21, 1
        %p269 = scmp.lt.s32.totalorder %s266, 7
        %s270 = scalar_select %p269, %s266, 7
        %s271 = smul.addr %s270, 8
        %s272 = smul.addr %s268, 64
        %s273 = sadd.s32 %s271, %s272
        %s274 = smul.addr %s273, 8
        %s275 = scalar_lea.vmem %s0, %s274
        %s276 = sadd.s32 %s22, 1
        %p277 = scmp.lt.s32.totalorder %s276, 7
        %s278 = scalar_select %p277, %s276, 7
      $region32: #{double_conv_forward.3} parent=27 // pred_fallthru
        _
      // Predicated region
      $region33: #{double_conv_forward.3} parent=27 // pred_check
        %p279 = pneg %p80
      $region34: #{double_conv_forward.3} parent=27 // pred_check_branch
        %281 = sbr.rel (%p279) target = $region36
      $region35: #{double_conv_forward.3} parent=27 // pred_region
        %p282 = scmp.lt.s32.totalorder %s21, 1
        %s283 = scalar_select %p282, %s21, 1
        %s284 = smul.addr %s283, 64
        %s285 = smul.addr %s284, 8
        %s286 = scalar_lea.vmem %s1, %s285
      $region36: #{double_conv_forward.3} parent=27 // pred_fallthru
        _
    $region28: #{double_conv_forward.3} parent=5 // pred_fallthru
      _
    %p287 = scmp.le.s32.totalorder 1, %s14
    %p288 = scmp.lt.s32.totalorder %s14, 17
    %p289 = pnand %p287, %p288
    %p290 = pneg %p289
    // Predicated region
    $region37: #{double_conv_forward.3} parent=5 // pred_check
      _
    $region38: #{double_conv_forward.3} parent=5 // pred_check_branch
      %292 = sbr.rel (%p289) target = $region40
    $region39: #{double_conv_forward.3} parent=5 // pred_region
      %s293 = ssub.s32 %s14, 1
      %s294 = sadd.s32 %s24, 1
      %p295 = scmp.lt.s32.totalorder %s294, 7
      %s296 = scalar_select %p295, %s294, 7
      %p297 = scmp.lt.s32.totalorder %s23, 1
      %s298 = scalar_select %p297, %s23, 1
      %p299 = scmp.lt.s32.totalorder %s296, 7
      %s300 = scalar_select %p299, %s296, 7
      %s301 = smul.addr %s300, 8
      %s302 = smul.addr %s298, 64
      %s303 = sadd.s32 %s301, %s302
      %s304 = smul.addr %s303, 8
      %s305 = scalar_lea.vmem %s0, %s304
      %p306 = pneg %p60
      %p307 = pneg %p57
      %p308 = scmp.lt.s32.totalorder %s23, 1
      %s309 = scalar_select %p308, %s23, 1
      %s310 = smul.addr %s309, 64
      %s311 = smul.addr %s310, 8
      %s312 = scalar_lea.vmem %s1, %s311
      %p313 = pneg %p86
      %p314 = pneg %p83
      %p315 = pneg %p107
      %p316 = pneg %p104
      %p317 = pneg %p128
      %p318 = pneg %p125
      %p319 = pneg %p149
      %p320 = pneg %p146
      %p321 = pneg %p177
      %p322 = pneg %p174
      %p323 = scmp.lt.s32.totalorder %s23, 1
      %s324 = scalar_select %p323, %s23, 1
      %p325 = scmp.lt.s32.totalorder %s24, 7
      %s326 = scalar_select %p325, %s24, 7
      %s327 = smul.addr %s326, 8
      %s328 = smul.addr %s324, 64
      %s329 = sadd.s32 %s327, %s328
      %s330 = smul.addr %s329, 4
      %s331 = scalar_lea.vmem %s5, %s330
      %p332 = pneg %p205
      %p333 = pneg %p202
      %p334 = scmp.lt.s32.totalorder %s23, 1
      %s335 = scalar_select %p334, %s23, 1
      %p336 = scmp.lt.s32.totalorder %s24, 7
      %s337 = scalar_select %p336, %s24, 7
      %s338 = smul.addr %s335, 8
      %s339 = sadd.s32 %s337, %s338
      %s340 = scalar_lea.vmem %s6, %s339
      %p341 = pneg %p233
      %p342 = pneg %p230
      %p343 = scmp.lt.s32.totalorder %s23, 1
      %s344 = scalar_select %p343, %s23, 1
      %p345 = scmp.lt.s32.totalorder %s24, 7
      %s346 = scalar_select %p345, %s24, 7
      %s347 = smul.addr %s344, 8
      %s348 = sadd.s32 %s346, %s347
      %s349 = scalar_lea.vmem %s7, %s348
      %s350 = sadd.s32 %s24, 1
      %p351 = scmp.lt.s32.totalorder %s350, 7
      %s352 = scalar_select %p351, %s350, 7
      %p353 = scmp.lt.s32.totalorder %s23, 1
      %s354 = scalar_select %p353, %s23, 1
      %p355 = scmp.lt.s32.totalorder %s352, 7
      %s356 = scalar_select %p355, %s352, 7
      %s357 = smul.addr %s356, 8
      %s358 = smul.addr %s354, 64
      %s359 = sadd.s32 %s357, %s358
      %s360 = smul.addr %s359, 8
      %s361 = scalar_lea.vmem %s0, %s360
      %s362 = sadd.s32 %s24, 1
      %p363 = scmp.lt.s32.totalorder %s362, 7
      %s364 = scalar_select %p363, %s362, 7
      %p365 = scmp.lt.s32.totalorder %s23, 1
      %s366 = scalar_select %p365, %s23, 1
      %s367 = smul.addr %s366, 64
      %s368 = smul.addr %s367, 8
      %s369 = scalar_lea.vmem %s1, %s368
      %p370 = scmp.lt.s32.totalorder %s23, 1
      %s371 = scalar_select %p370, %s23, 1
      %p372 = scmp.lt.s32.totalorder %s24, 7
      %s373 = scalar_select %p372, %s24, 7
      %s374 = smul.addr %s373, 8
      %s375 = smul.addr %s371, 64
      %s376 = sadd.s32 %s374, %s375
      %s377 = smul.addr %s376, 4
      %s378 = scalar_lea.vmem %s5, %s377
      %p379 = scmp.lt.s32.totalorder %s23, 1
      %s380 = scalar_select %p379, %s23, 1
      %p381 = scmp.lt.s32.totalorder %s24, 7
      %s382 = scalar_select %p381, %s24, 7
      %s383 = smul.addr %s380, 8
      %s384 = sadd.s32 %s382, %s383
      %s385 = scalar_lea.vmem %s6, %s384
      %p386 = scmp.lt.s32.totalorder %s23, 1
      %s387 = scalar_select %p386, %s23, 1
      %p388 = scmp.lt.s32.totalorder %s24, 7
      %s389 = scalar_select %p388, %s24, 7
      %s390 = smul.addr %s387, 8
      %s391 = sadd.s32 %s389, %s390
      %s392 = scalar_lea.vmem %s7, %s391
      %p394 = scmp.eq.s32.totalorder %s24, 0
      // Predicated region
      $region41: #{double_conv_forward.3} parent=39 // pred_check
        %p395 = pneg %p394
      $region42: #{double_conv_forward.3} parent=39 // pred_check_branch
        %397 = sbr.rel (%p395) target = $region44
      $region43: #{double_conv_forward.3} parent=39 // pred_region
        %v398 = vld [vmem:[%s369] sm:$0xff]
        %v399 = vld [vmem:[%s369 + $0x8] sm:$0xff]
        %v400 = vld [vmem:[%s369 + $0x10] sm:$0xff]
        %v401 = vld [vmem:[%s369 + $0x18] sm:$0xff]
        %v402 = vld [vmem:[%s369 + $0x20] sm:$0xff]
        %v403 = vld [vmem:[%s369 + $0x28] sm:$0xff]
        %v404 = vld [vmem:[%s369 + $0x30] sm:$0xff]
        %v405 = vld [vmem:[%s369 + $0x38] sm:$0xff]
        %v415 = vrot.slane 0.0, 7
        %v416 = vrot.slane %v398, 7
        %v417 = vrot.slane %v399, 7
        %v418 = vrot.slane %v400, 7
        %v419 = vrot.slane %v401, 7
        %v420 = vrot.slane %v402, 7
        %v421 = vrot.slane %v403, 7
        %v422 = vrot.slane %v404, 7
        %v423 = vrot.slane %v405, 7
        %vm433 = vcmask 1040384
        %v434 = vsel %vm433, 0.0, %v415
        %v435 = vsel %vm433, 0.0, %v416
        %v436 = vsel %vm433, 0.0, %v417
        %v437 = vsel %vm433, 0.0, %v418
        %v438 = vsel %vm433, 0.0, %v419
        %v439 = vsel %vm433, 0.0, %v420
        %v440 = vsel %vm433, 0.0, %v421
        %v441 = vsel %vm433, 0.0, %v422
        %v442 = vsel %vm433, 0.0, %v423
        %v443 = vsel %vm433, %v415, 0.0
        %v444 = vsel %vm433, %v416, 0.0
        %v445 = vsel %vm433, %v417, 0.0
        %v446 = vsel %vm433, %v418, 0.0
        %v447 = vsel %vm433, %v419, 0.0
        %v448 = vsel %vm433, %v420, 0.0
        %v449 = vsel %vm433, %v421, 0.0
        %v450 = vsel %vm433, %v422, 0.0
        %v451 = vsel %vm433, %v423, 0.0
        %v452 = vpack.c.bf16 %v443, %v434
        %v453 = vpack.c.bf16 %v444, %v435
        %v454 = vpack.c.bf16 %v445, %v436
        %v455 = vpack.c.bf16 %v446, %v437
        %v456 = vpack.c.bf16 %v447, %v438
        %v457 = vpack.c.bf16 %v448, %v439
        %v458 = vpack.c.bf16 %v449, %v440
        %v459 = vpack.c.bf16 %v450, %v441
        %v460 = vpack.c.bf16 %v451, %v442
        %v470 = vunpack.c.l.b16 %v452
        %v471 = vunpack.c.h.b16 %v452
        %v472 = vunpack.c.l.b16 %v453
        %v473 = vunpack.c.h.b16 %v453
        %v474 = vunpack.c.l.b16 %v454
        %v475 = vunpack.c.h.b16 %v454
        %v476 = vunpack.c.l.b16 %v455
        %v477 = vunpack.c.h.b16 %v455
        %v478 = vunpack.c.l.b16 %v456
        %v479 = vunpack.c.h.b16 %v456
        %v480 = vunpack.c.l.b16 %v457
        %v481 = vunpack.c.h.b16 %v457
        %v482 = vunpack.c.l.b16 %v458
        %v483 = vunpack.c.h.b16 %v458
        %v484 = vunpack.c.l.b16 %v459
        %v485 = vunpack.c.h.b16 %v459
        %v486 = vunpack.c.l.b16 %v460
        %v487 = vunpack.c.h.b16 %v460
        %v488 = vpack.c.b16 %v470, %v470
        %v489 = vpack.c.b16 %v471, %v471
        %v490 = vpack.c.b16 %v472, %v472
        %v491 = vpack.c.b16 %v473, %v473
        %v492 = vpack.c.b16 %v474, %v474
        %v493 = vpack.c.b16 %v475, %v475
        %v494 = vpack.c.b16 %v476, %v476
        %v495 = vpack.c.b16 %v477, %v477
        %v496 = vpack.c.b16 %v478, %v478
        %v497 = vpack.c.b16 %v479, %v479
        %v498 = vpack.c.b16 %v480, %v480
        %v499 = vpack.c.b16 %v481, %v481
        %v500 = vpack.c.b16 %v482, %v482
        %v501 = vpack.c.b16 %v483, %v483
        %v502 = vpack.c.b16 %v484, %v484
        %v503 = vpack.c.b16 %v485, %v485
        %v504 = vpack.c.b16 %v486, %v486
        %v505 = vpack.c.b16 %v487, %v487
        %vm524 = vcmask 27648
        %525 = vst.msk [vmem:[#allocation2] sm:$0xf] %vm524, %v488
        %vm526 = vcmask 24576
        %527 = vst.msk [vmem:[#allocation2 + $0x4] sm:$0x1] %vm526, %v489
        %528 = vst.msk [vmem:[#allocation2 + $0x8] sm:$0xf] %vm524, %v490
        %529 = vst.msk [vmem:[#allocation2 + $0xc] sm:$0x1] %vm526, %v491
        %530 = vst.msk [vmem:[#allocation2 + $0x10] sm:$0xf] %vm524, %v492
        %531 = vst.msk [vmem:[#allocation2 + $0x14] sm:$0x1] %vm526, %v493
        %532 = vst.msk [vmem:[#allocation2 + $0x18] sm:$0xf] %vm524, %v494
        %533 = vst.msk [vmem:[#allocation2 + $0x1c] sm:$0x1] %vm526, %v495
        %534 = vst.msk [vmem:[#allocation2 + $0x20] sm:$0xf] %vm524, %v496
        %535 = vst.msk [vmem:[#allocation2 + $0x24] sm:$0x1] %vm526, %v497
        %536 = vst.msk [vmem:[#allocation2 + $0x28] sm:$0xf] %vm524, %v498
        %537 = vst.msk [vmem:[#allocation2 + $0x2c] sm:$0x1] %vm526, %v499
        %538 = vst.msk [vmem:[#allocation2 + $0x30] sm:$0xf] %vm524, %v500
        %539 = vst.msk [vmem:[#allocation2 + $0x34] sm:$0x1] %vm526, %v501
        %540 = vst.msk [vmem:[#allocation2 + $0x38] sm:$0xf] %vm524, %v502
        %541 = vst.msk [vmem:[#allocation2 + $0x3c] sm:$0x1] %vm526, %v503
        %542 = vst.msk [vmem:[#allocation2 + $0x40] sm:$0xf] %vm524, %v504
        %543 = vst.msk [vmem:[#allocation2 + $0x44] sm:$0x1] %vm526, %v505
        %544 = vst.msk [vmem:[#allocation2 + $0x48] sm:$0xf] %vm524, %v488
        %545 = vst.msk [vmem:[#allocation2 + $0x4c] sm:$0x1] %vm526, %v489
      $region44: #{double_conv_forward.3} parent=39 // pred_fallthru
        _
      %s546 = sadd.s32 %s24, 1
      %p547 = scmp.lt.s32.totalorder %s546, 8
      // Predicated region
      $region45: #{double_conv_forward.3} parent=39 // pred_check
        %p548 = pneg %p547
      $region46: #{double_conv_forward.3} parent=39 // pred_check_branch
        %550 = sbr.rel (%p548) target = $region48
      $region47: #{double_conv_forward.3} parent=39 // pred_region
        %v551 = vld [vmem:[%s361] sm:$0xff]
        %v552 = vld [vmem:[%s361 + $0x8] sm:$0xff]
        %v553 = vld [vmem:[%s361 + $0x10] sm:$0xff]
        %v554 = vld [vmem:[%s361 + $0x18] sm:$0xff]
        %v555 = vld [vmem:[%s361 + $0x20] sm:$0xff]
        %v556 = vld [vmem:[%s361 + $0x28] sm:$0xff]
        %v557 = vld [vmem:[%s361 + $0x30] sm:$0xff]
        %v558 = vld [vmem:[%s361 + $0x38] sm:$0xff]
        %p559 = scmp.lt.s32.totalorder %s546, 0
        %s560 = ssub.s32 0, %s546
        %s561 = scalar_select %p559, %s560, %s546
        %s562 = sdiv.u32.pop %s561, 3
        %s563 = srem.u32.pop %s561, 3
        %s564 = ssub.s32 0, %s563
        %s565 = scalar_select %p559, %s564, %s563
        %p566 = scmp.ne.s32.totalorder %s565, 0
        %p567 = scmp.lt.s32.totalorder %s565, 0
        %p568 = pnand %p567, %p566
        %p569 = pneg %p568
        %s570 = sadd.s32 %s565, 3
        %s571 = scalar_select %p569, %s570, %s565
        %v581 = vrot.slane 0.0, 7
        %v582 = vrot.slane %v551, 7
        %v583 = vrot.slane %v552, 7
        %v584 = vrot.slane %v553, 7
        %v585 = vrot.slane %v554, 7
        %v586 = vrot.slane %v555, 7
        %v587 = vrot.slane %v556, 7
        %v588 = vrot.slane %v557, 7
        %v589 = vrot.slane %v558, 7
        %vm599 = vcmask 1040384
        %v600 = vsel %vm599, 0.0, %v581
        %v601 = vsel %vm599, 0.0, %v582
        %v602 = vsel %vm599, 0.0, %v583
        %v603 = vsel %vm599, 0.0, %v584
        %v604 = vsel %vm599, 0.0, %v585
        %v605 = vsel %vm599, 0.0, %v586
        %v606 = vsel %vm599, 0.0, %v587
        %v607 = vsel %vm599, 0.0, %v588
        %v608 = vsel %vm599, 0.0, %v589
        %v609 = vsel %vm599, %v581, 0.0
        %v610 = vsel %vm599, %v582, 0.0
        %v611 = vsel %vm599, %v583, 0.0
        %v612 = vsel %vm599, %v584, 0.0
        %v613 = vsel %vm599, %v585, 0.0
        %v614 = vsel %vm599, %v586, 0.0
        %v615 = vsel %vm599, %v587, 0.0
        %v616 = vsel %vm599, %v588, 0.0
        %v617 = vsel %vm599, %v589, 0.0
        %v618 = vpack.c.bf16 %v609, %v600
        %v619 = vpack.c.bf16 %v610, %v601
        %v620 = vpack.c.bf16 %v611, %v602
        %v621 = vpack.c.bf16 %v612, %v603
        %v622 = vpack.c.bf16 %v613, %v604
        %v623 = vpack.c.bf16 %v614, %v605
        %v624 = vpack.c.bf16 %v615, %v606
        %v625 = vpack.c.bf16 %v616, %v607
        %v626 = vpack.c.bf16 %v617, %v608
        %v636 = vunpack.c.l.b16 %v618
        %v637 = vunpack.c.h.b16 %v618
        %v638 = vunpack.c.l.b16 %v619
        %v639 = vunpack.c.h.b16 %v619
        %v640 = vunpack.c.l.b16 %v620
        %v641 = vunpack.c.h.b16 %v620
        %v642 = vunpack.c.l.b16 %v621
        %v643 = vunpack.c.h.b16 %v621
        %v644 = vunpack.c.l.b16 %v622
        %v645 = vunpack.c.h.b16 %v622
        %v646 = vunpack.c.l.b16 %v623
        %v647 = vunpack.c.h.b16 %v623
        %v648 = vunpack.c.l.b16 %v624
        %v649 = vunpack.c.h.b16 %v624
        %v650 = vunpack.c.l.b16 %v625
        %v651 = vunpack.c.h.b16 %v625
        %v652 = vunpack.c.l.b16 %v626
        %v653 = vunpack.c.h.b16 %v626
        %v654 = vpack.c.b16 %v636, %v636
        %v655 = vpack.c.b16 %v637, %v637
        %v656 = vpack.c.b16 %v638, %v638
        %v657 = vpack.c.b16 %v639, %v639
        %v658 = vpack.c.b16 %v640, %v640
        %v659 = vpack.c.b16 %v641, %v641
        %v660 = vpack.c.b16 %v642, %v642
        %v661 = vpack.c.b16 %v643, %v643
        %v662 = vpack.c.b16 %v644, %v644
        %v663 = vpack.c.b16 %v645, %v645
        %v664 = vpack.c.b16 %v646, %v646
        %v665 = vpack.c.b16 %v647, %v647
        %v666 = vpack.c.b16 %v648, %v648
        %v667 = vpack.c.b16 %v649, %v649
        %v668 = vpack.c.b16 %v650, %v650
        %v669 = vpack.c.b16 %v651, %v651
        %v670 = vpack.c.b16 %v652, %v652
        %v671 = vpack.c.b16 %v653, %v653
        %s690 = smul.u32 %s571, 20
        %s691 = smul.addr %s690, 4
        %s692 = scalar_lea.vmem [#allocation2], %s691
        %vm693 = vcmask 27648
        %694 = vst.msk [vmem:[%s692] sm:$0xf] %vm693, %v654
        %vm695 = vcmask 24576
        %696 = vst.msk [vmem:[%s692 + $0x4] sm:$0x1] %vm695, %v655
        %697 = vst.msk [vmem:[%s692 + $0x8] sm:$0xf] %vm693, %v656
        %698 = vst.msk [vmem:[%s692 + $0xc] sm:$0x1] %vm695, %v657
        %699 = vst.msk [vmem:[%s692 + $0x10] sm:$0xf] %vm693, %v658
        %700 = vst.msk [vmem:[%s692 + $0x14] sm:$0x1] %vm695, %v659
        %701 = vst.msk [vmem:[%s692 + $0x18] sm:$0xf] %vm693, %v660
        %702 = vst.msk [vmem:[%s692 + $0x1c] sm:$0x1] %vm695, %v661
        %703 = vst.msk [vmem:[%s692 + $0x20] sm:$0xf] %vm693, %v662
        %704 = vst.msk [vmem:[%s692 + $0x24] sm:$0x1] %vm695, %v663
        %705 = vst.msk [vmem:[%s692 + $0x28] sm:$0xf] %vm693, %v664
        %706 = vst.msk [vmem:[%s692 + $0x2c] sm:$0x1] %vm695, %v665
        %707 = vst.msk [vmem:[%s692 + $0x30] sm:$0xf] %vm693, %v666
        %708 = vst.msk [vmem:[%s692 + $0x34] sm:$0x1] %vm695, %v667
        %709 = vst.msk [vmem:[%s692 + $0x38] sm:$0xf] %vm693, %v668
        %710 = vst.msk [vmem:[%s692 + $0x3c] sm:$0x1] %vm695, %v669
        %711 = vst.msk [vmem:[%s692 + $0x40] sm:$0xf] %vm693, %v670
        %712 = vst.msk [vmem:[%s692 + $0x44] sm:$0x1] %vm695, %v671
        %713 = vst.msk [vmem:[%s692 + $0x48] sm:$0xf] %vm693, %v654
        %714 = vst.msk [vmem:[%s692 + $0x4c] sm:$0x1] %vm695, %v655
      $region48: #{double_conv_forward.3} parent=39 // pred_fallthru
        _
      %p715 = scmp.lt.s32.totalorder %s24, 0
      %s716 = ssub.s32 0, %s24
      %s717 = scalar_select %p715, %s716, %s24
      %s718 = sdiv.u32.pop %s717, 3
      %s719 = srem.u32.pop %s717, 3
      %s720 = ssub.s32 0, %s719
      %s721 = scalar_select %p715, %s720, %s719
      %p722 = scmp.ne.s32.totalorder %s721, 0
      %p723 = scmp.lt.s32.totalorder %s721, 0
      %p724 = pnand %p723, %p722
      %p725 = pneg %p724
      %s726 = sadd.s32 %s721, 3
      %s727 = scalar_select %p725, %s726, %s721
      %s728 = smul.u32 %s727, 20
      %s729 = smul.addr %s728, 4
      %s730 = scalar_lea.vmem [#allocation2], %s729
      %v731 = vld [vmem:[%s730] sm:$0xf]
      %v732 = vld [vmem:[%s730 + $0x4] sm:$0x1]
      %v733 = vld [vmem:[%s730 + $0x8] sm:$0xf]
      %v734 = vld [vmem:[%s730 + $0xc] sm:$0x1]
      %v735 = vld [vmem:[%s730 + $0x10] sm:$0xf]
      %v736 = vld [vmem:[%s730 + $0x14] sm:$0x1]
      %v737 = vld [vmem:[%s730 + $0x18] sm:$0xf]
      %v738 = vld [vmem:[%s730 + $0x1c] sm:$0x1]
      %v739 = vld [vmem:[%s730 + $0x20] sm:$0xf]
      %v740 = vld [vmem:[%s730 + $0x24] sm:$0x1]
      %v741 = vld [vmem:[%s730 + $0x28] sm:$0xf]
      %v742 = vld [vmem:[%s730 + $0x2c] sm:$0x1]
      %v743 = vld [vmem:[%s730 + $0x30] sm:$0xf]
      %v744 = vld [vmem:[%s730 + $0x34] sm:$0x1]
      %v745 = vld [vmem:[%s730 + $0x38] sm:$0xf]
      %v746 = vld [vmem:[%s730 + $0x3c] sm:$0x1]
      %v747 = vld [vmem:[%s730 + $0x40] sm:$0xf]
      %v748 = vld [vmem:[%s730 + $0x44] sm:$0x1]
      %v749 = vld [vmem:[%s730 + $0x48] sm:$0xf]
      %v750 = vld [vmem:[%s730 + $0x4c] sm:$0x1]
      %v767 = vunpack.c.l.b16 %v731
      %v768 = vunpack.c.l.b16 %v732
      %v769 = vunpack.c.l.b16 %v733
      %v770 = vunpack.c.l.b16 %v734
      %v771 = vunpack.c.l.b16 %v735
      %v772 = vunpack.c.l.b16 %v736
      %v773 = vunpack.c.l.b16 %v737
      %v774 = vunpack.c.l.b16 %v738
      %v775 = vunpack.c.l.b16 %v739
      %v776 = vunpack.c.l.b16 %v740
      %v777 = vunpack.c.l.b16 %v741
      %v778 = vunpack.c.l.b16 %v742
      %v779 = vunpack.c.l.b16 %v743
      %v780 = vunpack.c.l.b16 %v744
      %v781 = vunpack.c.l.b16 %v745
      %v782 = vunpack.c.l.b16 %v746
      %v783 = vpack.c.b16 %v768, %v767
      %v784 = vpack.c.b16 %v770, %v769
      %v785 = vpack.c.b16 %v772, %v771
      %v786 = vpack.c.b16 %v774, %v773
      %v787 = vpack.c.b16 %v776, %v775
      %v788 = vpack.c.b16 %v778, %v777
      %v789 = vpack.c.b16 %v780, %v779
      %v790 = vpack.c.b16 %v782, %v781
      %v792 = vshrl.u32 %v783, 16
      %v794 = vshll.u32 %v783, 16
      %v796 = vrot.slane %v794, 1
      %v797 = vor.u32 %v792, %v796
      %v799 = vshrl.u32 %v784, 16
      %v801 = vshll.u32 %v784, 16
      %v803 = vrot.slane %v801, 1
      %v804 = vor.u32 %v799, %v803
      %v806 = vshrl.u32 %v785, 16
      %v808 = vshll.u32 %v785, 16
      %v810 = vrot.slane %v808, 1
      %v811 = vor.u32 %v806, %v810
      %v813 = vshrl.u32 %v786, 16
      %v815 = vshll.u32 %v786, 16
      %v817 = vrot.slane %v815, 1
      %v818 = vor.u32 %v813, %v817
      %v820 = vshrl.u32 %v787, 16
      %v822 = vshll.u32 %v787, 16
      %v824 = vrot.slane %v822, 1
      %v825 = vor.u32 %v820, %v824
      %v827 = vshrl.u32 %v788, 16
      %v829 = vshll.u32 %v788, 16
      %v831 = vrot.slane %v829, 1
      %v832 = vor.u32 %v827, %v831
      %v834 = vshrl.u32 %v789, 16
      %v836 = vshll.u32 %v789, 16
      %v838 = vrot.slane %v836, 1
      %v839 = vor.u32 %v834, %v838
      %v841 = vshrl.u32 %v790, 16
      %v843 = vshll.u32 %v790, 16
      %v845 = vrot.slane %v843, 1
      %v846 = vor.u32 %v841, %v845
      %847 = vrot.lane.b32.xlu0 %v797, 4
      %v848 = vpop.permute.xlu0 %847
      %849 = vrot.lane.b32.xlu0 %v804, 4
      %v850 = vpop.permute.xlu0 %849
      %851 = vrot.lane.b32.xlu0 %v811, 4
      %v852 = vpop.permute.xlu0 %851
      %853 = vrot.lane.b32.xlu0 %v818, 4
      %v854 = vpop.permute.xlu0 %853
      %855 = vrot.lane.b32.xlu0 %v825, 4
      %v856 = vpop.permute.xlu0 %855
      %857 = vrot.lane.b32.xlu0 %v832, 4
      %v858 = vpop.permute.xlu0 %857
      %859 = vrot.lane.b32.xlu0 %v839, 4
      %v860 = vpop.permute.xlu0 %859
      %861 = vrot.lane.b32.xlu0 %v846, 4
      %v862 = vpop.permute.xlu0 %861
      %v863 = vrot.slane %v783, 1
      %v864 = vrot.slane %v784, 1
      %v865 = vrot.slane %v785, 1
      %v866 = vrot.slane %v786, 1
      %v867 = vrot.slane %v787, 1
      %v868 = vrot.slane %v788, 1
      %v869 = vrot.slane %v789, 1
      %v870 = vrot.slane %v790, 1
      %871 = vrot.lane.b32.xlu0 %v863, 8
      %v872 = vpop.permute.xlu0 %871
      %873 = vrot.lane.b32.xlu0 %v864, 8
      %v874 = vpop.permute.xlu0 %873
      %875 = vrot.lane.b32.xlu0 %v865, 8
      %v876 = vpop.permute.xlu0 %875
      %877 = vrot.lane.b32.xlu0 %v866, 8
      %v878 = vpop.permute.xlu0 %877
      %879 = vrot.lane.b32.xlu0 %v867, 8
      %v880 = vpop.permute.xlu0 %879
      %881 = vrot.lane.b32.xlu0 %v868, 8
      %v882 = vpop.permute.xlu0 %881
      %883 = vrot.lane.b32.xlu0 %v869, 8
      %v884 = vpop.permute.xlu0 %883
      %885 = vrot.lane.b32.xlu0 %v870, 8
      %v886 = vpop.permute.xlu0 %885
      %v888 = vunpack.c.l.b16 %v747
      %v889 = vpack.c.b16 %v769, %v769
      %v890 = vpack.c.b16 %v771, %v771
      %v891 = vpack.c.b16 %v773, %v773
      %v892 = vpack.c.b16 %v775, %v775
      %v893 = vpack.c.b16 %v777, %v777
      %v894 = vpack.c.b16 %v779, %v779
      %v895 = vpack.c.b16 %v781, %v781
      %v896 = vpack.c.b16 %v888, %v888
      %897 = vrot.lane.b32.xlu0 %v889, 12
      %v898 = vpop.permute.xlu0 %897
      %899 = vrot.lane.b32.xlu0 %v890, 12
      %v900 = vpop.permute.xlu0 %899
      %901 = vrot.lane.b32.xlu0 %v891, 12
      %v902 = vpop.permute.xlu0 %901
      %903 = vrot.lane.b32.xlu0 %v892, 12
      %v904 = vpop.permute.xlu0 %903
      %905 = vrot.lane.b32.xlu0 %v893, 12
      %v906 = vpop.permute.xlu0 %905
      %907 = vrot.lane.b32.xlu0 %v894, 12
      %v908 = vpop.permute.xlu0 %907
      %909 = vrot.lane.b32.xlu0 %v895, 12
      %v910 = vpop.permute.xlu0 %909
      %911 = vrot.lane.b32.xlu0 %v896, 12
      %v912 = vpop.permute.xlu0 %911
      %v914 = vunpack.c.l.b16 %v748
      %v915 = vpack.c.b16 %v914, %v888
      %v917 = vshrl.u32 %v915, 16
      %v919 = vshll.u32 %v915, 16
      %v921 = vrot.slane %v919, 1
      %v922 = vor.u32 %v917, %v921
      %923 = vrot.lane.b32.xlu0 %v804, 16
      %v924 = vpop.permute.xlu0 %923
      %925 = vrot.lane.b32.xlu0 %v811, 16
      %v926 = vpop.permute.xlu0 %925
      %927 = vrot.lane.b32.xlu0 %v818, 16
      %v928 = vpop.permute.xlu0 %927
      %929 = vrot.lane.b32.xlu0 %v825, 16
      %v930 = vpop.permute.xlu0 %929
      %931 = vrot.lane.b32.xlu0 %v832, 16
      %v932 = vpop.permute.xlu0 %931
      %933 = vrot.lane.b32.xlu0 %v839, 16
      %v934 = vpop.permute.xlu0 %933
      %935 = vrot.lane.b32.xlu0 %v846, 16
      %v936 = vpop.permute.xlu0 %935
      %937 = vrot.lane.b32.xlu0 %v922, 16
      %v938 = vpop.permute.xlu0 %937
      %v939 = vrot.slane %v915, 1
      %940 = vrot.lane.b32.xlu0 %v864, 20
      %v941 = vpop.permute.xlu0 %940
      %942 = vrot.lane.b32.xlu0 %v865, 20
      %v943 = vpop.permute.xlu0 %942
      %944 = vrot.lane.b32.xlu0 %v866, 20
      %v945 = vpop.permute.xlu0 %944
      %946 = vrot.lane.b32.xlu0 %v867, 20
      %v947 = vpop.permute.xlu0 %946
      %948 = vrot.lane.b32.xlu0 %v868, 20
      %v949 = vpop.permute.xlu0 %948
      %950 = vrot.lane.b32.xlu0 %v869, 20
      %v951 = vpop.permute.xlu0 %950
      %952 = vrot.lane.b32.xlu0 %v870, 20
      %v953 = vpop.permute.xlu0 %952
      %954 = vrot.lane.b32.xlu0 %v939, 20
      %v955 = vpop.permute.xlu0 %954
      %v957 = vunpack.c.l.b16 %v749
      %v958 = vpack.c.b16 %v957, %v957
      %959 = vrot.lane.b32.xlu0 %v890, 24
      %v960 = vpop.permute.xlu0 %959
      %961 = vrot.lane.b32.xlu0 %v891, 24
      %v962 = vpop.permute.xlu0 %961
      %963 = vrot.lane.b32.xlu0 %v892, 24
      %v964 = vpop.permute.xlu0 %963
      %965 = vrot.lane.b32.xlu0 %v893, 24
      %v966 = vpop.permute.xlu0 %965
      %967 = vrot.lane.b32.xlu0 %v894, 24
      %v968 = vpop.permute.xlu0 %967
      %969 = vrot.lane.b32.xlu0 %v895, 24
      %v970 = vpop.permute.xlu0 %969
      %971 = vrot.lane.b32.xlu0 %v896, 24
      %v972 = vpop.permute.xlu0 %971
      %973 = vrot.lane.b32.xlu0 %v958, 24
      %v974 = vpop.permute.xlu0 %973
      %v976 = vunpack.c.l.b16 %v750
      %v977 = vpack.c.b16 %v976, %v957
      %v979 = vshrl.u32 %v977, 16
      %v981 = vshll.u32 %v977, 16
      %v983 = vrot.slane %v981, 1
      %v984 = vor.u32 %v979, %v983
      %985 = vrot.lane.b32.xlu0 %v811, 28
      %v986 = vpop.permute.xlu0 %985
      %987 = vrot.lane.b32.xlu0 %v818, 28
      %v988 = vpop.permute.xlu0 %987
      %989 = vrot.lane.b32.xlu0 %v825, 28
      %v990 = vpop.permute.xlu0 %989
      %991 = vrot.lane.b32.xlu0 %v832, 28
      %v992 = vpop.permute.xlu0 %991
      %993 = vrot.lane.b32.xlu0 %v839, 28
      %v994 = vpop.permute.xlu0 %993
      %995 = vrot.lane.b32.xlu0 %v846, 28
      %v996 = vpop.permute.xlu0 %995
      %997 = vrot.lane.b32.xlu0 %v922, 28
      %v998 = vpop.permute.xlu0 %997
      %999 = vrot.lane.b32.xlu0 %v984, 28
      %v1000 = vpop.permute.xlu0 %999
      %v1001 = vrot.slane %v977, 1
      %1002 = vrot.lane.b32.xlu0 %v865, 32
      %v1003 = vpop.permute.xlu0 %1002
      %1004 = vrot.lane.b32.xlu0 %v866, 32
      %v1005 = vpop.permute.xlu0 %1004
      %1006 = vrot.lane.b32.xlu0 %v867, 32
      %v1007 = vpop.permute.xlu0 %1006
      %1008 = vrot.lane.b32.xlu0 %v868, 32
      %v1009 = vpop.permute.xlu0 %1008
      %1010 = vrot.lane.b32.xlu0 %v869, 32
      %v1011 = vpop.permute.xlu0 %1010
      %1012 = vrot.lane.b32.xlu0 %v870, 32
      %v1013 = vpop.permute.xlu0 %1012
      %1014 = vrot.lane.b32.xlu0 %v939, 32
      %v1015 = vpop.permute.xlu0 %1014
      %1016 = vrot.lane.b32.xlu0 %v1001, 32
      %v1017 = vpop.permute.xlu0 %1016
      %vm1018 = vcmask 31744
      %v1021 = vsel %vm1018, %v731, %v848
      %v1024 = vsel %vm1018, %v733, %v850
      %v1027 = vsel %vm1018, %v735, %v852
      %v1030 = vsel %vm1018, %v737, %v854
      %v1033 = vsel %vm1018, %v739, %v856
      %v1036 = vsel %vm1018, %v741, %v858
      %v1039 = vsel %vm1018, %v743, %v860
      %v1042 = vsel %vm1018, %v745, %v862
      %vm1043 = vcmask 64512
      %v1045 = vsel %vm1043, %v1021, %v872
      %v1047 = vsel %vm1043, %v1024, %v874
      %v1049 = vsel %vm1043, %v1027, %v876
      %v1051 = vsel %vm1043, %v1030, %v878
      %v1053 = vsel %vm1043, %v1033, %v880
      %v1055 = vsel %vm1043, %v1036, %v882
      %v1057 = vsel %vm1043, %v1039, %v884
      %v1059 = vsel %vm1043, %v1042, %v886
      %vm1060 = vcmask 97280
      %v1062 = vsel %vm1060, %v1045, %v898
      %v1064 = vsel %vm1060, %v1047, %v900
      %v1066 = vsel %vm1060, %v1049, %v902
      %v1068 = vsel %vm1060, %v1051, %v904
      %v1070 = vsel %vm1060, %v1053, %v906
      %v1072 = vsel %vm1060, %v1055, %v908
      %v1074 = vsel %vm1060, %v1057, %v910
      %v1076 = vsel %vm1060, %v1059, %v912
      %vm1077 = vcmask 130048
      %v1079 = vsel %vm1077, %v1062, %v924
      %v1081 = vsel %vm1077, %v1064, %v926
      %v1083 = vsel %vm1077, %v1066, %v928
      %v1085 = vsel %vm1077, %v1068, %v930
      %v1087 = vsel %vm1077, %v1070, %v932
      %v1089 = vsel %vm1077, %v1072, %v934
      %v1091 = vsel %vm1077, %v1074, %v936
      %v1093 = vsel %vm1077, %v1076, %v938
      %vm1094 = vcmask 162816
      %v1096 = vsel %vm1094, %v1079, %v941
      %v1098 = vsel %vm1094, %v1081, %v943
      %v1100 = vsel %vm1094, %v1083, %v945
      %v1102 = vsel %vm1094, %v1085, %v947
      %v1104 = vsel %vm1094, %v1087, %v949
      %v1106 = vsel %vm1094, %v1089, %v951
      %v1108 = vsel %vm1094, %v1091, %v953
      %v1110 = vsel %vm1094, %v1093, %v955
      %vm1111 = vcmask 195584
      %v1113 = vsel %vm1111, %v1096, %v960
      %v1115 = vsel %vm1111, %v1098, %v962
      %v1117 = vsel %vm1111, %v1100, %v964
      %v1119 = vsel %vm1111, %v1102, %v966
      %v1121 = vsel %vm1111, %v1104, %v968
      %v1123 = vsel %vm1111, %v1106, %v970
      %v1125 = vsel %vm1111, %v1108, %v972
      %v1127 = vsel %vm1111, %v1110, %v974
      %vm1128 = vcmask 228352
      %v1130 = vsel %vm1128, %v1113, %v986
      %v1132 = vsel %vm1128, %v1115, %v988
      %v1134 = vsel %vm1128, %v1117, %v990
      %v1136 = vsel %vm1128, %v1119, %v992
      %v1138 = vsel %vm1128, %v1121, %v994
      %v1140 = vsel %vm1128, %v1123, %v996
      %v1142 = vsel %vm1128, %v1125, %v998
      %v1144 = vsel %vm1128, %v1127, %v1000
      %vm1145 = vcmask 261120
      %v1147 = vsel %vm1145, %v1130, %v1003
      %v1149 = vsel %vm1145, %v1132, %v1005
      %v1151 = vsel %vm1145, %v1134, %v1007
      %v1153 = vsel %vm1145, %v1136, %v1009
      %v1155 = vsel %vm1145, %v1138, %v1011
      %v1157 = vsel %vm1145, %v1140, %v1013
      %v1159 = vsel %vm1145, %v1142, %v1015
      %v1161 = vsel %vm1145, %v1144, %v1017
      %s1162 = scalar_lea.vmem %s2, 20
      %v1163 = vld [vmem:[%s1162] sm:$0xf]
      %v1164 = vld [vmem:[%s1162 + $0x4] sm:$0xf]
      %v1165 = vld [vmem:[%s1162 + $0x8] sm:$0xf]
      %v1166 = vld [vmem:[%s1162 + $0xc] sm:$0xf]
      %v1167 = vld [vmem:[%s1162 + $0x10] sm:$0x3]
      %v1176 = vunpack.c.l.b16 %v1147
      %v1177 = vunpack.c.l.b16 %v1149
      %v1178 = vunpack.c.l.b16 %v1151
      %v1179 = vunpack.c.l.b16 %v1153
      %v1180 = vunpack.c.l.b16 %v1155
      %v1181 = vunpack.c.l.b16 %v1157
      %v1182 = vunpack.c.l.b16 %v1159
      %v1183 = vunpack.c.l.b16 %v1161
      %v1184 = vpack.c.b16 %v1177, %v1176
      %v1185 = vpack.c.b16 %v1179, %v1178
      %v1186 = vpack.c.b16 %v1181, %v1180
      %v1187 = vpack.c.b16 %v1183, %v1182
      %v1193 = vunpack.c.l.b16 %v1163
      %v1194 = vunpack.c.l.b16 %v1164
      %v1195 = vunpack.c.l.b16 %v1165
      %v1196 = vunpack.c.l.b16 %v1166
      %v1197 = vunpack.c.l.b16 %v1167
      %v1198 = vpack.c.b16 %v1194, %v1193
      %v1199 = vpack.c.b16 %v1196, %v1195
      %v1200 = vpack.c.b16 %v1197, %v1197
      %vm1203 = vcmask 293888
      %v1205 = vsel %vm1203, %v1184, 0
      %v1208 = vsel %vm1203, %v1185, 0
      %v1211 = vsel %vm1203, %v1186, 0
      %v1214 = vsel %vm1203, %v1187, 0
      %vm1216 = vcmask 1041408
      %v1218 = vsel %vm1216, %v1200, 0
      %1220 = vmatprep.subr.bf16.mxu0 0
      %1221 = vmatpush1.bf16.msra.mxu0 %v1198
      %1222 = vmatprep.subr.bf16.mxu0 0
      %1223 = vmatpush1.bf16.msra.mxu0 %v1199
      %1224 = vmatprep.subr.bf16.mxu0 0
      %1225 = vmatpush1.bf16.msra.mxu0 %v1218
      %1226 = vmatprep.subr.bf16.mxu0 0
      %1227 = vmatpush1.bf16.msra.mxu0 0
      %1228 = vmatprep.subr.bf16.mxu0 0
      %1229 = vmatpush1.bf16.msra.mxu0 0
      %1230 = vmatprep.subr.bf16.mxu0 0
      %1231 = vmatpush1.bf16.msra.mxu0 0
      %1232 = vmatprep.subr.bf16.mxu0 0
      %1233 = vmatpush1.bf16.msra.mxu0 0
      %1234 = vmatprep.subr.bf16.mxu0 0
      %1235 = vmatpush1.bf16.msra.mxu0 0
      %1236 = vmatprep.subr.bf16.mxu0 0
      %1237 = vmatpush1.bf16.msra.mxu0 0
      %1238 = vmatprep.subr.bf16.mxu0 0
      %1239 = vmatpush1.bf16.msra.mxu0 0
      %1240 = vmatprep.subr.bf16.mxu0 0
      %1241 = vmatpush1.bf16.msra.mxu0 0
      %1242 = vmatprep.subr.bf16.mxu0 0
      %1243 = vmatpush1.bf16.msra.mxu0 0
      %1244 = vmatprep.subr.bf16.mxu0 0
      %1245 = vmatpush1.bf16.msra.mxu0 0
      %1246 = vmatprep.subr.bf16.mxu0 0
      %1247 = vmatpush1.bf16.msra.mxu0 0
      %1248 = vmatprep.subr.bf16.mxu0 0
      %1249 = vmatpush1.bf16.msra.mxu0 0
      %1250 = vmatprep.subr.bf16.mxu0 0
      %1251 = vmatpush1.bf16.msra.mxu0 0
      %1252 = vmatprep.mubr.bf16.mxu0 0
      %1253 = vmatmul.mubr.bf16.gmra.mrb[0].mxu0 %v1205
      %v1254 = vpop.f32.mrb[0].mxu0
      %v1255 = vadd.f32 0.0, %v1254
      %v1256 = vpop.f32.mrb[0].mxu0
      %v1257 = vpop.f32.mrb[0].mxu0
      %v1258 = vadd.f32 0.0, %v1257
      %v1259 = vpop.f32.mrb[0].mxu0
      %1260 = vmatprep.mubr.bf16.mxu0 0
      %1261 = vmatmul.mubr.bf16.gmra.mrb[0].mxu0 %v1208
      %v1262 = vpop.f32.mrb[0].mxu0
      %v1263 = vadd.f32 0.0, %v1262
      %v1264 = vpop.f32.mrb[0].mxu0
      %v1265 = vpop.f32.mrb[0].mxu0
      %v1266 = vadd.f32 0.0, %v1265
      %v1267 = vpop.f32.mrb[0].mxu0
      %1268 = vmatprep.mubr.bf16.mxu0 0
      %1269 = vmatmul.mubr.bf16.gmra.mrb[0].mxu0 %v1211
      %v1270 = vpop.f32.mrb[0].mxu0
      %v1271 = vadd.f32 0.0, %v1270
      %v1272 = vpop.f32.mrb[0].mxu0
      %v1273 = vpop.f32.mrb[0].mxu0
      %v1274 = vadd.f32 0.0, %v1273
      %v1275 = vpop.f32.mrb[0].mxu0
      %1276 = vmatprep.mubr.bf16.mxu0 0
      %1277 = vmatmul.mubr.bf16.gmra.mrb[0].mxu0 %v1214
      %v1278 = vpop.f32.mrb[0].mxu0
      %v1279 = vadd.f32 0.0, %v1278
      %v1280 = vpop.f32.mrb[0].mxu0
      %v1281 = vpop.f32.mrb[0].mxu0
      %v1282 = vadd.f32 0.0, %v1281
      %v1283 = vpop.f32.mrb[0].mxu0
      %1284 = vdwg.mxu0
      %1285 = vst.msk [vmem:[#allocation3] sm:$0xff] %vm1043, %v1255
      %1286 = vst.msk [vmem:[#allocation3 + $0x8] sm:$0xff] %vm1043, %v1258
      %1287 = vst.msk [vmem:[#allocation3 + $0x10] sm:$0xff] %vm1043, %v1263
      %1288 = vst.msk [vmem:[#allocation3 + $0x18] sm:$0xff] %vm1043, %v1266
      %1289 = vst.msk [vmem:[#allocation3 + $0x20] sm:$0xff] %vm1043, %v1271
      %1290 = vst.msk [vmem:[#allocation3 + $0x28] sm:$0xff] %vm1043, %v1274
      %1291 = vst.msk [vmem:[#allocation3 + $0x30] sm:$0xff] %vm1043, %v1279
      %1292 = vst.msk [vmem:[#allocation3 + $0x38] sm:$0xff] %vm1043, %v1282
      %p1293 = scmp.gt.s32.totalorder %s24, 0
      // Predicated region
      $region49: #{double_conv_forward.3} parent=39 // pred_check
        %p1294 = pneg %p1293
      $region50: #{double_conv_forward.3} parent=39 // pred_check_branch
        %1296 = sbr.rel (%p1294) target = $region52
      $region51: #{double_conv_forward.3} parent=39 // pred_region
        %v1297 = vld [vmem:[#allocation3] sm:$0xff]
        %v1298 = vld [vmem:[#allocation3 + $0x8] sm:$0xff]
        %v1299 = vld [vmem:[#allocation3 + $0x10] sm:$0xff]
        %v1300 = vld [vmem:[#allocation3 + $0x18] sm:$0xff]
        %v1301 = vld [vmem:[#allocation3 + $0x20] sm:$0xff]
        %v1302 = vld [vmem:[#allocation3 + $0x28] sm:$0xff]
        %v1303 = vld [vmem:[#allocation3 + $0x30] sm:$0xff]
        %v1304 = vld [vmem:[#allocation3 + $0x38] sm:$0xff]
        %s1305 = ssub.s32 %s24, 1
        %p1306 = scmp.lt.s32.totalorder %s1305, 0
        %s1307 = ssub.s32 0, %s1305
        %s1308 = scalar_select %p1306, %s1307, %s1305
        %s1309 = sdiv.u32.pop %s1308, 3
        %s1310 = srem.u32.pop %s1308, 3
        %s1311 = ssub.s32 0, %s1310
        %s1312 = scalar_select %p1306, %s1311, %s1310
        %p1313 = scmp.ne.s32.totalorder %s1312, 0
        %p1314 = scmp.lt.s32.totalorder %s1312, 0
        %p1315 = pnand %p1314, %p1313
        %p1316 = pneg %p1315
        %s1317 = sadd.s32 %s1312, 3
        %s1318 = scalar_select %p1316, %s1317, %s1312
        %s1319 = smul.u32 %s1318, 20
        %s1320 = smul.addr %s1319, 4
        %s1321 = scalar_lea.vmem [#allocation2], %s1320
        %v1322 = vld [vmem:[%s1321] sm:$0xf]
        %v1323 = vld [vmem:[%s1321 + $0x4] sm:$0x1]
        %v1324 = vld [vmem:[%s1321 + $0x8] sm:$0xf]
        %v1325 = vld [vmem:[%s1321 + $0xc] sm:$0x1]
        %v1326 = vld [vmem:[%s1321 + $0x10] sm:$0xf]
        %v1327 = vld [vmem:[%s1321 + $0x14] sm:$0x1]
        %v1328 = vld [vmem:[%s1321 + $0x18] sm:$0xf]
        %v1329 = vld [vmem:[%s1321 + $0x1c] sm:$0x1]
        %v1330 = vld [vmem:[%s1321 + $0x20] sm:$0xf]
        %v1331 = vld [vmem:[%s1321 + $0x24] sm:$0x1]
        %v1332 = vld [vmem:[%s1321 + $0x28] sm:$0xf]
        %v1333 = vld [vmem:[%s1321 + $0x2c] sm:$0x1]
        %v1334 = vld [vmem:[%s1321 + $0x30] sm:$0xf]
        %v1335 = vld [vmem:[%s1321 + $0x34] sm:$0x1]
        %v1336 = vld [vmem:[%s1321 + $0x38] sm:$0xf]
        %v1337 = vld [vmem:[%s1321 + $0x3c] sm:$0x1]
        %v1338 = vld [vmem:[%s1321 + $0x40] sm:$0xf]
        %v1339 = vld [vmem:[%s1321 + $0x44] sm:$0x1]
        %v1340 = vld [vmem:[%s1321 + $0x48] sm:$0xf]
        %v1341 = vld [vmem:[%s1321 + $0x4c] sm:$0x1]
        %v1358 = vunpack.c.l.b16 %v1322
        %v1359 = vunpack.c.l.b16 %v1323
        %v1360 = vunpack.c.l.b16 %v1324
        %v1361 = vunpack.c.l.b16 %v1325
        %v1362 = vunpack.c.l.b16 %v1326
        %v1363 = vunpack.c.l.b16 %v1327
        %v1364 = vunpack.c.l.b16 %v1328
        %v1365 = vunpack.c.l.b16 %v1329
        %v1366 = vunpack.c.l.b16 %v1330
        %v1367 = vunpack.c.l.b16 %v1331
        %v1368 = vunpack.c.l.b16 %v1332
        %v1369 = vunpack.c.l.b16 %v1333
        %v1370 = vunpack.c.l.b16 %v1334
        %v1371 = vunpack.c.l.b16 %v1335
        %v1372 = vunpack.c.l.b16 %v1336
        %v1373 = vunpack.c.l.b16 %v1337
        %v1374 = vpack.c.b16 %v1359, %v1358
        %v1375 = vpack.c.b16 %v1361, %v1360
        %v1376 = vpack.c.b16 %v1363, %v1362
        %v1377 = vpack.c.b16 %v1365, %v1364
        %v1378 = vpack.c.b16 %v1367, %v1366
        %v1379 = vpack.c.b16 %v1369, %v1368
        %v1380 = vpack.c.b16 %v1371, %v1370
        %v1381 = vpack.c.b16 %v1373, %v1372
        %v1383 = vshrl.u32 %v1374, 16
        %v1385 = vshll.u32 %v1374, 16
        %v1387 = vrot.slane %v1385, 1
        %v1388 = vor.u32 %v1383, %v1387
        %v1390 = vshrl.u32 %v1375, 16
        %v1392 = vshll.u32 %v1375, 16
        %v1394 = vrot.slane %v1392, 1
        %v1395 = vor.u32 %v1390, %v1394
        %v1397 = vshrl.u32 %v1376, 16
        %v1399 = vshll.u32 %v1376, 16
        %v1401 = vrot.slane %v1399, 1
        %v1402 = vor.u32 %v1397, %v1401
        %v1404 = vshrl.u32 %v1377, 16
        %v1406 = vshll.u32 %v1377, 16
        %v1408 = vrot.slane %v1406, 1
        %v1409 = vor.u32 %v1404, %v1408
        %v1411 = vshrl.u32 %v1378, 16
        %v1413 = vshll.u32 %v1378, 16
        %v1415 = vrot.slane %v1413, 1
        %v1416 = vor.u32 %v1411, %v1415
        %v1418 = vshrl.u32 %v1379, 16
        %v1420 = vshll.u32 %v1379, 16
        %v1422 = vrot.slane %v1420, 1
        %v1423 = vor.u32 %v1418, %v1422
        %v1425 = vshrl.u32 %v1380, 16
        %v1427 = vshll.u32 %v1380, 16
        %v1429 = vrot.slane %v1427, 1
        %v1430 = vor.u32 %v1425, %v1429
        %v1432 = vshrl.u32 %v1381, 16
        %v1434 = vshll.u32 %v1381, 16
        %v1436 = vrot.slane %v1434, 1
        %v1437 = vor.u32 %v1432, %v1436
        %1438 = vrot.lane.b32.xlu0 %v1388, 4
        %v1439 = vpop.permute.xlu0 %1438
        %1440 = vrot.lane.b32.xlu0 %v1395, 4
        %v1441 = vpop.permute.xlu0 %1440
        %1442 = vrot.lane.b32.xlu0 %v1402, 4
        %v1443 = vpop.permute.xlu0 %1442
        %1444 = vrot.lane.b32.xlu0 %v1409, 4
        %v1445 = vpop.permute.xlu0 %1444
        %1446 = vrot.lane.b32.xlu0 %v1416, 4
        %v1447 = vpop.permute.xlu0 %1446
        %1448 = vrot.lane.b32.xlu0 %v1423, 4
        %v1449 = vpop.permute.xlu0 %1448
        %1450 = vrot.lane.b32.xlu0 %v1430, 4
        %v1451 = vpop.permute.xlu0 %1450
        %1452 = vrot.lane.b32.xlu0 %v1437, 4
        %v1453 = vpop.permute.xlu0 %1452
        %v1454 = vrot.slane %v1374, 1
        %v1455 = vrot.slane %v1375, 1
        %v1456 = vrot.slane %v1376, 1
        %v1457 = vrot.slane %v1377, 1
        %v1458 = vrot.slane %v1378, 1
        %v1459 = vrot.slane %v1379, 1
        %v1460 = vrot.slane %v1380, 1
        %v1461 = vrot.slane %v1381, 1
        %1462 = vrot.lane.b32.xlu0 %v1454, 8
        %v1463 = vpop.permute.xlu0 %1462
        %1464 = vrot.lane.b32.xlu0 %v1455, 8
        %v1465 = vpop.permute.xlu0 %1464
        %1466 = vrot.lane.b32.xlu0 %v1456, 8
        %v1467 = vpop.permute.xlu0 %1466
        %1468 = vrot.lane.b32.xlu0 %v1457, 8
        %v1469 = vpop.permute.xlu0 %1468
        %1470 = vrot.lane.b32.xlu0 %v1458, 8
        %v1471 = vpop.permute.xlu0 %1470
        %1472 = vrot.lane.b32.xlu0 %v1459, 8
        %v1473 = vpop.permute.xlu0 %1472
        %1474 = vrot.lane.b32.xlu0 %v1460, 8
        %v1475 = vpop.permute.xlu0 %1474
        %1476 = vrot.lane.b32.xlu0 %v1461, 8
        %v1477 = vpop.permute.xlu0 %1476
        %v1479 = vunpack.c.l.b16 %v1338
        %v1480 = vpack.c.b16 %v1360, %v1360
        %v1481 = vpack.c.b16 %v1362, %v1362
        %v1482 = vpack.c.b16 %v1364, %v1364
        %v1483 = vpack.c.b16 %v1366, %v1366
        %v1484 = vpack.c.b16 %v1368, %v1368
        %v1485 = vpack.c.b16 %v1370, %v1370
        %v1486 = vpack.c.b16 %v1372, %v1372
        %v1487 = vpack.c.b16 %v1479, %v1479
        %1488 = vrot.lane.b32.xlu0 %v1480, 12
        %v1489 = vpop.permute.xlu0 %1488
        %1490 = vrot.lane.b32.xlu0 %v1481, 12
        %v1491 = vpop.permute.xlu0 %1490
        %1492 = vrot.lane.b32.xlu0 %v1482, 12
        %v1493 = vpop.permute.xlu0 %1492
        %1494 = vrot.lane.b32.xlu0 %v1483, 12
        %v1495 = vpop.permute.xlu0 %1494
        %1496 = vrot.lane.b32.xlu0 %v1484, 12
        %v1497 = vpop.permute.xlu0 %1496
        %1498 = vrot.lane.b32.xlu0 %v1485, 12
        %v1499 = vpop.permute.xlu0 %1498
        %1500 = vrot.lane.b32.xlu0 %v1486, 12
        %v1501 = vpop.permute.xlu0 %1500
        %1502 = vrot.lane.b32.xlu0 %v1487, 12
        %v1503 = vpop.permute.xlu0 %1502
        %v1505 = vunpack.c.l.b16 %v1339
        %v1506 = vpack.c.b16 %v1505, %v1479
        %v1508 = vshrl.u32 %v1506, 16
        %v1510 = vshll.u32 %v1506, 16
        %v1512 = vrot.slane %v1510, 1
        %v1513 = vor.u32 %v1508, %v1512
        %1514 = vrot.lane.b32.xlu0 %v1395, 16
        %v1515 = vpop.permute.xlu0 %1514
        %1516 = vrot.lane.b32.xlu0 %v1402, 16
        %v1517 = vpop.permute.xlu0 %1516
        %1518 = vrot.lane.b32.xlu0 %v1409, 16
        %v1519 = vpop.permute.xlu0 %1518
        %1520 = vrot.lane.b32.xlu0 %v1416, 16
        %v1521 = vpop.permute.xlu0 %1520
        %1522 = vrot.lane.b32.xlu0 %v1423, 16
        %v1523 = vpop.permute.xlu0 %1522
        %1524 = vrot.lane.b32.xlu0 %v1430, 16
        %v1525 = vpop.permute.xlu0 %1524
        %1526 = vrot.lane.b32.xlu0 %v1437, 16
        %v1527 = vpop.permute.xlu0 %1526
        %1528 = vrot.lane.b32.xlu0 %v1513, 16
        %v1529 = vpop.permute.xlu0 %1528
        %v1530 = vrot.slane %v1506, 1
        %1531 = vrot.lane.b32.xlu0 %v1455, 20
        %v1532 = vpop.permute.xlu0 %1531
        %1533 = vrot.lane.b32.xlu0 %v1456, 20
        %v1534 = vpop.permute.xlu0 %1533
        %1535 = vrot.lane.b32.xlu0 %v1457, 20
        %v1536 = vpop.permute.xlu0 %1535
        %1537 = vrot.lane.b32.xlu0 %v1458, 20
        %v1538 = vpop.permute.xlu0 %1537
        %1539 = vrot.lane.b32.xlu0 %v1459, 20
        %v1540 = vpop.permute.xlu0 %1539
        %1541 = vrot.lane.b32.xlu0 %v1460, 20
        %v1542 = vpop.permute.xlu0 %1541
        %1543 = vrot.lane.b32.xlu0 %v1461, 20
        %v1544 = vpop.permute.xlu0 %1543
        %1545 = vrot.lane.b32.xlu0 %v1530, 20
        %v1546 = vpop.permute.xlu0 %1545
        %v1548 = vunpack.c.l.b16 %v1340
        %v1549 = vpack.c.b16 %v1548, %v1548
        %1550 = vrot.lane.b32.xlu0 %v1481, 24
        %v1551 = vpop.permute.xlu0 %1550
        %1552 = vrot.lane.b32.xlu0 %v1482, 24
        %v1553 = vpop.permute.xlu0 %1552
        %1554 = vrot.lane.b32.xlu0 %v1483, 24
        %v1555 = vpop.permute.xlu0 %1554
        %1556 = vrot.lane.b32.xlu0 %v1484, 24
        %v1557 = vpop.permute.xlu0 %1556
        %1558 = vrot.lane.b32.xlu0 %v1485, 24
        %v1559 = vpop.permute.xlu0 %1558
        %1560 = vrot.lane.b32.xlu0 %v1486, 24
        %v1561 = vpop.permute.xlu0 %1560
        %1562 = vrot.lane.b32.xlu0 %v1487, 24
        %v1563 = vpop.permute.xlu0 %1562
        %1564 = vrot.lane.b32.xlu0 %v1549, 24
        %v1565 = vpop.permute.xlu0 %1564
        %v1567 = vunpack.c.l.b16 %v1341
        %v1568 = vpack.c.b16 %v1567, %v1548
        %v1570 = vshrl.u32 %v1568, 16
        %v1572 = vshll.u32 %v1568, 16
        %v1574 = vrot.slane %v1572, 1
        %v1575 = vor.u32 %v1570, %v1574
        %1576 = vrot.lane.b32.xlu0 %v1402, 28
        %v1577 = vpop.permute.xlu0 %1576
        %1578 = vrot.lane.b32.xlu0 %v1409, 28
        %v1579 = vpop.permute.xlu0 %1578
        %1580 = vrot.lane.b32.xlu0 %v1416, 28
        %v1581 = vpop.permute.xlu0 %1580
        %1582 = vrot.lane.b32.xlu0 %v1423, 28
        %v1583 = vpop.permute.xlu0 %1582
        %1584 = vrot.lane.b32.xlu0 %v1430, 28
        %v1585 = vpop.permute.xlu0 %1584
        %1586 = vrot.lane.b32.xlu0 %v1437, 28
        %v1587 = vpop.permute.xlu0 %1586
        %1588 = vrot.lane.b32.xlu0 %v1513, 28
        %v1589 = vpop.permute.xlu0 %1588
        %1590 = vrot.lane.b32.xlu0 %v1575, 28
        %v1591 = vpop.permute.xlu0 %1590
        %v1592 = vrot.slane %v1568, 1
        %1593 = vrot.lane.b32.xlu0 %v1456, 32
        %v1594 = vpop.permute.xlu0 %1593
        %1595 = vrot.lane.b32.xlu0 %v1457, 32
        %v1596 = vpop.permute.xlu0 %1595
        %1597 = vrot.lane.b32.xlu0 %v1458, 32
        %v1598 = vpop.permute.xlu0 %1597
        %1599 = vrot.lane.b32.xlu0 %v1459, 32
        %v1600 = vpop.permute.xlu0 %1599
        %1601 = vrot.lane.b32.xlu0 %v1460, 32
        %v1602 = vpop.permute.xlu0 %1601
        %1603 = vrot.lane.b32.xlu0 %v1461, 32
        %v1604 = vpop.permute.xlu0 %1603
        %1605 = vrot.lane.b32.xlu0 %v1530, 32
        %v1606 = vpop.permute.xlu0 %1605
        %1607 = vrot.lane.b32.xlu0 %v1592, 32
        %v1608 = vpop.permute.xlu0 %1607
        %v1611 = vsel %vm1018, %v1322, %v1439
        %v1614 = vsel %vm1018, %v1324, %v1441
        %v1617 = vsel %vm1018, %v1326, %v1443
        %v1620 = vsel %vm1018, %v1328, %v1445
        %v1623 = vsel %vm1018, %v1330, %v1447
        %v1626 = vsel %vm1018, %v1332, %v1449
        %v1629 = vsel %vm1018, %v1334, %v1451
        %v1632 = vsel %vm1018, %v1336, %v1453
        %v1634 = vsel %vm1043, %v1611, %v1463
        %v1636 = vsel %vm1043, %v1614, %v1465
        %v1638 = vsel %vm1043, %v1617, %v1467
        %v1640 = vsel %vm1043, %v1620, %v1469
        %v1642 = vsel %vm1043, %v1623, %v1471
        %v1644 = vsel %vm1043, %v1626, %v1473
        %v1646 = vsel %vm1043, %v1629, %v1475
        %v1648 = vsel %vm1043, %v1632, %v1477
        %v1650 = vsel %vm1060, %v1634, %v1489
        %v1652 = vsel %vm1060, %v1636, %v1491
        %v1654 = vsel %vm1060, %v1638, %v1493
        %v1656 = vsel %vm1060, %v1640, %v1495
        %v1658 = vsel %vm1060, %v1642, %v1497
        %v1660 = vsel %vm1060, %v1644, %v1499
        %v1662 = vsel %vm1060, %v1646, %v1501
        %v1664 = vsel %vm1060, %v1648, %v1503
        %v1666 = vsel %vm1077, %v1650, %v1515
        %v1668 = vsel %vm1077, %v1652, %v1517
        %v1670 = vsel %vm1077, %v1654, %v1519
        %v1672 = vsel %vm1077, %v1656, %v1521
        %v1674 = vsel %vm1077, %v1658, %v1523
        %v1676 = vsel %vm1077, %v1660, %v1525
        %v1678 = vsel %vm1077, %v1662, %v1527
        %v1680 = vsel %vm1077, %v1664, %v1529
        %v1682 = vsel %vm1094, %v1666, %v1532
        %v1684 = vsel %vm1094, %v1668, %v1534
        %v1686 = vsel %vm1094, %v1670, %v1536
        %v1688 = vsel %vm1094, %v1672, %v1538
        %v1690 = vsel %vm1094, %v1674, %v1540
        %v1692 = vsel %vm1094, %v1676, %v1542
        %v1694 = vsel %vm1094, %v1678, %v1544
        %v1696 = vsel %vm1094, %v1680, %v1546
        %v1698 = vsel %vm1111, %v1682, %v1551
        %v1700 = vsel %vm1111, %v1684, %v1553
        %v1702 = vsel %vm1111, %v1686, %v1555
        %v1704 = vsel %vm1111, %v1688, %v1557
        %v1706 = vsel %vm1111, %v1690, %v1559
        %v1708 = vsel %vm1111, %v1692, %v1561
        %v1710 = vsel %vm1111, %v1694, %v1563
        %v1712 = vsel %vm1111, %v1696, %v1565
        %v1714 = vsel %vm1128, %v1698, %v1577
        %v1716 = vsel %vm1128, %v1700, %v1579
        %v1718 = vsel %vm1128, %v1702, %v1581
        %v1720 = vsel %vm1128, %v1704, %v1583
        %v1722 = vsel %vm1128, %v1706, %v1585
        %v1724 = vsel %vm1128, %v1708, %v1587
        %v1726 = vsel %vm1128, %v1710, %v1589
        %v1728 = vsel %vm1128, %v1712, %v1591
        %v1730 = vsel %vm1145, %v1714, %v1594
        %v1732 = vsel %vm1145, %v1716, %v1596
        %v1734 = vsel %vm1145, %v1718, %v1598
        %v1736 = vsel %vm1145, %v1720, %v1600
        %v1738 = vsel %vm1145, %v1722, %v1602
        %v1740 = vsel %vm1145, %v1724, %v1604
        %v1742 = vsel %vm1145, %v1726, %v1606
        %v1744 = vsel %vm1145, %v1728, %v1608
        %v1745 = vld [vmem:[%s2] sm:$0xf]
        %v1746 = vld [vmem:[%s2 + $0x4] sm:$0xf]
        %v1747 = vld [vmem:[%s2 + $0x8] sm:$0xf]
        %v1748 = vld [vmem:[%s2 + $0xc] sm:$0xf]
        %v1749 = vld [vmem:[%s2 + $0x10] sm:$0x3]
        %v1758 = vunpack.c.l.b16 %v1730
        %v1759 = vunpack.c.l.b16 %v1732
        %v1760 = vunpack.c.l.b16 %v1734
        %v1761 = vunpack.c.l.b16 %v1736
        %v1762 = vunpack.c.l.b16 %v1738
        %v1763 = vunpack.c.l.b16 %v1740
        %v1764 = vunpack.c.l.b16 %v1742
        %v1765 = vunpack.c.l.b16 %v1744
        %v1766 = vpack.c.b16 %v1759, %v1758
        %v1767 = vpack.c.b16 %v1761, %v1760
        %v1768 = vpack.c.b16 %v1763, %v1762
        %v1769 = vpack.c.b16 %v1765, %v1764
        %v1775 = vunpack.c.l.b16 %v1745
        %v1776 = vunpack.c.l.b16 %v1746
        %v1777 = vunpack.c.l.b16 %v1747
        %v1778 = vunpack.c.l.b16 %v1748
        %v1779 = vunpack.c.l.b16 %v1749
        %v1780 = vpack.c.b16 %v1776, %v1775
        %v1781 = vpack.c.b16 %v1778, %v1777
        %v1782 = vpack.c.b16 %v1779, %v1779
        %v1786 = vsel %vm1203, %v1766, 0
        %v1789 = vsel %vm1203, %v1767, 0
        %v1792 = vsel %vm1203, %v1768, 0
        %v1795 = vsel %vm1203, %v1769, 0
        %v1798 = vsel %vm1216, %v1782, 0
        %1800 = vmatprep.subr.bf16.mxu0 0
        %1801 = vmatpush1.bf16.msra.mxu0 %v1780
        %1802 = vmatprep.subr.bf16.mxu0 0
        %1803 = vmatpush1.bf16.msra.mxu0 %v1781
        %1804 = vmatprep.subr.bf16.mxu0 0
        %1805 = vmatpush1.bf16.msra.mxu0 %v1798
        %1806 = vmatprep.subr.bf16.mxu0 0
        %1807 = vmatpush1.bf16.msra.mxu0 0
        %1808 = vmatprep.subr.bf16.mxu0 0
        %1809 = vmatpush1.bf16.msra.mxu0 0
        %1810 = vmatprep.subr.bf16.mxu0 0
        %1811 = vmatpush1.bf16.msra.mxu0 0
        %1812 = vmatprep.subr.bf16.mxu0 0
        %1813 = vmatpush1.bf16.msra.mxu0 0
        %1814 = vmatprep.subr.bf16.mxu0 0
        %1815 = vmatpush1.bf16.msra.mxu0 0
        %1816 = vmatprep.subr.bf16.mxu0 0
        %1817 = vmatpush1.bf16.msra.mxu0 0
        %1818 = vmatprep.subr.bf16.mxu0 0
        %1819 = vmatpush1.bf16.msra.mxu0 0
        %1820 = vmatprep.subr.bf16.mxu0 0
        %1821 = vmatpush1.bf16.msra.mxu0 0
        %1822 = vmatprep.subr.bf16.mxu0 0
        %1823 = vmatpush1.bf16.msra.mxu0 0
        %1824 = vmatprep.subr.bf16.mxu0 0
        %1825 = vmatpush1.bf16.msra.mxu0 0
        %1826 = vmatprep.subr.bf16.mxu0 0
        %1827 = vmatpush1.bf16.msra.mxu0 0
        %1828 = vmatprep.subr.bf16.mxu0 0
        %1829 = vmatpush1.bf16.msra.mxu0 0
        %1830 = vmatprep.subr.bf16.mxu0 0
        %1831 = vmatpush1.bf16.msra.mxu0 0
        %1832 = vmatprep.mubr.bf16.mxu0 0
        %1833 = vmatmul.mubr.bf16.gmra.mrb[0].mxu0 %v1786
        %v1834 = vpop.f32.mrb[0].mxu0
        %v1835 = vadd.f32 0.0, %v1834
        %v1836 = vpop.f32.mrb[0].mxu0
        %v1837 = vpop.f32.mrb[0].mxu0
        %v1838 = vadd.f32 0.0, %v1837
        %v1839 = vpop.f32.mrb[0].mxu0
        %1840 = vmatprep.mubr.bf16.mxu0 0
        %1841 = vmatmul.mubr.bf16.gmra.mrb[0].mxu0 %v1789
        %v1842 = vpop.f32.mrb[0].mxu0
        %v1843 = vadd.f32 0.0, %v1842
        %v1844 = vpop.f32.mrb[0].mxu0
        %v1845 = vpop.f32.mrb[0].mxu0
        %v1846 = vadd.f32 0.0, %v1845
        %v1847 = vpop.f32.mrb[0].mxu0
        %1848 = vmatprep.mubr.bf16.mxu0 0
        %1849 = vmatmul.mubr.bf16.gmra.mrb[0].mxu0 %v1792
        %v1850 = vpop.f32.mrb[0].mxu0
        %v1851 = vadd.f32 0.0, %v1850
        %v1852 = vpop.f32.mrb[0].mxu0
        %v1853 = vpop.f32.mrb[0].mxu0
        %v1854 = vadd.f32 0.0, %v1853
        %v1855 = vpop.f32.mrb[0].mxu0
        %1856 = vmatprep.mubr.bf16.mxu0 0
        %1857 = vmatmul.mubr.bf16.gmra.mrb[0].mxu0 %v1795
        %v1858 = vpop.f32.mrb[0].mxu0
        %v1859 = vadd.f32 0.0, %v1858
        %v1860 = vpop.f32.mrb[0].mxu0
        %v1861 = vpop.f32.mrb[0].mxu0
        %v1862 = vadd.f32 0.0, %v1861
        %v1863 = vpop.f32.mrb[0].mxu0
        %1864 = vdwg.mxu0
        %v1865 = vadd.f32 %v1297, %v1835
        %v1866 = vadd.f32 %v1298, %v1838
        %v1867 = vadd.f32 %v1299, %v1843
        %v1868 = vadd.f32 %v1300, %v1846
        %v1869 = vadd.f32 %v1301, %v1851
        %v1870 = vadd.f32 %v1302, %v1854
        %v1871 = vadd.f32 %v1303, %v1859
        %v1872 = vadd.f32 %v1304, %v1862
        %1873 = vst.msk [vmem:[#allocation3] sm:$0xff] %vm1043, %v1865
        %1874 = vst.msk [vmem:[#allocation3 + $0x8] sm:$0xff] %vm1043, %v1866
        %1875 = vst.msk [vmem:[#allocation3 + $0x10] sm:$0xff] %vm1043, %v1867
        %1876 = vst.msk [vmem:[#allocation3 + $0x18] sm:$0xff] %vm1043, %v1868
        %1877 = vst.msk [vmem:[#allocation3 + $0x20] sm:$0xff] %vm1043, %v1869
        %1878 = vst.msk [vmem:[#allocation3 + $0x28] sm:$0xff] %vm1043, %v1870
        %1879 = vst.msk [vmem:[#allocation3 + $0x30] sm:$0xff] %vm1043, %v1871
        %1880 = vst.msk [vmem:[#allocation3 + $0x38] sm:$0xff] %vm1043, %v1872
      $region52: #{double_conv_forward.3} parent=39 // pred_fallthru
        _
      // Predicated region
      $region53: #{double_conv_forward.3} parent=39 // pred_check
        %p1881 = pneg %p547
      $region54: #{double_conv_forward.3} parent=39 // pred_check_branch
        %1883 = sbr.rel (%p1881) target = $region56
      $region55: #{double_conv_forward.3} parent=39 // pred_region
        %v1884 = vld [vmem:[#allocation3] sm:$0xff]
        %v1885 = vld [vmem:[#allocation3 + $0x8] sm:$0xff]
        %v1886 = vld [vmem:[#allocation3 + $0x10] sm:$0xff]
        %v1887 = vld [vmem:[#allocation3 + $0x18] sm:$0xff]
        %v1888 = vld [vmem:[#allocation3 + $0x20] sm:$0xff]
        %v1889 = vld [vmem:[#allocation3 + $0x28] sm:$0xff]
        %v1890 = vld [vmem:[#allocation3 + $0x30] sm:$0xff]
        %v1891 = vld [vmem:[#allocation3 + $0x38] sm:$0xff]
        %p1892 = scmp.lt.s32.totalorder %s546, 0
        %s1893 = ssub.s32 0, %s546
        %s1894 = scalar_select %p1892, %s1893, %s546
        %s1895 = sdiv.u32.pop %s1894, 3
        %s1896 = srem.u32.pop %s1894, 3
        %s1897 = ssub.s32 0, %s1896
        %s1898 = scalar_select %p1892, %s1897, %s1896
        %p1899 = scmp.ne.s32.totalorder %s1898, 0
        %p1900 = scmp.lt.s32.totalorder %s1898, 0
        %p1901 = pnand %p1900, %p1899
        %p1902 = pneg %p1901
        %s1903 = sadd.s32 %s1898, 3
        %s1904 = scalar_select %p1902, %s1903, %s1898
        %s1905 = smul.u32 %s1904, 20
        %s1906 = smul.addr %s1905, 4
        %s1907 = scalar_lea.vmem [#allocation2], %s1906
        %v1908 = vld [vmem:[%s1907] sm:$0xf]
        %v1909 = vld [vmem:[%s1907 + $0x4] sm:$0x1]
        %v1910 = vld [vmem:[%s1907 + $0x8] sm:$0xf]
        %v1911 = vld [vmem:[%s1907 + $0xc] sm:$0x1]
        %v1912 = vld [vmem:[%s1907 + $0x10] sm:$0xf]
        %v1913 = vld [vmem:[%s1907 + $0x14] sm:$0x1]
        %v1914 = vld [vmem:[%s1907 + $0x18] sm:$0xf]
        %v1915 = vld [vmem:[%s1907 + $0x1c] sm:$0x1]
        %v1916 = vld [vmem:[%s1907 + $0x20] sm:$0xf]
        %v1917 = vld [vmem:[%s1907 + $0x24] sm:$0x1]
        %v1918 = vld [vmem:[%s1907 + $0x28] sm:$0xf]
        %v1919 = vld [vmem:[%s1907 + $0x2c] sm:$0x1]
        %v1920 = vld [vmem:[%s1907 + $0x30] sm:$0xf]
        %v1921 = vld [vmem:[%s1907 + $0x34] sm:$0x1]
        %v1922 = vld [vmem:[%s1907 + $0x38] sm:$0xf]
        %v1923 = vld [vmem:[%s1907 + $0x3c] sm:$0x1]
        %v1924 = vld [vmem:[%s1907 + $0x40] sm:$0xf]
        %v1925 = vld [vmem:[%s1907 + $0x44] sm:$0x1]
        %v1926 = vld [vmem:[%s1907 + $0x48] sm:$0xf]
        %v1927 = vld [vmem:[%s1907 + $0x4c] sm:$0x1]
        %v1944 = vunpack.c.l.b16 %v1908
        %v1945 = vunpack.c.l.b16 %v1909
        %v1946 = vunpack.c.l.b16 %v1910
        %v1947 = vunpack.c.l.b16 %v1911
        %v1948 = vunpack.c.l.b16 %v1912
        %v1949 = vunpack.c.l.b16 %v1913
        %v1950 = vunpack.c.l.b16 %v1914
        %v1951 = vunpack.c.l.b16 %v1915
        %v1952 = vunpack.c.l.b16 %v1916
        %v1953 = vunpack.c.l.b16 %v1917
        %v1954 = vunpack.c.l.b16 %v1918
        %v1955 = vunpack.c.l.b16 %v1919
        %v1956 = vunpack.c.l.b16 %v1920
        %v1957 = vunpack.c.l.b16 %v1921
        %v1958 = vunpack.c.l.b16 %v1922
        %v1959 = vunpack.c.l.b16 %v1923
        %v1960 = vpack.c.b16 %v1945, %v1944
        %v1961 = vpack.c.b16 %v1947, %v1946
        %v1962 = vpack.c.b16 %v1949, %v1948
        %v1963 = vpack.c.b16 %v1951, %v1950
        %v1964 = vpack.c.b16 %v1953, %v1952
        %v1965 = vpack.c.b16 %v1955, %v1954
        %v1966 = vpack.c.b16 %v1957, %v1956
        %v1967 = vpack.c.b16 %v1959, %v1958
        %v1969 = vshrl.u32 %v1960, 16
        %v1971 = vshll.u32 %v1960, 16
        %v1973 = vrot.slane %v1971, 1
        %v1974 = vor.u32 %v1969, %v1973
        %v1976 = vshrl.u32 %v1961, 16
        %v1978 = vshll.u32 %v1961, 16
        %v1980 = vrot.slane %v1978, 1
        %v1981 = vor.u32 %v1976, %v1980
        %v1983 = vshrl.u32 %v1962, 16
        %v1985 = vshll.u32 %v1962, 16
        %v1987 = vrot.slane %v1985, 1
        %v1988 = vor.u32 %v1983, %v1987
        %v1990 = vshrl.u32 %v1963, 16
        %v1992 = vshll.u32 %v1963, 16
        %v1994 = vrot.slane %v1992, 1
        %v1995 = vor.u32 %v1990, %v1994
        %v1997 = vshrl.u32 %v1964, 16
        %v1999 = vshll.u32 %v1964, 16
        %v2001 = vrot.slane %v1999, 1
        %v2002 = vor.u32 %v1997, %v2001
        %v2004 = vshrl.u32 %v1965, 16
        %v2006 = vshll.u32 %v1965, 16
        %v2008 = vrot.slane %v2006, 1
        %v2009 = vor.u32 %v2004, %v2008
        %v2011 = vshrl.u32 %v1966, 16
        %v2013 = vshll.u32 %v1966, 16
        %v2015 = vrot.slane %v2013, 1
        %v2016 = vor.u32 %v2011, %v2015
        %v2018 = vshrl.u32 %v1967, 16
        %v2020 = vshll.u32 %v1967, 16
        %v2022 = vrot.slane %v2020, 1
        %v2023 = vor.u32 %v2018, %v2022
        %2024 = vrot.lane.b32.xlu0 %v1974, 4
        %v2025 = vpop.permute.xlu0 %2024
        %2026 = vrot.lane.b32.xlu0 %v1981, 4
        %v2027 = vpop.permute.xlu0 %2026
        %2028 = vrot.lane.b32.xlu0 %v1988, 4
        %v2029 = vpop.permute.xlu0 %2028
        %2030 = vrot.lane.b32.xlu0 %v1995, 4
        %v2031 = vpop.permute.xlu0 %2030
        %2032 = vrot.lane.b32.xlu0 %v2002, 4
        %v2033 = vpop.permute.xlu0 %2032
        %2034 = vrot.lane.b32.xlu0 %v2009, 4
        %v2035 = vpop.permute.xlu0 %2034
        %2036 = vrot.lane.b32.xlu0 %v2016, 4
        %v2037 = vpop.permute.xlu0 %2036
        %2038 = vrot.lane.b32.xlu0 %v2023, 4
        %v2039 = vpop.permute.xlu0 %2038
        %v2040 = vrot.slane %v1960, 1
        %v2041 = vrot.slane %v1961, 1
        %v2042 = vrot.slane %v1962, 1
        %v2043 = vrot.slane %v1963, 1
        %v2044 = vrot.slane %v1964, 1
        %v2045 = vrot.slane %v1965, 1
        %v2046 = vrot.slane %v1966, 1
        %v2047 = vrot.slane %v1967, 1
        %2048 = vrot.lane.b32.xlu0 %v2040, 8
        %v2049 = vpop.permute.xlu0 %2048
        %2050 = vrot.lane.b32.xlu0 %v2041, 8
        %v2051 = vpop.permute.xlu0 %2050
        %2052 = vrot.lane.b32.xlu0 %v2042, 8
        %v2053 = vpop.permute.xlu0 %2052
        %2054 = vrot.lane.b32.xlu0 %v2043, 8
        %v2055 = vpop.permute.xlu0 %2054
        %2056 = vrot.lane.b32.xlu0 %v2044, 8
        %v2057 = vpop.permute.xlu0 %2056
        %2058 = vrot.lane.b32.xlu0 %v2045, 8
        %v2059 = vpop.permute.xlu0 %2058
        %2060 = vrot.lane.b32.xlu0 %v2046, 8
        %v2061 = vpop.permute.xlu0 %2060
        %2062 = vrot.lane.b32.xlu0 %v2047, 8
        %v2063 = vpop.permute.xlu0 %2062
        %v2065 = vunpack.c.l.b16 %v1924
        %v2066 = vpack.c.b16 %v1946, %v1946
        %v2067 = vpack.c.b16 %v1948, %v1948
        %v2068 = vpack.c.b16 %v1950, %v1950
        %v2069 = vpack.c.b16 %v1952, %v1952
        %v2070 = vpack.c.b16 %v1954, %v1954
        %v2071 = vpack.c.b16 %v1956, %v1956
        %v2072 = vpack.c.b16 %v1958, %v1958
        %v2073 = vpack.c.b16 %v2065, %v2065
        %2074 = vrot.lane.b32.xlu0 %v2066, 12
        %v2075 = vpop.permute.xlu0 %2074
        %2076 = vrot.lane.b32.xlu0 %v2067, 12
        %v2077 = vpop.permute.xlu0 %2076
        %2078 = vrot.lane.b32.xlu0 %v2068, 12
        %v2079 = vpop.permute.xlu0 %2078
        %2080 = vrot.lane.b32.xlu0 %v2069, 12
        %v2081 = vpop.permute.xlu0 %2080
        %2082 = vrot.lane.b32.xlu0 %v2070, 12
        %v2083 = vpop.permute.xlu0 %2082
        %2084 = vrot.lane.b32.xlu0 %v2071, 12
        %v2085 = vpop.permute.xlu0 %2084
        %2086 = vrot.lane.b32.xlu0 %v2072, 12
        %v2087 = vpop.permute.xlu0 %2086
        %2088 = vrot.lane.b32.xlu0 %v2073, 12
        %v2089 = vpop.permute.xlu0 %2088
        %v2091 = vunpack.c.l.b16 %v1925
        %v2092 = vpack.c.b16 %v2091, %v2065
        %v2094 = vshrl.u32 %v2092, 16
        %v2096 = vshll.u32 %v2092, 16
        %v2098 = vrot.slane %v2096, 1
        %v2099 = vor.u32 %v2094, %v2098
        %2100 = vrot.lane.b32.xlu0 %v1981, 16
        %v2101 = vpop.permute.xlu0 %2100
        %2102 = vrot.lane.b32.xlu0 %v1988, 16
        %v2103 = vpop.permute.xlu0 %2102
        %2104 = vrot.lane.b32.xlu0 %v1995, 16
        %v2105 = vpop.permute.xlu0 %2104
        %2106 = vrot.lane.b32.xlu0 %v2002, 16
        %v2107 = vpop.permute.xlu0 %2106
        %2108 = vrot.lane.b32.xlu0 %v2009, 16
        %v2109 = vpop.permute.xlu0 %2108
        %2110 = vrot.lane.b32.xlu0 %v2016, 16
        %v2111 = vpop.permute.xlu0 %2110
        %2112 = vrot.lane.b32.xlu0 %v2023, 16
        %v2113 = vpop.permute.xlu0 %2112
        %2114 = vrot.lane.b32.xlu0 %v2099, 16
        %v2115 = vpop.permute.xlu0 %2114
        %v2116 = vrot.slane %v2092, 1
        %2117 = vrot.lane.b32.xlu0 %v2041, 20
        %v2118 = vpop.permute.xlu0 %2117
        %2119 = vrot.lane.b32.xlu0 %v2042, 20
        %v2120 = vpop.permute.xlu0 %2119
        %2121 = vrot.lane.b32.xlu0 %v2043, 20
        %v2122 = vpop.permute.xlu0 %2121
        %2123 = vrot.lane.b32.xlu0 %v2044, 20
        %v2124 = vpop.permute.xlu0 %2123
        %2125 = vrot.lane.b32.xlu0 %v2045, 20
        %v2126 = vpop.permute.xlu0 %2125
        %2127 = vrot.lane.b32.xlu0 %v2046, 20
        %v2128 = vpop.permute.xlu0 %2127
        %2129 = vrot.lane.b32.xlu0 %v2047, 20
        %v2130 = vpop.permute.xlu0 %2129
        %2131 = vrot.lane.b32.xlu0 %v2116, 20
        %v2132 = vpop.permute.xlu0 %2131
        %v2134 = vunpack.c.l.b16 %v1926
        %v2135 = vpack.c.b16 %v2134, %v2134
        %2136 = vrot.lane.b32.xlu0 %v2067, 24
        %v2137 = vpop.permute.xlu0 %2136
        %2138 = vrot.lane.b32.xlu0 %v2068, 24
        %v2139 = vpop.permute.xlu0 %2138
        %2140 = vrot.lane.b32.xlu0 %v2069, 24
        %v2141 = vpop.permute.xlu0 %2140
        %2142 = vrot.lane.b32.xlu0 %v2070, 24
        %v2143 = vpop.permute.xlu0 %2142
        %2144 = vrot.lane.b32.xlu0 %v2071, 24
        %v2145 = vpop.permute.xlu0 %2144
        %2146 = vrot.lane.b32.xlu0 %v2072, 24
        %v2147 = vpop.permute.xlu0 %2146
        %2148 = vrot.lane.b32.xlu0 %v2073, 24
        %v2149 = vpop.permute.xlu0 %2148
        %2150 = vrot.lane.b32.xlu0 %v2135, 24
        %v2151 = vpop.permute.xlu0 %2150
        %v2153 = vunpack.c.l.b16 %v1927
        %v2154 = vpack.c.b16 %v2153, %v2134
        %v2156 = vshrl.u32 %v2154, 16
        %v2158 = vshll.u32 %v2154, 16
        %v2160 = vrot.slane %v2158, 1
        %v2161 = vor.u32 %v2156, %v2160
        %2162 = vrot.lane.b32.xlu0 %v1988, 28
        %v2163 = vpop.permute.xlu0 %2162
        %2164 = vrot.lane.b32.xlu0 %v1995, 28
        %v2165 = vpop.permute.xlu0 %2164
        %2166 = vrot.lane.b32.xlu0 %v2002, 28
        %v2167 = vpop.permute.xlu0 %2166
        %2168 = vrot.lane.b32.xlu0 %v2009, 28
        %v2169 = vpop.permute.xlu0 %2168
        %2170 = vrot.lane.b32.xlu0 %v2016, 28
        %v2171 = vpop.permute.xlu0 %2170
        %2172 = vrot.lane.b32.xlu0 %v2023, 28
        %v2173 = vpop.permute.xlu0 %2172
        %2174 = vrot.lane.b32.xlu0 %v2099, 28
        %v2175 = vpop.permute.xlu0 %2174
        %2176 = vrot.lane.b32.xlu0 %v2161, 28
        %v2177 = vpop.permute.xlu0 %2176
        %v2178 = vrot.slane %v2154, 1
        %2179 = vrot.lane.b32.xlu0 %v2042, 32
        %v2180 = vpop.permute.xlu0 %2179
        %2181 = vrot.lane.b32.xlu0 %v2043, 32
        %v2182 = vpop.permute.xlu0 %2181
        %2183 = vrot.lane.b32.xlu0 %v2044, 32
        %v2184 = vpop.permute.xlu0 %2183
        %2185 = vrot.lane.b32.xlu0 %v2045, 32
        %v2186 = vpop.permute.xlu0 %2185
        %2187 = vrot.lane.b32.xlu0 %v2046, 32
        %v2188 = vpop.permute.xlu0 %2187
        %2189 = vrot.lane.b32.xlu0 %v2047, 32
        %v2190 = vpop.permute.xlu0 %2189
        %2191 = vrot.lane.b32.xlu0 %v2116, 32
        %v2192 = vpop.permute.xlu0 %2191
        %2193 = vrot.lane.b32.xlu0 %v2178, 32
        %v2194 = vpop.permute.xlu0 %2193
        %v2197 = vsel %vm1018, %v1908, %v2025
        %v2200 = vsel %vm1018, %v1910, %v2027
        %v2203 = vsel %vm1018, %v1912, %v2029
        %v2206 = vsel %vm1018, %v1914, %v2031
        %v2209 = vsel %vm1018, %v1916, %v2033
        %v2212 = vsel %vm1018, %v1918, %v2035
        %v2215 = vsel %vm1018, %v1920, %v2037
        %v2218 = vsel %vm1018, %v1922, %v2039
        %v2220 = vsel %vm1043, %v2197, %v2049
        %v2222 = vsel %vm1043, %v2200, %v2051
        %v2224 = vsel %vm1043, %v2203, %v2053
        %v2226 = vsel %vm1043, %v2206, %v2055
        %v2228 = vsel %vm1043, %v2209, %v2057
        %v2230 = vsel %vm1043, %v2212, %v2059
        %v2232 = vsel %vm1043, %v2215, %v2061
        %v2234 = vsel %vm1043, %v2218, %v2063
        %v2236 = vsel %vm1060, %v2220, %v2075
        %v2238 = vsel %vm1060, %v2222, %v2077
        %v2240 = vsel %vm1060, %v2224, %v2079
        %v2242 = vsel %vm1060, %v2226, %v2081
        %v2244 = vsel %vm1060, %v2228, %v2083
        %v2246 = vsel %vm1060, %v2230, %v2085
        %v2248 = vsel %vm1060, %v2232, %v2087
        %v2250 = vsel %vm1060, %v2234, %v2089
        %v2252 = vsel %vm1077, %v2236, %v2101
        %v2254 = vsel %vm1077, %v2238, %v2103
        %v2256 = vsel %vm1077, %v2240, %v2105
        %v2258 = vsel %vm1077, %v2242, %v2107
        %v2260 = vsel %vm1077, %v2244, %v2109
        %v2262 = vsel %vm1077, %v2246, %v2111
        %v2264 = vsel %vm1077, %v2248, %v2113
        %v2266 = vsel %vm1077, %v2250, %v2115
        %v2268 = vsel %vm1094, %v2252, %v2118
        %v2270 = vsel %vm1094, %v2254, %v2120
        %v2272 = vsel %vm1094, %v2256, %v2122
        %v2274 = vsel %vm1094, %v2258, %v2124
        %v2276 = vsel %vm1094, %v2260, %v2126
        %v2278 = vsel %vm1094, %v2262, %v2128
        %v2280 = vsel %vm1094, %v2264, %v2130
        %v2282 = vsel %vm1094, %v2266, %v2132
        %v2284 = vsel %vm1111, %v2268, %v2137
        %v2286 = vsel %vm1111, %v2270, %v2139
        %v2288 = vsel %vm1111, %v2272, %v2141
        %v2290 = vsel %vm1111, %v2274, %v2143
        %v2292 = vsel %vm1111, %v2276, %v2145
        %v2294 = vsel %vm1111, %v2278, %v2147
        %v2296 = vsel %vm1111, %v2280, %v2149
        %v2298 = vsel %vm1111, %v2282, %v2151
        %v2300 = vsel %vm1128, %v2284, %v2163
        %v2302 = vsel %vm1128, %v2286, %v2165
        %v2304 = vsel %vm1128, %v2288, %v2167
        %v2306 = vsel %vm1128, %v2290, %v2169
        %v2308 = vsel %vm1128, %v2292, %v2171
        %v2310 = vsel %vm1128, %v2294, %v2173
        %v2312 = vsel %vm1128, %v2296, %v2175
        %v2314 = vsel %vm1128, %v2298, %v2177
        %v2316 = vsel %vm1145, %v2300, %v2180
        %v2318 = vsel %vm1145, %v2302, %v2182
        %v2320 = vsel %vm1145, %v2304, %v2184
        %v2322 = vsel %vm1145, %v2306, %v2186
        %v2324 = vsel %vm1145, %v2308, %v2188
        %v2326 = vsel %vm1145, %v2310, %v2190
        %v2328 = vsel %vm1145, %v2312, %v2192
        %v2330 = vsel %vm1145, %v2314, %v2194
        %s2331 = scalar_lea.vmem %s2, 40
        %v2332 = vld [vmem:[%s2331] sm:$0xf]
        %v2333 = vld [vmem:[%s2331 + $0x4] sm:$0xf]
        %v2334 = vld [vmem:[%s2331 + $0x8] sm:$0xf]
        %v2335 = vld [vmem:[%s2331 + $0xc] sm:$0xf]
        %v2336 = vld [vmem:[%s2331 + $0x10] sm:$0x3]
        %v2345 = vunpack.c.l.b16 %v2316
        %v2346 = vunpack.c.l.b16 %v2318
        %v2347 = vunpack.c.l.b16 %v2320
        %v2348 = vunpack.c.l.b16 %v2322
        %v2349 = vunpack.c.l.b16 %v2324
        %v2350 = vunpack.c.l.b16 %v2326
        %v2351 = vunpack.c.l.b16 %v2328
        %v2352 = vunpack.c.l.b16 %v2330
        %v2353 = vpack.c.b16 %v2346, %v2345
        %v2354 = vpack.c.b16 %v2348, %v2347
        %v2355 = vpack.c.b16 %v2350, %v2349
        %v2356 = vpack.c.b16 %v2352, %v2351
        %v2362 = vunpack.c.l.b16 %v2332
        %v2363 = vunpack.c.l.b16 %v2333
        %v2364 = vunpack.c.l.b16 %v2334
        %v2365 = vunpack.c.l.b16 %v2335
        %v2366 = vunpack.c.l.b16 %v2336
        %v2367 = vpack.c.b16 %v2363, %v2362
        %v2368 = vpack.c.b16 %v2365, %v2364
        %v2369 = vpack.c.b16 %v2366, %v2366
        %v2373 = vsel %vm1203, %v2353, 0
        %v2376 = vsel %vm1203, %v2354, 0
        %v2379 = vsel %vm1203, %v2355, 0
        %v2382 = vsel %vm1203, %v2356, 0
        %v2385 = vsel %vm1216, %v2369, 0
        %2387 = vmatprep.subr.bf16.mxu0 0
        %2388 = vmatpush1.bf16.msra.mxu0 %v2367
        %2389 = vmatprep.subr.bf16.mxu0 0
        %2390 = vmatpush1.bf16.msra.mxu0 %v2368
        %2391 = vmatprep.subr.bf16.mxu0 0
        %2392 = vmatpush1.bf16.msra.mxu0 %v2385
        %2393 = vmatprep.subr.bf16.mxu0 0
        %2394 = vmatpush1.bf16.msra.mxu0 0
        %2395 = vmatprep.subr.bf16.mxu0 0
        %2396 = vmatpush1.bf16.msra.mxu0 0
        %2397 = vmatprep.subr.bf16.mxu0 0
        %2398 = vmatpush1.bf16.msra.mxu0 0
        %2399 = vmatprep.subr.bf16.mxu0 0
        %2400 = vmatpush1.bf16.msra.mxu0 0
        %2401 = vmatprep.subr.bf16.mxu0 0
        %2402 = vmatpush1.bf16.msra.mxu0 0
        %2403 = vmatprep.subr.bf16.mxu0 0
        %2404 = vmatpush1.bf16.msra.mxu0 0
        %2405 = vmatprep.subr.bf16.mxu0 0
        %2406 = vmatpush1.bf16.msra.mxu0 0
        %2407 = vmatprep.subr.bf16.mxu0 0
        %2408 = vmatpush1.bf16.msra.mxu0 0
        %2409 = vmatprep.subr.bf16.mxu0 0
        %2410 = vmatpush1.bf16.msra.mxu0 0
        %2411 = vmatprep.subr.bf16.mxu0 0
        %2412 = vmatpush1.bf16.msra.mxu0 0
        %2413 = vmatprep.subr.bf16.mxu0 0
        %2414 = vmatpush1.bf16.msra.mxu0 0
        %2415 = vmatprep.subr.bf16.mxu0 0
        %2416 = vmatpush1.bf16.msra.mxu0 0
        %2417 = vmatprep.subr.bf16.mxu0 0
        %2418 = vmatpush1.bf16.msra.mxu0 0
        %2419 = vmatprep.mubr.bf16.mxu0 0
        %2420 = vmatmul.mubr.bf16.gmra.mrb[0].mxu0 %v2373
        %v2421 = vpop.f32.mrb[0].mxu0
        %v2422 = vadd.f32 0.0, %v2421
        %v2423 = vpop.f32.mrb[0].mxu0
        %v2424 = vpop.f32.mrb[0].mxu0
        %v2425 = vadd.f32 0.0, %v2424
        %v2426 = vpop.f32.mrb[0].mxu0
        %2427 = vmatprep.mubr.bf16.mxu0 0
        %2428 = vmatmul.mubr.bf16.gmra.mrb[0].mxu0 %v2376
        %v2429 = vpop.f32.mrb[0].mxu0
        %v2430 = vadd.f32 0.0, %v2429
        %v2431 = vpop.f32.mrb[0].mxu0
        %v2432 = vpop.f32.mrb[0].mxu0
        %v2433 = vadd.f32 0.0, %v2432
        %v2434 = vpop.f32.mrb[0].mxu0
        %2435 = vmatprep.mubr.bf16.mxu0 0
        %2436 = vmatmul.mubr.bf16.gmra.mrb[0].mxu0 %v2379
        %v2437 = vpop.f32.mrb[0].mxu0
        %v2438 = vadd.f32 0.0, %v2437
        %v2439 = vpop.f32.mrb[0].mxu0
        %v2440 = vpop.f32.mrb[0].mxu0
        %v2441 = vadd.f32 0.0, %v2440
        %v2442 = vpop.f32.mrb[0].mxu0
        %2443 = vmatprep.mubr.bf16.mxu0 0
        %2444 = vmatmul.mubr.bf16.gmra.mrb[0].mxu0 %v2382
        %v2445 = vpop.f32.mrb[0].mxu0
        %v2446 = vadd.f32 0.0, %v2445
        %v2447 = vpop.f32.mrb[0].mxu0
        %v2448 = vpop.f32.mrb[0].mxu0
        %v2449 = vadd.f32 0.0, %v2448
        %v2450 = vpop.f32.mrb[0].mxu0
        %2451 = vdwg.mxu0
        %v2452 = vadd.f32 %v1884, %v2422
        %v2453 = vadd.f32 %v1885, %v2425
        %v2454 = vadd.f32 %v1886, %v2430
        %v2455 = vadd.f32 %v1887, %v2433
        %v2456 = vadd.f32 %v1888, %v2438
        %v2457 = vadd.f32 %v1889, %v2441
        %v2458 = vadd.f32 %v1890, %v2446
        %v2459 = vadd.f32 %v1891, %v2449
        %2460 = vst.msk [vmem:[#allocation3] sm:$0xff] %vm1043, %v2452
        %2461 = vst.msk [vmem:[#allocation3 + $0x8] sm:$0xff] %vm1043, %v2453
        %2462 = vst.msk [vmem:[#allocation3 + $0x10] sm:$0xff] %vm1043, %v2454
        %2463 = vst.msk [vmem:[#allocation3 + $0x18] sm:$0xff] %vm1043, %v2455
        %2464 = vst.msk [vmem:[#allocation3 + $0x20] sm:$0xff] %vm1043, %v2456
        %2465 = vst.msk [vmem:[#allocation3 + $0x28] sm:$0xff] %vm1043, %v2457
        %2466 = vst.msk [vmem:[#allocation3 + $0x30] sm:$0xff] %vm1043, %v2458
        %2467 = vst.msk [vmem:[#allocation3 + $0x38] sm:$0xff] %vm1043, %v2459
      $region56: #{double_conv_forward.3} parent=39 // pred_fallthru
        _
      %v2468 = vld [vmem:[#allocation3] sm:$0xff]
      %v2469 = vld [vmem:[#allocation3 + $0x8] sm:$0xff]
      %v2470 = vld [vmem:[#allocation3 + $0x10] sm:$0xff]
      %v2471 = vld [vmem:[#allocation3 + $0x18] sm:$0xff]
      %v2472 = vld [vmem:[#allocation3 + $0x20] sm:$0xff]
      %v2473 = vld [vmem:[#allocation3 + $0x28] sm:$0xff]
      %v2474 = vld [vmem:[#allocation3 + $0x30] sm:$0xff]
      %v2475 = vld [vmem:[#allocation3 + $0x38] sm:$0xff]
      %v2476 = vpack.c.bf16 %v2468, %v2468
      %v2477 = vpack.c.bf16 %v2469, %v2469
      %v2478 = vpack.c.bf16 %v2470, %v2470
      %v2479 = vpack.c.bf16 %v2471, %v2471
      %v2480 = vpack.c.bf16 %v2472, %v2472
      %v2481 = vpack.c.bf16 %v2473, %v2473
      %v2482 = vpack.c.bf16 %v2474, %v2474
      %v2483 = vpack.c.bf16 %v2475, %v2475
      %vm2484 = vcmask 60416
      %2485 = vst.msk [vmem:[%s378] sm:$0xf] %vm2484, %v2476
      %2486 = vst.msk [vmem:[%s378 + $0x4] sm:$0xf] %vm2484, %v2477
      %2487 = vst.msk [vmem:[%s378 + $0x8] sm:$0xf] %vm2484, %v2478
      %2488 = vst.msk [vmem:[%s378 + $0xc] sm:$0xf] %vm2484, %v2479
      %2489 = vst.msk [vmem:[%s378 + $0x10] sm:$0xf] %vm2484, %v2480
      %2490 = vst.msk [vmem:[%s378 + $0x14] sm:$0xf] %vm2484, %v2481
      %2491 = vst.msk [vmem:[%s378 + $0x18] sm:$0xf] %vm2484, %v2482
      %2492 = vst.msk [vmem:[%s378 + $0x1c] sm:$0xf] %vm2484, %v2483
      %v2493 = vsel %vm1043, %v2468, 0.0
      %v2494 = vsel %vm1043, %v2469, 0.0
      %v2495 = vadd.f32 %v2493, %v2494
      %v2496 = vsel %vm1043, %v2470, 0.0
      %v2497 = vadd.f32 %v2495, %v2496
      %v2498 = vsel %vm1043, %v2471, 0.0
      %v2499 = vadd.f32 %v2497, %v2498
      %v2500 = vsel %vm1043, %v2472, 0.0
      %v2501 = vadd.f32 %v2499, %v2500
      %v2502 = vsel %vm1043, %v2473, 0.0
      %v2503 = vadd.f32 %v2501, %v2502
      %v2504 = vsel %vm1043, %v2474, 0.0
      %v2505 = vadd.f32 %v2503, %v2504
      %v2506 = vsel %vm1043, %v2475, 0.0
      %v2507 = vadd.f32 %v2505, %v2506
      %v2508 = vrot.slane %v2507, 4
      %v2509 = vadd.f32 %v2507, %v2508
      %v2510 = vrot.slane %v2509, 2
      %v2511 = vadd.f32 %v2509, %v2510
      %v2512 = vrot.slane %v2511, 1
      %v2513 = vadd.f32 %v2511, %v2512
      %vm2514 = vcmask 57344
      %2515 = vst.msk [vmem:[%s385] sm:$0x1] %vm2514, %v2513
      %v2516 = vmul.f32 %v2468, %v2468
      %v2517 = vmul.f32 %v2469, %v2469
      %v2518 = vmul.f32 %v2470, %v2470
      %v2519 = vmul.f32 %v2471, %v2471
      %v2520 = vmul.f32 %v2472, %v2472
      %v2521 = vmul.f32 %v2473, %v2473
      %v2522 = vmul.f32 %v2474, %v2474
      %v2523 = vmul.f32 %v2475, %v2475
      %v2524 = vsel %vm1043, %v2516, 0.0
      %v2525 = vsel %vm1043, %v2517, 0.0
      %v2526 = vadd.f32 %v2524, %v2525
      %v2527 = vsel %vm1043, %v2518, 0.0
      %v2528 = vadd.f32 %v2526, %v2527
      %v2529 = vsel %vm1043, %v2519, 0.0
      %v2530 = vadd.f32 %v2528, %v2529
      %v2531 = vsel %vm1043, %v2520, 0.0
      %v2532 = vadd.f32 %v2530, %v2531
      %v2533 = vsel %vm1043, %v2521, 0.0
      %v2534 = vadd.f32 %v2532, %v2533
      %v2535 = vsel %vm1043, %v2522, 0.0
      %v2536 = vadd.f32 %v2534, %v2535
      %v2537 = vsel %vm1043, %v2523, 0.0
      %v2538 = vadd.f32 %v2536, %v2537
      %v2539 = vrot.slane %v2538, 4
      %v2540 = vadd.f32 %v2538, %v2539
      %v2541 = vrot.slane %v2540, 2
      %v2542 = vadd.f32 %v2540, %v2541
      %v2543 = vrot.slane %v2542, 1
      %v2544 = vadd.f32 %v2542, %v2543
      %2545 = vst.msk [vmem:[%s392] sm:$0x1] %vm2514, %v2544
      %p2546 = scmp.lt.s32.totalorder %s23, 1
      %s2547 = scalar_select %p2546, %s23, 1
      %p2548 = scmp.lt.s32.totalorder %s24, 7
      %s2549 = scalar_select %p2548, %s24, 7
      %s2550 = smul.addr %s2549, 8
      %s2551 = smul.addr %s2547, 64
      %s2552 = sadd.s32 %s2550, %s2551
      %s2553 = smul.addr %s2552, 4
      %s2554 = scalar_lea.vmem %s5, %s2553
      %p2555 = scmp.lt.s32.totalorder %s23, 1
      %s2556 = scalar_select %p2555, %s23, 1
      %p2557 = scmp.lt.s32.totalorder %s24, 7
      %s2558 = scalar_select %p2557, %s24, 7
      %s2559 = smul.addr %s2556, 8
      %s2560 = sadd.s32 %s2558, %s2559
      %s2561 = scalar_lea.vmem %s6, %s2560
      %p2562 = scmp.lt.s32.totalorder %s23, 1
      %s2563 = scalar_select %p2562, %s23, 1
      %p2564 = scmp.lt.s32.totalorder %s24, 7
      %s2565 = scalar_select %p2564, %s24, 7
      %s2566 = smul.addr %s2563, 8
      %s2567 = sadd.s32 %s2565, %s2566
      %s2568 = scalar_lea.vmem %s7, %s2567
      // Predicated region
      $region57: #{double_conv_forward.3} parent=39 // pred_check
        %p2569 = pneg %p174
      $region58: #{double_conv_forward.3} parent=39 // pred_check_branch
        %2571 = sbr.rel (%p2569) target = $region60
      $region59: #{double_conv_forward.3} parent=39 // pred_region
        _
      $region60: #{double_conv_forward.3} parent=39 // pred_fallthru
        _
      // Predicated region
      $region61: #{double_conv_forward.3} parent=39 // pred_check
        %p2572 = pneg %p202
      $region62: #{double_conv_forward.3} parent=39 // pred_check_branch
        %2574 = sbr.rel (%p2572) target = $region64
      $region63: #{double_conv_forward.3} parent=39 // pred_region
        _
      $region64: #{double_conv_forward.3} parent=39 // pred_fallthru
        _
      // Predicated region
      $region65: #{double_conv_forward.3} parent=39 // pred_check
        %p2575 = pneg %p230
      $region66: #{double_conv_forward.3} parent=39 // pred_check_branch
        %2577 = sbr.rel (%p2575) target = $region68
      $region67: #{double_conv_forward.3} parent=39 // pred_region
        _
      $region68: #{double_conv_forward.3} parent=39 // pred_fallthru
        _
    $region40: #{double_conv_forward.3} parent=5 // pred_fallthru
      _
    %p2578 = scmp.le.s32.totalorder 2, %s14
    // Predicated region
    $region69: #{double_conv_forward.3} parent=5 // pred_check
      %p2579 = pneg %p2578
    $region70: #{double_conv_forward.3} parent=5 // pred_check_branch
      %2581 = sbr.rel (%p2579) target = $region72
    $region71: #{double_conv_forward.3} parent=5 // pred_region
      %s2582 = ssub.s32 %s14, 2
      // Predicated region
      $region73: #{double_conv_forward.3} parent=71 // pred_check
        %p2583 = pneg %p180
      $region74: #{double_conv_forward.3} parent=71 // pred_check_branch
        %2585 = sbr.rel (%p2583) target = $region76
      $region75: #{double_conv_forward.3} parent=71 // pred_region
        %p2586 = scmp.lt.s32.totalorder %s25, 1
        %s2587 = scalar_select %p2586, %s25, 1
        %p2588 = scmp.lt.s32.totalorder %s26, 7
        %s2589 = scalar_select %p2588, %s26, 7
        %s2590 = smul.addr %s2589, 8
        %s2591 = smul.addr %s2587, 64
        %s2592 = sadd.s32 %s2590, %s2591
        %s2593 = smul.addr %s2592, 4
        %s2594 = scalar_lea.vmem %s5, %s2593
      $region76: #{double_conv_forward.3} parent=71 // pred_fallthru
        _
      // Predicated region
      $region77: #{double_conv_forward.3} parent=71 // pred_check
        %p2595 = pneg %p208
      $region78: #{double_conv_forward.3} parent=71 // pred_check_branch
        %2597 = sbr.rel (%p2595) target = $region80
      $region79: #{double_conv_forward.3} parent=71 // pred_region
        %p2598 = scmp.lt.s32.totalorder %s25, 1
        %s2599 = scalar_select %p2598, %s25, 1
        %p2600 = scmp.lt.s32.totalorder %s26, 7
        %s2601 = scalar_select %p2600, %s26, 7
        %s2602 = smul.addr %s2599, 8
        %s2603 = sadd.s32 %s2601, %s2602
        %s2604 = scalar_lea.vmem %s6, %s2603
      $region80: #{double_conv_forward.3} parent=71 // pred_fallthru
        _
      // Predicated region
      $region81: #{double_conv_forward.3} parent=71 // pred_check
        %p2605 = pneg %p236
      $region82: #{double_conv_forward.3} parent=71 // pred_check_branch
        %2607 = sbr.rel (%p2605) target = $region84
      $region83: #{double_conv_forward.3} parent=71 // pred_region
        %p2608 = scmp.lt.s32.totalorder %s25, 1
        %s2609 = scalar_select %p2608, %s25, 1
        %p2610 = scmp.lt.s32.totalorder %s26, 7
        %s2611 = scalar_select %p2610, %s26, 7
        %s2612 = smul.addr %s2609, 8
        %s2613 = sadd.s32 %s2611, %s2612
        %s2614 = scalar_lea.vmem %s7, %s2613
      $region84: #{double_conv_forward.3} parent=71 // pred_fallthru
        _
    $region72: #{double_conv_forward.3} parent=5 // pred_fallthru
      _
  $region6: #{double_conv_forward.3} parent=0 // loop_footer
    %s18 = sadd.s32 1, %s14
  $region7: #{double_conv_forward.3} parent=0 // loop_footer_branch
    %13 = sbr.rel target = $region3
  $region8: #{double_conv_forward.3} parent=0 // loop_exit
    _

// kernel: double_conv_forward.5
$region0: #{double_conv_forward.5}
  #allocation0 [shape = 'u32[]', space=smem, size = 0x4, offset = 0x4, fixed_abs, tag = 'smem constant byte address 0x4 - core index']
  #allocation1 [shape = 'u32[144,128]{1,0:T(1,128)}', space=vmem, size = 0x12000, scoped, tag = 'internal scratch']
  %s0 = inlined_call_operand.vmem [shape: f32[16,512], index: 0, kind: input, shape index: {}]
  %s1 = inlined_call_operand.vmem [shape: f32[1,512], index: 1, kind: input, shape index: {}]
  %s2 = inlined_call_operand.vmem [shape: f32[1,512], index: 2, kind: input, shape index: {}]
  %s3 = inlined_call_operand.vmem [shape: f32[16,512], index: 3, kind: output, shape index: {}]
  %s4 = sld [smem:[#allocation0]]
  $region22: #{double_conv_forward.5} parent=0
    _
  %s6 = ssub.s32 1, %s4
  %s7 = scalar_select 0, %s6, %s4
  // Predicated region
  $region2: #{double_conv_forward.5} parent=0 // pred_check
    _
  $region3: #{double_conv_forward.5} parent=0 // pred_check_branch
    %9 = sbr.rel (0) target = $region5
  $region4: #{double_conv_forward.5} parent=0 // pred_region
    _
  $region5: #{double_conv_forward.5} parent=0 // pred_fallthru
    _
  // Predicated region
  $region6: #{double_conv_forward.5} parent=0 // pred_check
    _
  $region7: #{double_conv_forward.5} parent=0 // pred_check_branch
    %11 = sbr.rel (0) target = $region9
  $region8: #{double_conv_forward.5} parent=0 // pred_region
    _
  $region9: #{double_conv_forward.5} parent=0 // pred_fallthru
    _
  // Predicated region
  $region10: #{double_conv_forward.5} parent=0 // pred_check
    _
  $region11: #{double_conv_forward.5} parent=0 // pred_check_branch
    %13 = sbr.rel (0) target = $region13
  $region12: #{double_conv_forward.5} parent=0 // pred_region
    _
  $region13: #{double_conv_forward.5} parent=0 // pred_fallthru
    _
  %v14 = vld [vmem:[%s0] sm:$0xff]
  %v15 = vld [vmem:[%s0 + $0x8] sm:$0xff]
  %v16 = vld [vmem:[%s0 + $0x10] sm:$0xff]
  %v17 = vld [vmem:[%s0 + $0x18] sm:$0xff]
  %v18 = vld [vmem:[%s0 + $0x20] sm:$0xff]
  %v19 = vld [vmem:[%s0 + $0x28] sm:$0xff]
  %v20 = vld [vmem:[%s0 + $0x30] sm:$0xff]
  %v21 = vld [vmem:[%s0 + $0x38] sm:$0xff]
  %v22 = vld [vmem:[%s1] sm:$0xf]
  %v24 = vlaneseq
  %v25 = vshrl.u32 %v24, 7
  %v26 = vsub.s32 0, %v25
  %v27 = vrot.slane %v22, %v26
  %v28 = vlaneseq
  %v29 = vshrl.u32 %v28, 7
  %v30 = vsub.s32 1, %v29
  %v31 = vrot.slane %v22, %v30
  %v32 = vlaneseq
  %v33 = vshrl.u32 %v32, 7
  %v34 = vsub.s32 2, %v33
  %v35 = vrot.slane %v22, %v34
  %v36 = vlaneseq
  %v37 = vshrl.u32 %v36, 7
  %v38 = vsub.s32 3, %v37
  %v39 = vrot.slane %v22, %v38
  %v44 = vmul.f32 %v14, %v27
  %v45 = vmul.f32 %v15, %v31
  %v46 = vmul.f32 %v16, %v35
  %v47 = vmul.f32 %v17, %v39
  %v48 = vmul.f32 %v18, %v27
  %v49 = vmul.f32 %v19, %v31
  %v50 = vmul.f32 %v20, %v35
  %v51 = vmul.f32 %v21, %v39
  %v52 = vld [vmem:[%s2] sm:$0xf]
  %v54 = vlaneseq
  %v55 = vshrl.u32 %v54, 7
  %v56 = vsub.s32 0, %v55
  %v57 = vrot.slane %v52, %v56
  %v58 = vlaneseq
  %v59 = vshrl.u32 %v58, 7
  %v60 = vsub.s32 1, %v59
  %v61 = vrot.slane %v52, %v60
  %v62 = vlaneseq
  %v63 = vshrl.u32 %v62, 7
  %v64 = vsub.s32 2, %v63
  %v65 = vrot.slane %v52, %v64
  %v66 = vlaneseq
  %v67 = vshrl.u32 %v66, 7
  %v68 = vsub.s32 3, %v67
  %v69 = vrot.slane %v52, %v68
  %v74 = vadd.f32 %v44, %v57
  %v75 = vadd.f32 %v45, %v61
  %v76 = vadd.f32 %v46, %v65
  %v77 = vadd.f32 %v47, %v69
  %v78 = vadd.f32 %v48, %v57
  %v79 = vadd.f32 %v49, %v61
  %v80 = vadd.f32 %v50, %v65
  %v81 = vadd.f32 %v51, %v69
  %v82 = vmax.f32 %v74, 0.0
  %v83 = vmax.f32 %v75, 0.0
  %v84 = vmax.f32 %v76, 0.0
  %v85 = vmax.f32 %v77, 0.0
  %v86 = vmax.f32 %v78, 0.0
  %v87 = vmax.f32 %v79, 0.0
  %v88 = vmax.f32 %v80, 0.0
  %v89 = vmax.f32 %v81, 0.0
  %90 = vst [vmem:[%s3] sm:$0xff] %v82
  %91 = vst [vmem:[%s3 + $0x8] sm:$0xff] %v83
  %92 = vst [vmem:[%s3 + $0x10] sm:$0xff] %v84
  %93 = vst [vmem:[%s3 + $0x18] sm:$0xff] %v85
  %94 = vst [vmem:[%s3 + $0x20] sm:$0xff] %v86
  %95 = vst [vmem:[%s3 + $0x28] sm:$0xff] %v87
  %96 = vst [vmem:[%s3 + $0x30] sm:$0xff] %v88
  %97 = vst [vmem:[%s3 + $0x38] sm:$0xff] %v89
  // Predicated region
  $region14: #{double_conv_forward.5} parent=0 // pred_check
    _
  $region15: #{double_conv_forward.5} parent=0 // pred_check_branch
    %99 = sbr.rel (0) target = $region17
  $region16: #{double_conv_forward.5} parent=0 // pred_region
    _
  $region17: #{double_conv_forward.5} parent=0 // pred_fallthru
    _
  // Predicated region
  $region18: #{double_conv_forward.5} parent=0 // pred_check
    _
  $region19: #{double_conv_forward.5} parent=0 // pred_check_branch
    %101 = sbr.rel (0) target = $region21
  $region20: #{double_conv_forward.5} parent=0 // pred_region
    _
  $region21: #{double_conv_forward.5} parent=0 // pred_fallthru
    _

// kernel: double_conv_forward.4
$region0: #{double_conv_forward.4}
  #allocation0 [shape = 'u32[]', space=smem, size = 0x4, offset = 0x4, fixed_abs, tag = 'smem constant byte address 0x4 - core index']
  #allocation1 [shape = 'u32[144,128]{1,0:T(1,128)}', space=vmem, size = 0x12000, scoped, tag = 'internal scratch']
  #allocation2 [shape = 'bf16[3,10,10,8]{3,2,1,0:T(8,128)(2,1)}', space=vmem, size = 0x1e000, scoped, tag = 'scratch operand']
  #allocation3 [shape = 'f32[64,8]{1,0:T(8,128)}', space=vmem, size = 0x8000, scoped, tag = 'scratch operand']
  %s0 = inlined_call_operand.vmem [shape: bf16[2,8,8,8,8], index: 0, kind: input, shape index: {}, may-alias: {0,1}]
  %s1 = inlined_call_operand.vmem [shape: bf16[2,8,8,8,8], index: 1, kind: input, shape index: {}, may-alias: {0,1}]
  %s2 = inlined_call_operand.vmem [shape: bf16[3,72,8], index: 2, kind: input, shape index: {}]
  %s3 = inlined_call_operand.vmem [shape: f32[1,1,8], index: 3, kind: input, shape index: {}]
  %s4 = inlined_call_operand.vmem [shape: f32[1,1,8], index: 4, kind: input, shape index: {}]
  %s5 = inlined_call_operand.vmem [shape: f32[2,8,8,8,8], index: 5, kind: output, shape index: {0}]
  %s6 = inlined_call_operand.vmem [shape: f32[2,8,1,8], index: 6, kind: output, shape index: {1}]
  %s7 = inlined_call_operand.vmem [shape: f32[2,8,1,8], index: 7, kind: output, shape index: {2}]
  %8 = xla_tuple %s5, %s6, %s7
  %s9 = sld [smem:[#allocation0]]
  $region85: #{double_conv_forward.4} parent=0
    _
  %s11 = ssub.s32 1, %s9
  %s12 = scalar_select 0, %s11, %s9
  loop: start=0, step=1, limit=18
  $region2: #{double_conv_forward.4} parent=0 // loop_pre_header
    _
  $region3: #{double_conv_forward.4} parent=0 // loop_header
    %s14 = sphi 0, %s18
    %p15 = scmp.ge.s32.totalorder %s14, 18
    %s21 = sphi 0, %s33
    %s22 = sphi 0, %s29
    %s23 = sphi 0, %s21
    %s24 = sphi 0, %s22
    %s25 = sphi 0, %s23
    %s26 = sphi 0, %s24
    %s44 = sphi 0, %s46
    %s47 = sphi 0, %s44
    %s48 = sphi 0, %s47
    %s64 = sphi 0, %s48
    %s70 = sphi 0, %s72
    %s73 = sphi 0, %s70
    %s74 = sphi 0, %s73
    %s90 = sphi 0, %s74
    %s94 = sphi 0, %s94
    %s96 = sphi 0, %s94
    %s97 = sphi 0, %s96
    %s111 = sphi 0, %s97
    %s115 = sphi 0, %s115
    %s117 = sphi 0, %s115
    %s118 = sphi 0, %s117
    %s132 = sphi 0, %s118
    %s136 = sphi 0, %s136
    %s138 = sphi 0, %s136
    %s139 = sphi 0, %s138
    %s153 = sphi 0, %s139
    %s161 = sphi 0, %s163
    %s164 = sphi 0, %s161
    %s165 = sphi 0, %s164
    %s181 = sphi 0, %s165
    %s189 = sphi 0, %s191
    %s192 = sphi 0, %s189
    %s193 = sphi 0, %s192
    %s209 = sphi 0, %s193
    %s217 = sphi 0, %s219
    %s220 = sphi 0, %s217
    %s221 = sphi 0, %s220
    %s237 = sphi 0, %s221
  $region4: #{double_conv_forward.4} parent=0 // loop_header_branch
    %17 = sbr.rel (%p15) target = $region8
  $region5: #{double_conv_forward.4} parent=0 // loop_body
    %s19 = ssub.s32 %s14, 1
    %s20 = ssub.s32 %s14, 2
    %s27 = sadd.s32 1, %s22
    %p28 = scmp.ge.s32.totalorder %s27, 8
    %s29 = scalar_select %p28, 0, %s27
    %s30 = sadd.s32 1, %s21
    %s31 = scalar_select %p28, %s30, %s21
    %p32 = scmp.ge.s32.totalorder %s31, 2
    %s33 = scalar_select %p32, 0, %s31
    %s34 = sadd.s32 %s22, 1
    %p35 = scmp.lt.s32.totalorder %s34, 7
    %s36 = scalar_select %p35, %s34, 7
    %s37 = sadd.s32 %s29, 1
    %p38 = scmp.lt.s32.totalorder %s37, 7
    %s39 = scalar_select %p38, %s37, 7
    %s40 = ssub.s32 %s21, %s33
    %s41 = ssub.s32 %s36, %s39
    %s42 = sor.u32 %s40, %s41
    %p43 = scmp.eq.s32.totalorder %s42, 0
    %s45 = sadd.s32 %s44, 1
    %s46 = scalar_select %p43, %s44, %s45
    %p49 = pneg %p43
    %p50 = scmp.eq.s32.totalorder %s14, 15
    %p51 = por %p49, %p50
    %p52 = scmp.ne.s32.totalorder %s44, %s47
    %p53 = scmp.eq.s32.totalorder %s14, 0
    %p54 = por %p52, %p53
    %p55 = scmp.ne.s32.totalorder %s44, %s47
    %p56 = scmp.eq.s32.totalorder %s19, 15
    %p57 = por %p55, %p56
    %p58 = scmp.ne.s32.totalorder %s47, %s48
    %p59 = scmp.eq.s32.totalorder %s19, 0
    %p60 = por %p58, %p59
    %p61 = scmp.ne.s32.totalorder %s47, %s48
    %p62 = scmp.eq.s32.totalorder %s20, 15
    %p63 = por %p61, %p62
    %p65 = scmp.ne.s32.totalorder %s48, %s64
    %p66 = scmp.eq.s32.totalorder %s20, 0
    %p67 = por %p65, %p66
    %s68 = ssub.s32 %s21, %s33
    %p69 = scmp.eq.s32.totalorder %s68, 0
    %s71 = sadd.s32 %s70, 1
    %s72 = scalar_select %p69, %s70, %s71
    %p75 = pneg %p69
    %p76 = scmp.eq.s32.totalorder %s14, 15
    %p77 = por %p75, %p76
    %p78 = scmp.ne.s32.totalorder %s70, %s73
    %p79 = scmp.eq.s32.totalorder %s14, 0
    %p80 = por %p78, %p79
    %p81 = scmp.ne.s32.totalorder %s70, %s73
    %p82 = scmp.eq.s32.totalorder %s19, 15
    %p83 = por %p81, %p82
    %p84 = scmp.ne.s32.totalorder %s73, %s74
    %p85 = scmp.eq.s32.totalorder %s19, 0
    %p86 = por %p84, %p85
    %p87 = scmp.ne.s32.totalorder %s73, %s74
    %p88 = scmp.eq.s32.totalorder %s20, 15
    %p89 = por %p87, %p88
    %p91 = scmp.ne.s32.totalorder %s74, %s90
    %p92 = scmp.eq.s32.totalorder %s20, 0
    %p93 = por %p91, %p92
    %s95 = sadd.s32 %s94, 1
    %p98 = scmp.eq.s32.totalorder %s14, 15
    %p99 = scmp.ne.s32.totalorder %s94, %s96
    %p100 = scmp.eq.s32.totalorder %s14, 0
    %p101 = por %p99, %p100
    %p102 = scmp.ne.s32.totalorder %s94, %s96
    %p103 = scmp.eq.s32.totalorder %s19, 15
    %p104 = por %p102, %p103
    %p105 = scmp.ne.s32.totalorder %s96, %s97
    %p106 = scmp.eq.s32.totalorder %s19, 0
    %p107 = por %p105, %p106
    %p108 = scmp.ne.s32.totalorder %s96, %s97
    %p109 = scmp.eq.s32.totalorder %s20, 15
    %p110 = por %p108, %p109
    %p112 = scmp.ne.s32.totalorder %s97, %s111
    %p113 = scmp.eq.s32.totalorder %s20, 0
    %p114 = por %p112, %p113
    %s116 = sadd.s32 %s115, 1
    %p119 = scmp.eq.s32.totalorder %s14, 15
    %p120 = scmp.ne.s32.totalorder %s115, %s117
    %p121 = scmp.eq.s32.totalorder %s14, 0
    %p122 = por %p120, %p121
    %p123 = scmp.ne.s32.totalorder %s115, %s117
    %p124 = scmp.eq.s32.totalorder %s19, 15
    %p125 = por %p123, %p124
    %p126 = scmp.ne.s32.totalorder %s117, %s118
    %p127 = scmp.eq.s32.totalorder %s19, 0
    %p128 = por %p126, %p127
    %p129 = scmp.ne.s32.totalorder %s117, %s118
    %p130 = scmp.eq.s32.totalorder %s20, 15
    %p131 = por %p129, %p130
    %p133 = scmp.ne.s32.totalorder %s118, %s132
    %p134 = scmp.eq.s32.totalorder %s20, 0
    %p135 = por %p133, %p134
    %s137 = sadd.s32 %s136, 1
    %p140 = scmp.eq.s32.totalorder %s14, 15
    %p141 = scmp.ne.s32.totalorder %s136, %s138
    %p142 = scmp.eq.s32.totalorder %s14, 0
    %p143 = por %p141, %p142
    %p144 = scmp.ne.s32.totalorder %s136, %s138
    %p145 = scmp.eq.s32.totalorder %s19, 15
    %p146 = por %p144, %p145
    %p147 = scmp.ne.s32.totalorder %s138, %s139
    %p148 = scmp.eq.s32.totalorder %s19, 0
    %p149 = por %p147, %p148
    %p150 = scmp.ne.s32.totalorder %s138, %s139
    %p151 = scmp.eq.s32.totalorder %s20, 15
    %p152 = por %p150, %p151
    %p154 = scmp.ne.s32.totalorder %s139, %s153
    %p155 = scmp.eq.s32.totalorder %s20, 0
    %p156 = por %p154, %p155
    %s157 = ssub.s32 %s21, %s33
    %s158 = ssub.s32 %s22, %s29
    %s159 = sor.u32 %s157, %s158
    %p160 = scmp.eq.s32.totalorder %s159, 0
    %s162 = sadd.s32 %s161, 1
    %s163 = scalar_select %p160, %s161, %s162
    %p166 = pneg %p160
    %p167 = scmp.eq.s32.totalorder %s14, 15
    %p168 = por %p166, %p167
    %p169 = scmp.ne.s32.totalorder %s161, %s164
    %p170 = scmp.eq.s32.totalorder %s14, 0
    %p171 = por %p169, %p170
    %p172 = scmp.ne.s32.totalorder %s161, %s164
    %p173 = scmp.eq.s32.totalorder %s19, 15
    %p174 = por %p172, %p173
    %p175 = scmp.ne.s32.totalorder %s164, %s165
    %p176 = scmp.eq.s32.totalorder %s19, 0
    %p177 = por %p175, %p176
    %p178 = scmp.ne.s32.totalorder %s164, %s165
    %p179 = scmp.eq.s32.totalorder %s20, 15
    %p180 = por %p178, %p179
    %p182 = scmp.ne.s32.totalorder %s165, %s181
    %p183 = scmp.eq.s32.totalorder %s20, 0
    %p184 = por %p182, %p183
    %s185 = ssub.s32 %s21, %s33
    %s186 = ssub.s32 %s22, %s29
    %s187 = sor.u32 %s185, %s186
    %p188 = scmp.eq.s32.totalorder %s187, 0
    %s190 = sadd.s32 %s189, 1
    %s191 = scalar_select %p188, %s189, %s190
    %p194 = pneg %p188
    %p195 = scmp.eq.s32.totalorder %s14, 15
    %p196 = por %p194, %p195
    %p197 = scmp.ne.s32.totalorder %s189, %s192
    %p198 = scmp.eq.s32.totalorder %s14, 0
    %p199 = por %p197, %p198
    %p200 = scmp.ne.s32.totalorder %s189, %s192
    %p201 = scmp.eq.s32.totalorder %s19, 15
    %p202 = por %p200, %p201
    %p203 = scmp.ne.s32.totalorder %s192, %s193
    %p204 = scmp.eq.s32.totalorder %s19, 0
    %p205 = por %p203, %p204
    %p206 = scmp.ne.s32.totalorder %s192, %s193
    %p207 = scmp.eq.s32.totalorder %s20, 15
    %p208 = por %p206, %p207
    %p210 = scmp.ne.s32.totalorder %s193, %s209
    %p211 = scmp.eq.s32.totalorder %s20, 0
    %p212 = por %p210, %p211
    %s213 = ssub.s32 %s21, %s33
    %s214 = ssub.s32 %s22, %s29
    %s215 = sor.u32 %s213, %s214
    %p216 = scmp.eq.s32.totalorder %s215, 0
    %s218 = sadd.s32 %s217, 1
    %s219 = scalar_select %p216, %s217, %s218
    %p222 = pneg %p216
    %p223 = scmp.eq.s32.totalorder %s14, 15
    %p224 = por %p222, %p223
    %p225 = scmp.ne.s32.totalorder %s217, %s220
    %p226 = scmp.eq.s32.totalorder %s14, 0
    %p227 = por %p225, %p226
    %p228 = scmp.ne.s32.totalorder %s217, %s220
    %p229 = scmp.eq.s32.totalorder %s19, 15
    %p230 = por %p228, %p229
    %p231 = scmp.ne.s32.totalorder %s220, %s221
    %p232 = scmp.eq.s32.totalorder %s19, 0
    %p233 = por %p231, %p232
    %p234 = scmp.ne.s32.totalorder %s220, %s221
    %p235 = scmp.eq.s32.totalorder %s20, 15
    %p236 = por %p234, %p235
    %p238 = scmp.ne.s32.totalorder %s221, %s237
    %p239 = scmp.eq.s32.totalorder %s20, 0
    %p240 = por %p238, %p239
    %p241 = scmp.le.s32.totalorder 1, %s14
    %p242 = scmp.lt.s32.totalorder %s14, 17
    %p243 = pnand %p241, %p242
    %p244 = pneg %p243
    // Predicated region
    $region9: #{double_conv_forward.4} parent=5 // pred_check
      _
    $region10: #{double_conv_forward.4} parent=5 // pred_check_branch
      %246 = sbr.rel (%p243) target = $region12
    $region11: #{double_conv_forward.4} parent=5 // pred_region
      %s247 = ssub.s32 %s14, 1
      // Predicated region
      $region13: #{double_conv_forward.4} parent=11 // pred_check
        %p248 = pneg %p107
      $region14: #{double_conv_forward.4} parent=11 // pred_check_branch
        %250 = sbr.rel (%p248) target = $region16
      $region15: #{double_conv_forward.4} parent=11 // pred_region
        _
      $region16: #{double_conv_forward.4} parent=11 // pred_fallthru
        _
      // Predicated region
      $region17: #{double_conv_forward.4} parent=11 // pred_check
        %p251 = pneg %p128
      $region18: #{double_conv_forward.4} parent=11 // pred_check_branch
        %253 = sbr.rel (%p251) target = $region20
      $region19: #{double_conv_forward.4} parent=11 // pred_region
        _
      $region20: #{double_conv_forward.4} parent=11 // pred_fallthru
        _
      // Predicated region
      $region21: #{double_conv_forward.4} parent=11 // pred_check
        %p254 = pneg %p149
      $region22: #{double_conv_forward.4} parent=11 // pred_check_branch
        %256 = sbr.rel (%p254) target = $region24
      $region23: #{double_conv_forward.4} parent=11 // pred_region
        _
      $region24: #{double_conv_forward.4} parent=11 // pred_fallthru
        _
    $region12: #{double_conv_forward.4} parent=5 // pred_fallthru
      _
    %p257 = scmp.lt.s32.totalorder %s14, 16
    // Predicated region
    $region25: #{double_conv_forward.4} parent=5 // pred_check
      %p258 = pneg %p257
    $region26: #{double_conv_forward.4} parent=5 // pred_check_branch
      %260 = sbr.rel (%p258) target = $region28
    $region27: #{double_conv_forward.4} parent=5 // pred_region
      // Predicated region
      $region29: #{double_conv_forward.4} parent=27 // pred_check
        %p261 = pneg %p54
      $region30: #{double_conv_forward.4} parent=27 // pred_check_branch
        %263 = sbr.rel (%p261) target = $region32
      $region31: #{double_conv_forward.4} parent=27 // pred_region
        %s264 = sadd.s32 %s22, 1
        %p265 = scmp.lt.s32.totalorder %s264, 7
        %s266 = scalar_select %p265, %s264, 7
        %p267 = scmp.lt.s32.totalorder %s21, 1
        %s268 = scalar_select %p267, %s21, 1
        %p269 = scmp.lt.s32.totalorder %s266, 7
        %s270 = scalar_select %p269, %s266, 7
        %s271 = smul.addr %s270, 8
        %s272 = smul.addr %s268, 64
        %s273 = sadd.s32 %s271, %s272
        %s274 = smul.addr %s273, 4
        %s275 = scalar_lea.vmem %s0, %s274
        %s276 = sadd.s32 %s22, 1
        %p277 = scmp.lt.s32.totalorder %s276, 7
        %s278 = scalar_select %p277, %s276, 7
      $region32: #{double_conv_forward.4} parent=27 // pred_fallthru
        _
      // Predicated region
      $region33: #{double_conv_forward.4} parent=27 // pred_check
        %p279 = pneg %p80
      $region34: #{double_conv_forward.4} parent=27 // pred_check_branch
        %281 = sbr.rel (%p279) target = $region36
      $region35: #{double_conv_forward.4} parent=27 // pred_region
        %p282 = scmp.lt.s32.totalorder %s21, 1
        %s283 = scalar_select %p282, %s21, 1
        %s284 = smul.addr %s283, 64
        %s285 = smul.addr %s284, 4
        %s286 = scalar_lea.vmem %s1, %s285
      $region36: #{double_conv_forward.4} parent=27 // pred_fallthru
        _
    $region28: #{double_conv_forward.4} parent=5 // pred_fallthru
      _
    %p287 = scmp.le.s32.totalorder 1, %s14
    %p288 = scmp.lt.s32.totalorder %s14, 17
    %p289 = pnand %p287, %p288
    %p290 = pneg %p289
    // Predicated region
    $region37: #{double_conv_forward.4} parent=5 // pred_check
      _
    $region38: #{double_conv_forward.4} parent=5 // pred_check_branch
      %292 = sbr.rel (%p289) target = $region40
    $region39: #{double_conv_forward.4} parent=5 // pred_region
      %s293 = ssub.s32 %s14, 1
      %s294 = sadd.s32 %s24, 1
      %p295 = scmp.lt.s32.totalorder %s294, 7
      %s296 = scalar_select %p295, %s294, 7
      %p297 = scmp.lt.s32.totalorder %s23, 1
      %s298 = scalar_select %p297, %s23, 1
      %p299 = scmp.lt.s32.totalorder %s296, 7
      %s300 = scalar_select %p299, %s296, 7
      %s301 = smul.addr %s300, 8
      %s302 = smul.addr %s298, 64
      %s303 = sadd.s32 %s301, %s302
      %s304 = smul.addr %s303, 4
      %s305 = scalar_lea.vmem %s0, %s304
      %p306 = pneg %p60
      %p307 = pneg %p57
      %p308 = scmp.lt.s32.totalorder %s23, 1
      %s309 = scalar_select %p308, %s23, 1
      %s310 = smul.addr %s309, 64
      %s311 = smul.addr %s310, 4
      %s312 = scalar_lea.vmem %s1, %s311
      %p313 = pneg %p86
      %p314 = pneg %p83
      %p315 = pneg %p107
      %p316 = pneg %p104
      %p317 = pneg %p128
      %p318 = pneg %p125
      %p319 = pneg %p149
      %p320 = pneg %p146
      %p321 = pneg %p177
      %p322 = pneg %p174
      %p323 = scmp.lt.s32.totalorder %s23, 1
      %s324 = scalar_select %p323, %s23, 1
      %p325 = scmp.lt.s32.totalorder %s24, 7
      %s326 = scalar_select %p325, %s24, 7
      %s327 = smul.addr %s326, 8
      %s328 = smul.addr %s324, 64
      %s329 = sadd.s32 %s327, %s328
      %s330 = smul.addr %s329, 8
      %s331 = scalar_lea.vmem %s5, %s330
      %p332 = pneg %p205
      %p333 = pneg %p202
      %p334 = scmp.lt.s32.totalorder %s23, 1
      %s335 = scalar_select %p334, %s23, 1
      %p336 = scmp.lt.s32.totalorder %s24, 7
      %s337 = scalar_select %p336, %s24, 7
      %s338 = smul.addr %s335, 8
      %s339 = sadd.s32 %s337, %s338
      %s340 = scalar_lea.vmem %s6, %s339
      %p341 = pneg %p233
      %p342 = pneg %p230
      %p343 = scmp.lt.s32.totalorder %s23, 1
      %s344 = scalar_select %p343, %s23, 1
      %p345 = scmp.lt.s32.totalorder %s24, 7
      %s346 = scalar_select %p345, %s24, 7
      %s347 = smul.addr %s344, 8
      %s348 = sadd.s32 %s346, %s347
      %s349 = scalar_lea.vmem %s7, %s348
      %s350 = sadd.s32 %s24, 1
      %p351 = scmp.lt.s32.totalorder %s350, 7
      %s352 = scalar_select %p351, %s350, 7
      %p353 = scmp.lt.s32.totalorder %s23, 1
      %s354 = scalar_select %p353, %s23, 1
      %p355 = scmp.lt.s32.totalorder %s352, 7
      %s356 = scalar_select %p355, %s352, 7
      %s357 = smul.addr %s356, 8
      %s358 = smul.addr %s354, 64
      %s359 = sadd.s32 %s357, %s358
      %s360 = smul.addr %s359, 4
      %s361 = scalar_lea.vmem %s0, %s360
      %s362 = sadd.s32 %s24, 1
      %p363 = scmp.lt.s32.totalorder %s362, 7
      %s364 = scalar_select %p363, %s362, 7
      %p365 = scmp.lt.s32.totalorder %s23, 1
      %s366 = scalar_select %p365, %s23, 1
      %s367 = smul.addr %s366, 64
      %s368 = smul.addr %s367, 4
      %s369 = scalar_lea.vmem %s1, %s368
      %p370 = scmp.lt.s32.totalorder %s23, 1
      %s371 = scalar_select %p370, %s23, 1
      %p372 = scmp.lt.s32.totalorder %s24, 7
      %s373 = scalar_select %p372, %s24, 7
      %s374 = smul.addr %s373, 8
      %s375 = smul.addr %s371, 64
      %s376 = sadd.s32 %s374, %s375
      %s377 = smul.addr %s376, 8
      %s378 = scalar_lea.vmem %s5, %s377
      %p379 = scmp.lt.s32.totalorder %s23, 1
      %s380 = scalar_select %p379, %s23, 1
      %p381 = scmp.lt.s32.totalorder %s24, 7
      %s382 = scalar_select %p381, %s24, 7
      %s383 = smul.addr %s380, 8
      %s384 = sadd.s32 %s382, %s383
      %s385 = scalar_lea.vmem %s6, %s384
      %p386 = scmp.lt.s32.totalorder %s23, 1
      %s387 = scalar_select %p386, %s23, 1
      %p388 = scmp.lt.s32.totalorder %s24, 7
      %s389 = scalar_select %p388, %s24, 7
      %s390 = smul.addr %s387, 8
      %s391 = sadd.s32 %s389, %s390
      %s392 = scalar_lea.vmem %s7, %s391
      %p394 = scmp.eq.s32.totalorder %s24, 0
      // Predicated region
      $region41: #{double_conv_forward.4} parent=39 // pred_check
        %p395 = pneg %p394
      $region42: #{double_conv_forward.4} parent=39 // pred_check_branch
        %397 = sbr.rel (%p395) target = $region44
      $region43: #{double_conv_forward.4} parent=39 // pred_region
        %v398 = vld [vmem:[%s369] sm:$0xf]
        %v399 = vld [vmem:[%s369 + $0x4] sm:$0xf]
        %v400 = vld [vmem:[%s369 + $0x8] sm:$0xf]
        %v401 = vld [vmem:[%s369 + $0xc] sm:$0xf]
        %v402 = vld [vmem:[%s369 + $0x10] sm:$0xf]
        %v403 = vld [vmem:[%s369 + $0x14] sm:$0xf]
        %v404 = vld [vmem:[%s369 + $0x18] sm:$0xf]
        %v405 = vld [vmem:[%s369 + $0x1c] sm:$0xf]
        %v406 = vunpack.c.l.bf16 %v398
        %v407 = vunpack.c.l.bf16 %v399
        %v408 = vunpack.c.l.bf16 %v400
        %v409 = vunpack.c.l.bf16 %v401
        %v410 = vunpack.c.l.bf16 %v402
        %v411 = vunpack.c.l.bf16 %v403
        %v412 = vunpack.c.l.bf16 %v404
        %v413 = vunpack.c.l.bf16 %v405
        %v414 = vld [vmem:[%s3] sm:$0x1]
        %v416 = vlaneseq
        %v417 = vshrl.u32 %v416, 7
        %v418 = vsub.s32 0, %v417
        %v419 = vrot.slane %v414, %v418
        %v421 = vmul.f32 %v406, %v419
        %v422 = vmul.f32 %v407, %v419
        %v423 = vmul.f32 %v408, %v419
        %v424 = vmul.f32 %v409, %v419
        %v425 = vmul.f32 %v410, %v419
        %v426 = vmul.f32 %v411, %v419
        %v427 = vmul.f32 %v412, %v419
        %v428 = vmul.f32 %v413, %v419
        %v429 = vld [vmem:[%s4] sm:$0x1]
        %v431 = vlaneseq
        %v432 = vshrl.u32 %v431, 7
        %v433 = vsub.s32 0, %v432
        %v434 = vrot.slane %v429, %v433
        %v436 = vadd.f32 %v421, %v434
        %v437 = vadd.f32 %v422, %v434
        %v438 = vadd.f32 %v423, %v434
        %v439 = vadd.f32 %v424, %v434
        %v440 = vadd.f32 %v425, %v434
        %v441 = vadd.f32 %v426, %v434
        %v442 = vadd.f32 %v427, %v434
        %v443 = vadd.f32 %v428, %v434
        %v444 = vmax.f32 %v436, 0.0
        %v445 = vmax.f32 %v437, 0.0
        %v446 = vmax.f32 %v438, 0.0
        %v447 = vmax.f32 %v439, 0.0
        %v448 = vmax.f32 %v440, 0.0
        %v449 = vmax.f32 %v441, 0.0
        %v450 = vmax.f32 %v442, 0.0
        %v451 = vmax.f32 %v443, 0.0
        %v461 = vrot.slane 0.0, 7
        %v462 = vrot.slane %v444, 7
        %v463 = vrot.slane %v445, 7
        %v464 = vrot.slane %v446, 7
        %v465 = vrot.slane %v447, 7
        %v466 = vrot.slane %v448, 7
        %v467 = vrot.slane %v449, 7
        %v468 = vrot.slane %v450, 7
        %v469 = vrot.slane %v451, 7
        %vm479 = vcmask 1040384
        %v480 = vsel %vm479, 0.0, %v461
        %v481 = vsel %vm479, 0.0, %v462
        %v482 = vsel %vm479, 0.0, %v463
        %v483 = vsel %vm479, 0.0, %v464
        %v484 = vsel %vm479, 0.0, %v465
        %v485 = vsel %vm479, 0.0, %v466
        %v486 = vsel %vm479, 0.0, %v467
        %v487 = vsel %vm479, 0.0, %v468
        %v488 = vsel %vm479, 0.0, %v469
        %v489 = vsel %vm479, %v461, 0.0
        %v490 = vsel %vm479, %v462, 0.0
        %v491 = vsel %vm479, %v463, 0.0
        %v492 = vsel %vm479, %v464, 0.0
        %v493 = vsel %vm479, %v465, 0.0
        %v494 = vsel %vm479, %v466, 0.0
        %v495 = vsel %vm479, %v467, 0.0
        %v496 = vsel %vm479, %v468, 0.0
        %v497 = vsel %vm479, %v469, 0.0
        %v498 = vpack.c.bf16 %v489, %v480
        %v499 = vpack.c.bf16 %v490, %v481
        %v500 = vpack.c.bf16 %v491, %v482
        %v501 = vpack.c.bf16 %v492, %v483
        %v502 = vpack.c.bf16 %v493, %v484
        %v503 = vpack.c.bf16 %v494, %v485
        %v504 = vpack.c.bf16 %v495, %v486
        %v505 = vpack.c.bf16 %v496, %v487
        %v506 = vpack.c.bf16 %v497, %v488
        %v516 = vunpack.c.l.b16 %v498
        %v517 = vunpack.c.h.b16 %v498
        %v518 = vunpack.c.l.b16 %v499
        %v519 = vunpack.c.h.b16 %v499
        %v520 = vunpack.c.l.b16 %v500
        %v521 = vunpack.c.h.b16 %v500
        %v522 = vunpack.c.l.b16 %v501
        %v523 = vunpack.c.h.b16 %v501
        %v524 = vunpack.c.l.b16 %v502
        %v525 = vunpack.c.h.b16 %v502
        %v526 = vunpack.c.l.b16 %v503
        %v527 = vunpack.c.h.b16 %v503
        %v528 = vunpack.c.l.b16 %v504
        %v529 = vunpack.c.h.b16 %v504
        %v530 = vunpack.c.l.b16 %v505
        %v531 = vunpack.c.h.b16 %v505
        %v532 = vunpack.c.l.b16 %v506
        %v533 = vunpack.c.h.b16 %v506
        %v534 = vpack.c.b16 %v516, %v516
        %v535 = vpack.c.b16 %v517, %v517
        %v536 = vpack.c.b16 %v518, %v518
        %v537 = vpack.c.b16 %v519, %v519
        %v538 = vpack.c.b16 %v520, %v520
        %v539 = vpack.c.b16 %v521, %v521
        %v540 = vpack.c.b16 %v522, %v522
        %v541 = vpack.c.b16 %v523, %v523
        %v542 = vpack.c.b16 %v524, %v524
        %v543 = vpack.c.b16 %v525, %v525
        %v544 = vpack.c.b16 %v526, %v526
        %v545 = vpack.c.b16 %v527, %v527
        %v546 = vpack.c.b16 %v528, %v528
        %v547 = vpack.c.b16 %v529, %v529
        %v548 = vpack.c.b16 %v530, %v530
        %v549 = vpack.c.b16 %v531, %v531
        %v550 = vpack.c.b16 %v532, %v532
        %v551 = vpack.c.b16 %v533, %v533
        %vm570 = vcmask 60416
        %571 = vst.msk [vmem:[#allocation2] sm:$0xf] %vm570, %v534
        %vm572 = vcmask 57344
        %573 = vst.msk [vmem:[#allocation2 + $0x4] sm:$0x1] %vm572, %v535
        %574 = vst.msk [vmem:[#allocation2 + $0x8] sm:$0xf] %vm570, %v536
        %575 = vst.msk [vmem:[#allocation2 + $0xc] sm:$0x1] %vm572, %v537
        %576 = vst.msk [vmem:[#allocation2 + $0x10] sm:$0xf] %vm570, %v538
        %577 = vst.msk [vmem:[#allocation2 + $0x14] sm:$0x1] %vm572, %v539
        %578 = vst.msk [vmem:[#allocation2 + $0x18] sm:$0xf] %vm570, %v540
        %579 = vst.msk [vmem:[#allocation2 + $0x1c] sm:$0x1] %vm572, %v541
        %580 = vst.msk [vmem:[#allocation2 + $0x20] sm:$0xf] %vm570, %v542
        %581 = vst.msk [vmem:[#allocation2 + $0x24] sm:$0x1] %vm572, %v543
        %582 = vst.msk [vmem:[#allocation2 + $0x28] sm:$0xf] %vm570, %v544
        %583 = vst.msk [vmem:[#allocation2 + $0x2c] sm:$0x1] %vm572, %v545
        %584 = vst.msk [vmem:[#allocation2 + $0x30] sm:$0xf] %vm570, %v546
        %585 = vst.msk [vmem:[#allocation2 + $0x34] sm:$0x1] %vm572, %v547
        %586 = vst.msk [vmem:[#allocation2 + $0x38] sm:$0xf] %vm570, %v548
        %587 = vst.msk [vmem:[#allocation2 + $0x3c] sm:$0x1] %vm572, %v549
        %588 = vst.msk [vmem:[#allocation2 + $0x40] sm:$0xf] %vm570, %v550
        %589 = vst.msk [vmem:[#allocation2 + $0x44] sm:$0x1] %vm572, %v551
        %590 = vst.msk [vmem:[#allocation2 + $0x48] sm:$0xf] %vm570, %v534
        %591 = vst.msk [vmem:[#allocation2 + $0x4c] sm:$0x1] %vm572, %v535
      $region44: #{double_conv_forward.4} parent=39 // pred_fallthru
        _
      %s592 = sadd.s32 %s24, 1
      %p593 = scmp.lt.s32.totalorder %s592, 8
      // Predicated region
      $region45: #{double_conv_forward.4} parent=39 // pred_check
        %p594 = pneg %p593
      $region46: #{double_conv_forward.4} parent=39 // pred_check_branch
        %596 = sbr.rel (%p594) target = $region48
      $region47: #{double_conv_forward.4} parent=39 // pred_region
        %v597 = vld [vmem:[%s361] sm:$0xf]
        %v598 = vld [vmem:[%s361 + $0x4] sm:$0xf]
        %v599 = vld [vmem:[%s361 + $0x8] sm:$0xf]
        %v600 = vld [vmem:[%s361 + $0xc] sm:$0xf]
        %v601 = vld [vmem:[%s361 + $0x10] sm:$0xf]
        %v602 = vld [vmem:[%s361 + $0x14] sm:$0xf]
        %v603 = vld [vmem:[%s361 + $0x18] sm:$0xf]
        %v604 = vld [vmem:[%s361 + $0x1c] sm:$0xf]
        %p605 = scmp.lt.s32.totalorder %s592, 0
        %s606 = ssub.s32 0, %s592
        %s607 = scalar_select %p605, %s606, %s592
        %s608 = sdiv.u32.pop %s607, 3
        %s609 = srem.u32.pop %s607, 3
        %s610 = ssub.s32 0, %s609
        %s611 = scalar_select %p605, %s610, %s609
        %p612 = scmp.ne.s32.totalorder %s611, 0
        %p613 = scmp.lt.s32.totalorder %s611, 0
        %p614 = pnand %p613, %p612
        %p615 = pneg %p614
        %s616 = sadd.s32 %s611, 3
        %s617 = scalar_select %p615, %s616, %s611
        %v618 = vunpack.c.l.bf16 %v597
        %v619 = vunpack.c.l.bf16 %v598
        %v620 = vunpack.c.l.bf16 %v599
        %v621 = vunpack.c.l.bf16 %v600
        %v622 = vunpack.c.l.bf16 %v601
        %v623 = vunpack.c.l.bf16 %v602
        %v624 = vunpack.c.l.bf16 %v603
        %v625 = vunpack.c.l.bf16 %v604
        %v626 = vld [vmem:[%s3] sm:$0x1]
        %v628 = vlaneseq
        %v629 = vshrl.u32 %v628, 7
        %v630 = vsub.s32 0, %v629
        %v631 = vrot.slane %v626, %v630
        %v633 = vmul.f32 %v618, %v631
        %v634 = vmul.f32 %v619, %v631
        %v635 = vmul.f32 %v620, %v631
        %v636 = vmul.f32 %v621, %v631
        %v637 = vmul.f32 %v622, %v631
        %v638 = vmul.f32 %v623, %v631
        %v639 = vmul.f32 %v624, %v631
        %v640 = vmul.f32 %v625, %v631
        %v641 = vld [vmem:[%s4] sm:$0x1]
        %v643 = vlaneseq
        %v644 = vshrl.u32 %v643, 7
        %v645 = vsub.s32 0, %v644
        %v646 = vrot.slane %v641, %v645
        %v648 = vadd.f32 %v633, %v646
        %v649 = vadd.f32 %v634, %v646
        %v650 = vadd.f32 %v635, %v646
        %v651 = vadd.f32 %v636, %v646
        %v652 = vadd.f32 %v637, %v646
        %v653 = vadd.f32 %v638, %v646
        %v654 = vadd.f32 %v639, %v646
        %v655 = vadd.f32 %v640, %v646
        %v656 = vmax.f32 %v648, 0.0
        %v657 = vmax.f32 %v649, 0.0
        %v658 = vmax.f32 %v650, 0.0
        %v659 = vmax.f32 %v651, 0.0
        %v660 = vmax.f32 %v652, 0.0
        %v661 = vmax.f32 %v653, 0.0
        %v662 = vmax.f32 %v654, 0.0
        %v663 = vmax.f32 %v655, 0.0
        %v673 = vrot.slane 0.0, 7
        %v674 = vrot.slane %v656, 7
        %v675 = vrot.slane %v657, 7
        %v676 = vrot.slane %v658, 7
        %v677 = vrot.slane %v659, 7
        %v678 = vrot.slane %v660, 7
        %v679 = vrot.slane %v661, 7
        %v680 = vrot.slane %v662, 7
        %v681 = vrot.slane %v663, 7
        %vm691 = vcmask 1040384
        %v692 = vsel %vm691, 0.0, %v673
        %v693 = vsel %vm691, 0.0, %v674
        %v694 = vsel %vm691, 0.0, %v675
        %v695 = vsel %vm691, 0.0, %v676
        %v696 = vsel %vm691, 0.0, %v677
        %v697 = vsel %vm691, 0.0, %v678
        %v698 = vsel %vm691, 0.0, %v679
        %v699 = vsel %vm691, 0.0, %v680
        %v700 = vsel %vm691, 0.0, %v681
        %v701 = vsel %vm691, %v673, 0.0
        %v702 = vsel %vm691, %v674, 0.0
        %v703 = vsel %vm691, %v675, 0.0
        %v704 = vsel %vm691, %v676, 0.0
        %v705 = vsel %vm691, %v677, 0.0
        %v706 = vsel %vm691, %v678, 0.0
        %v707 = vsel %vm691, %v679, 0.0
        %v708 = vsel %vm691, %v680, 0.0
        %v709 = vsel %vm691, %v681, 0.0
        %v710 = vpack.c.bf16 %v701, %v692
        %v711 = vpack.c.bf16 %v702, %v693
        %v712 = vpack.c.bf16 %v703, %v694
        %v713 = vpack.c.bf16 %v704, %v695
        %v714 = vpack.c.bf16 %v705, %v696
        %v715 = vpack.c.bf16 %v706, %v697
        %v716 = vpack.c.bf16 %v707, %v698
        %v717 = vpack.c.bf16 %v708, %v699
        %v718 = vpack.c.bf16 %v709, %v700
        %v728 = vunpack.c.l.b16 %v710
        %v729 = vunpack.c.h.b16 %v710
        %v730 = vunpack.c.l.b16 %v711
        %v731 = vunpack.c.h.b16 %v711
        %v732 = vunpack.c.l.b16 %v712
        %v733 = vunpack.c.h.b16 %v712
        %v734 = vunpack.c.l.b16 %v713
        %v735 = vunpack.c.h.b16 %v713
        %v736 = vunpack.c.l.b16 %v714
        %v737 = vunpack.c.h.b16 %v714
        %v738 = vunpack.c.l.b16 %v715
        %v739 = vunpack.c.h.b16 %v715
        %v740 = vunpack.c.l.b16 %v716
        %v741 = vunpack.c.h.b16 %v716
        %v742 = vunpack.c.l.b16 %v717
        %v743 = vunpack.c.h.b16 %v717
        %v744 = vunpack.c.l.b16 %v718
        %v745 = vunpack.c.h.b16 %v718
        %v746 = vpack.c.b16 %v728, %v728
        %v747 = vpack.c.b16 %v729, %v729
        %v748 = vpack.c.b16 %v730, %v730
        %v749 = vpack.c.b16 %v731, %v731
        %v750 = vpack.c.b16 %v732, %v732
        %v751 = vpack.c.b16 %v733, %v733
        %v752 = vpack.c.b16 %v734, %v734
        %v753 = vpack.c.b16 %v735, %v735
        %v754 = vpack.c.b16 %v736, %v736
        %v755 = vpack.c.b16 %v737, %v737
        %v756 = vpack.c.b16 %v738, %v738
        %v757 = vpack.c.b16 %v739, %v739
        %v758 = vpack.c.b16 %v740, %v740
        %v759 = vpack.c.b16 %v741, %v741
        %v760 = vpack.c.b16 %v742, %v742
        %v761 = vpack.c.b16 %v743, %v743
        %v762 = vpack.c.b16 %v744, %v744
        %v763 = vpack.c.b16 %v745, %v745
        %s782 = smul.u32 %s617, 20
        %s783 = smul.addr %s782, 4
        %s784 = scalar_lea.vmem [#allocation2], %s783
        %vm785 = vcmask 60416
        %786 = vst.msk [vmem:[%s784] sm:$0xf] %vm785, %v746
        %vm787 = vcmask 57344
        %788 = vst.msk [vmem:[%s784 + $0x4] sm:$0x1] %vm787, %v747
        %789 = vst.msk [vmem:[%s784 + $0x8] sm:$0xf] %vm785, %v748
        %790 = vst.msk [vmem:[%s784 + $0xc] sm:$0x1] %vm787, %v749
        %791 = vst.msk [vmem:[%s784 + $0x10] sm:$0xf] %vm785, %v750
        %792 = vst.msk [vmem:[%s784 + $0x14] sm:$0x1] %vm787, %v751
        %793 = vst.msk [vmem:[%s784 + $0x18] sm:$0xf] %vm785, %v752
        %794 = vst.msk [vmem:[%s784 + $0x1c] sm:$0x1] %vm787, %v753
        %795 = vst.msk [vmem:[%s784 + $0x20] sm:$0xf] %vm785, %v754
        %796 = vst.msk [vmem:[%s784 + $0x24] sm:$0x1] %vm787, %v755
        %797 = vst.msk [vmem:[%s784 + $0x28] sm:$0xf] %vm785, %v756
        %798 = vst.msk [vmem:[%s784 + $0x2c] sm:$0x1] %vm787, %v757
        %799 = vst.msk [vmem:[%s784 + $0x30] sm:$0xf] %vm785, %v758
        %800 = vst.msk [vmem:[%s784 + $0x34] sm:$0x1] %vm787, %v759
        %801 = vst.msk [vmem:[%s784 + $0x38] sm:$0xf] %vm785, %v760
        %802 = vst.msk [vmem:[%s784 + $0x3c] sm:$0x1] %vm787, %v761
        %803 = vst.msk [vmem:[%s784 + $0x40] sm:$0xf] %vm785, %v762
        %804 = vst.msk [vmem:[%s784 + $0x44] sm:$0x1] %vm787, %v763
        %805 = vst.msk [vmem:[%s784 + $0x48] sm:$0xf] %vm785, %v746
        %806 = vst.msk [vmem:[%s784 + $0x4c] sm:$0x1] %vm787, %v747
      $region48: #{double_conv_forward.4} parent=39 // pred_fallthru
        _
      %p807 = scmp.lt.s32.totalorder %s24, 0
      %s808 = ssub.s32 0, %s24
      %s809 = scalar_select %p807, %s808, %s24
      %s810 = sdiv.u32.pop %s809, 3
      %s811 = srem.u32.pop %s809, 3
      %s812 = ssub.s32 0, %s811
      %s813 = scalar_select %p807, %s812, %s811
      %p814 = scmp.ne.s32.totalorder %s813, 0
      %p815 = scmp.lt.s32.totalorder %s813, 0
      %p816 = pnand %p815, %p814
      %p817 = pneg %p816
      %s818 = sadd.s32 %s813, 3
      %s819 = scalar_select %p817, %s818, %s813
      %s820 = smul.u32 %s819, 20
      %s821 = smul.addr %s820, 4
      %s822 = scalar_lea.vmem [#allocation2], %s821
      %v823 = vld [vmem:[%s822] sm:$0xf]
      %v824 = vld [vmem:[%s822 + $0x4] sm:$0x1]
      %v825 = vld [vmem:[%s822 + $0x8] sm:$0xf]
      %v826 = vld [vmem:[%s822 + $0xc] sm:$0x1]
      %v827 = vld [vmem:[%s822 + $0x10] sm:$0xf]
      %v828 = vld [vmem:[%s822 + $0x14] sm:$0x1]
      %v829 = vld [vmem:[%s822 + $0x18] sm:$0xf]
      %v830 = vld [vmem:[%s822 + $0x1c] sm:$0x1]
      %v831 = vld [vmem:[%s822 + $0x20] sm:$0xf]
      %v832 = vld [vmem:[%s822 + $0x24] sm:$0x1]
      %v833 = vld [vmem:[%s822 + $0x28] sm:$0xf]
      %v834 = vld [vmem:[%s822 + $0x2c] sm:$0x1]
      %v835 = vld [vmem:[%s822 + $0x30] sm:$0xf]
      %v836 = vld [vmem:[%s822 + $0x34] sm:$0x1]
      %v837 = vld [vmem:[%s822 + $0x38] sm:$0xf]
      %v838 = vld [vmem:[%s822 + $0x3c] sm:$0x1]
      %v839 = vld [vmem:[%s822 + $0x40] sm:$0xf]
      %v840 = vld [vmem:[%s822 + $0x44] sm:$0x1]
      %v841 = vld [vmem:[%s822 + $0x48] sm:$0xf]
      %v842 = vld [vmem:[%s822 + $0x4c] sm:$0x1]
      %v859 = vunpack.c.l.b16 %v823
      %v860 = vunpack.c.l.b16 %v824
      %v861 = vunpack.c.l.b16 %v825
      %v862 = vunpack.c.l.b16 %v826
      %v863 = vunpack.c.l.b16 %v827
      %v864 = vunpack.c.l.b16 %v828
      %v865 = vunpack.c.l.b16 %v829
      %v866 = vunpack.c.l.b16 %v830
      %v867 = vunpack.c.l.b16 %v831
      %v868 = vunpack.c.l.b16 %v832
      %v869 = vunpack.c.l.b16 %v833
      %v870 = vunpack.c.l.b16 %v834
      %v871 = vunpack.c.l.b16 %v835
      %v872 = vunpack.c.l.b16 %v836
      %v873 = vunpack.c.l.b16 %v837
      %v874 = vunpack.c.l.b16 %v838
      %v875 = vpack.c.b16 %v860, %v859
      %v876 = vpack.c.b16 %v862, %v861
      %v877 = vpack.c.b16 %v864, %v863
      %v878 = vpack.c.b16 %v866, %v865
      %v879 = vpack.c.b16 %v868, %v867
      %v880 = vpack.c.b16 %v870, %v869
      %v881 = vpack.c.b16 %v872, %v871
      %v882 = vpack.c.b16 %v874, %v873
      %v884 = vshrl.u32 %v875, 16
      %v886 = vshll.u32 %v875, 16
      %v888 = vrot.slane %v886, 1
      %v889 = vor.u32 %v884, %v888
      %v891 = vshrl.u32 %v876, 16
      %v893 = vshll.u32 %v876, 16
      %v895 = vrot.slane %v893, 1
      %v896 = vor.u32 %v891, %v895
      %v898 = vshrl.u32 %v877, 16
      %v900 = vshll.u32 %v877, 16
      %v902 = vrot.slane %v900, 1
      %v903 = vor.u32 %v898, %v902
      %v905 = vshrl.u32 %v878, 16
      %v907 = vshll.u32 %v878, 16
      %v909 = vrot.slane %v907, 1
      %v910 = vor.u32 %v905, %v909
      %v912 = vshrl.u32 %v879, 16
      %v914 = vshll.u32 %v879, 16
      %v916 = vrot.slane %v914, 1
      %v917 = vor.u32 %v912, %v916
      %v919 = vshrl.u32 %v880, 16
      %v921 = vshll.u32 %v880, 16
      %v923 = vrot.slane %v921, 1
      %v924 = vor.u32 %v919, %v923
      %v926 = vshrl.u32 %v881, 16
      %v928 = vshll.u32 %v881, 16
      %v930 = vrot.slane %v928, 1
      %v931 = vor.u32 %v926, %v930
      %v933 = vshrl.u32 %v882, 16
      %v935 = vshll.u32 %v882, 16
      %v937 = vrot.slane %v935, 1
      %v938 = vor.u32 %v933, %v937
      %939 = vrot.lane.b32.xlu0 %v889, 8
      %v940 = vpop.permute.xlu0 %939
      %941 = vrot.lane.b32.xlu0 %v896, 8
      %v942 = vpop.permute.xlu0 %941
      %943 = vrot.lane.b32.xlu0 %v903, 8
      %v944 = vpop.permute.xlu0 %943
      %945 = vrot.lane.b32.xlu0 %v910, 8
      %v946 = vpop.permute.xlu0 %945
      %947 = vrot.lane.b32.xlu0 %v917, 8
      %v948 = vpop.permute.xlu0 %947
      %949 = vrot.lane.b32.xlu0 %v924, 8
      %v950 = vpop.permute.xlu0 %949
      %951 = vrot.lane.b32.xlu0 %v931, 8
      %v952 = vpop.permute.xlu0 %951
      %953 = vrot.lane.b32.xlu0 %v938, 8
      %v954 = vpop.permute.xlu0 %953
      %v955 = vrot.slane %v875, 1
      %v956 = vrot.slane %v876, 1
      %v957 = vrot.slane %v877, 1
      %v958 = vrot.slane %v878, 1
      %v959 = vrot.slane %v879, 1
      %v960 = vrot.slane %v880, 1
      %v961 = vrot.slane %v881, 1
      %v962 = vrot.slane %v882, 1
      %963 = vrot.lane.b32.xlu0 %v955, 16
      %v964 = vpop.permute.xlu0 %963
      %965 = vrot.lane.b32.xlu0 %v956, 16
      %v966 = vpop.permute.xlu0 %965
      %967 = vrot.lane.b32.xlu0 %v957, 16
      %v968 = vpop.permute.xlu0 %967
      %969 = vrot.lane.b32.xlu0 %v958, 16
      %v970 = vpop.permute.xlu0 %969
      %971 = vrot.lane.b32.xlu0 %v959, 16
      %v972 = vpop.permute.xlu0 %971
      %973 = vrot.lane.b32.xlu0 %v960, 16
      %v974 = vpop.permute.xlu0 %973
      %975 = vrot.lane.b32.xlu0 %v961, 16
      %v976 = vpop.permute.xlu0 %975
      %977 = vrot.lane.b32.xlu0 %v962, 16
      %v978 = vpop.permute.xlu0 %977
      %v980 = vunpack.c.l.b16 %v839
      %v981 = vpack.c.b16 %v861, %v861
      %v982 = vpack.c.b16 %v863, %v863
      %v983 = vpack.c.b16 %v865, %v865
      %v984 = vpack.c.b16 %v867, %v867
      %v985 = vpack.c.b16 %v869, %v869
      %v986 = vpack.c.b16 %v871, %v871
      %v987 = vpack.c.b16 %v873, %v873
      %v988 = vpack.c.b16 %v980, %v980
      %989 = vrot.lane.b32.xlu0 %v981, 24
      %v990 = vpop.permute.xlu0 %989
      %991 = vrot.lane.b32.xlu0 %v982, 24
      %v992 = vpop.permute.xlu0 %991
      %993 = vrot.lane.b32.xlu0 %v983, 24
      %v994 = vpop.permute.xlu0 %993
      %995 = vrot.lane.b32.xlu0 %v984, 24
      %v996 = vpop.permute.xlu0 %995
      %997 = vrot.lane.b32.xlu0 %v985, 24
      %v998 = vpop.permute.xlu0 %997
      %999 = vrot.lane.b32.xlu0 %v986, 24
      %v1000 = vpop.permute.xlu0 %999
      %1001 = vrot.lane.b32.xlu0 %v987, 24
      %v1002 = vpop.permute.xlu0 %1001
      %1003 = vrot.lane.b32.xlu0 %v988, 24
      %v1004 = vpop.permute.xlu0 %1003
      %v1006 = vunpack.c.l.b16 %v840
      %v1007 = vpack.c.b16 %v1006, %v980
      %v1009 = vshrl.u32 %v1007, 16
      %v1011 = vshll.u32 %v1007, 16
      %v1013 = vrot.slane %v1011, 1
      %v1014 = vor.u32 %v1009, %v1013
      %1015 = vrot.lane.b32.xlu0 %v896, 32
      %v1016 = vpop.permute.xlu0 %1015
      %1017 = vrot.lane.b32.xlu0 %v903, 32
      %v1018 = vpop.permute.xlu0 %1017
      %1019 = vrot.lane.b32.xlu0 %v910, 32
      %v1020 = vpop.permute.xlu0 %1019
      %1021 = vrot.lane.b32.xlu0 %v917, 32
      %v1022 = vpop.permute.xlu0 %1021
      %1023 = vrot.lane.b32.xlu0 %v924, 32
      %v1024 = vpop.permute.xlu0 %1023
      %1025 = vrot.lane.b32.xlu0 %v931, 32
      %v1026 = vpop.permute.xlu0 %1025
      %1027 = vrot.lane.b32.xlu0 %v938, 32
      %v1028 = vpop.permute.xlu0 %1027
      %1029 = vrot.lane.b32.xlu0 %v1014, 32
      %v1030 = vpop.permute.xlu0 %1029
      %v1031 = vrot.slane %v1007, 1
      %1032 = vrot.lane.b32.xlu0 %v956, 40
      %v1033 = vpop.permute.xlu0 %1032
      %1034 = vrot.lane.b32.xlu0 %v957, 40
      %v1035 = vpop.permute.xlu0 %1034
      %1036 = vrot.lane.b32.xlu0 %v958, 40
      %v1037 = vpop.permute.xlu0 %1036
      %1038 = vrot.lane.b32.xlu0 %v959, 40
      %v1039 = vpop.permute.xlu0 %1038
      %1040 = vrot.lane.b32.xlu0 %v960, 40
      %v1041 = vpop.permute.xlu0 %1040
      %1042 = vrot.lane.b32.xlu0 %v961, 40
      %v1043 = vpop.permute.xlu0 %1042
      %1044 = vrot.lane.b32.xlu0 %v962, 40
      %v1045 = vpop.permute.xlu0 %1044
      %1046 = vrot.lane.b32.xlu0 %v1031, 40
      %v1047 = vpop.permute.xlu0 %1046
      %v1049 = vunpack.c.l.b16 %v841
      %v1050 = vpack.c.b16 %v1049, %v1049
      %1051 = vrot.lane.b32.xlu0 %v982, 48
      %v1052 = vpop.permute.xlu0 %1051
      %1053 = vrot.lane.b32.xlu0 %v983, 48
      %v1054 = vpop.permute.xlu0 %1053
      %1055 = vrot.lane.b32.xlu0 %v984, 48
      %v1056 = vpop.permute.xlu0 %1055
      %1057 = vrot.lane.b32.xlu0 %v985, 48
      %v1058 = vpop.permute.xlu0 %1057
      %1059 = vrot.lane.b32.xlu0 %v986, 48
      %v1060 = vpop.permute.xlu0 %1059
      %1061 = vrot.lane.b32.xlu0 %v987, 48
      %v1062 = vpop.permute.xlu0 %1061
      %1063 = vrot.lane.b32.xlu0 %v988, 48
      %v1064 = vpop.permute.xlu0 %1063
      %1065 = vrot.lane.b32.xlu0 %v1050, 48
      %v1066 = vpop.permute.xlu0 %1065
      %v1068 = vunpack.c.l.b16 %v842
      %v1069 = vpack.c.b16 %v1068, %v1049
      %v1071 = vshrl.u32 %v1069, 16
      %v1073 = vshll.u32 %v1069, 16
      %v1075 = vrot.slane %v1073, 1
      %v1076 = vor.u32 %v1071, %v1075
      %1077 = vrot.lane.b32.xlu0 %v903, 56
      %v1078 = vpop.permute.xlu0 %1077
      %1079 = vrot.lane.b32.xlu0 %v910, 56
      %v1080 = vpop.permute.xlu0 %1079
      %1081 = vrot.lane.b32.xlu0 %v917, 56
      %v1082 = vpop.permute.xlu0 %1081
      %1083 = vrot.lane.b32.xlu0 %v924, 56
      %v1084 = vpop.permute.xlu0 %1083
      %1085 = vrot.lane.b32.xlu0 %v931, 56
      %v1086 = vpop.permute.xlu0 %1085
      %1087 = vrot.lane.b32.xlu0 %v938, 56
      %v1088 = vpop.permute.xlu0 %1087
      %1089 = vrot.lane.b32.xlu0 %v1014, 56
      %v1090 = vpop.permute.xlu0 %1089
      %1091 = vrot.lane.b32.xlu0 %v1076, 56
      %v1092 = vpop.permute.xlu0 %1091
      %v1093 = vrot.slane %v1069, 1
      %1094 = vrot.lane.b32.xlu0 %v957, 64
      %v1095 = vpop.permute.xlu0 %1094
      %1096 = vrot.lane.b32.xlu0 %v958, 64
      %v1097 = vpop.permute.xlu0 %1096
      %1098 = vrot.lane.b32.xlu0 %v959, 64
      %v1099 = vpop.permute.xlu0 %1098
      %1100 = vrot.lane.b32.xlu0 %v960, 64
      %v1101 = vpop.permute.xlu0 %1100
      %1102 = vrot.lane.b32.xlu0 %v961, 64
      %v1103 = vpop.permute.xlu0 %1102
      %1104 = vrot.lane.b32.xlu0 %v962, 64
      %v1105 = vpop.permute.xlu0 %1104
      %1106 = vrot.lane.b32.xlu0 %v1031, 64
      %v1107 = vpop.permute.xlu0 %1106
      %1108 = vrot.lane.b32.xlu0 %v1093, 64
      %v1109 = vpop.permute.xlu0 %1108
      %vm1110 = vcmask 64512
      %v1113 = vsel %vm1110, %v823, %v940
      %v1116 = vsel %vm1110, %v825, %v942
      %v1119 = vsel %vm1110, %v827, %v944
      %v1122 = vsel %vm1110, %v829, %v946
      %v1125 = vsel %vm1110, %v831, %v948
      %v1128 = vsel %vm1110, %v833, %v950
      %v1131 = vsel %vm1110, %v835, %v952
      %v1134 = vsel %vm1110, %v837, %v954
      %vm1135 = vcmask 130048
      %v1137 = vsel %vm1135, %v1113, %v964
      %v1139 = vsel %vm1135, %v1116, %v966
      %v1141 = vsel %vm1135, %v1119, %v968
      %v1143 = vsel %vm1135, %v1122, %v970
      %v1145 = vsel %vm1135, %v1125, %v972
      %v1147 = vsel %vm1135, %v1128, %v974
      %v1149 = vsel %vm1135, %v1131, %v976
      %v1151 = vsel %vm1135, %v1134, %v978
      %vm1152 = vcmask 195584
      %v1154 = vsel %vm1152, %v1137, %v990
      %v1156 = vsel %vm1152, %v1139, %v992
      %v1158 = vsel %vm1152, %v1141, %v994
      %v1160 = vsel %vm1152, %v1143, %v996
      %v1162 = vsel %vm1152, %v1145, %v998
      %v1164 = vsel %vm1152, %v1147, %v1000
      %v1166 = vsel %vm1152, %v1149, %v1002
      %v1168 = vsel %vm1152, %v1151, %v1004
      %vm1169 = vcmask 261120
      %v1171 = vsel %vm1169, %v1154, %v1016
      %v1173 = vsel %vm1169, %v1156, %v1018
      %v1175 = vsel %vm1169, %v1158, %v1020
      %v1177 = vsel %vm1169, %v1160, %v1022
      %v1179 = vsel %vm1169, %v1162, %v1024
      %v1181 = vsel %vm1169, %v1164, %v1026
      %v1183 = vsel %vm1169, %v1166, %v1028
      %v1185 = vsel %vm1169, %v1168, %v1030
      %vm1186 = vcmask 326656
      %v1188 = vsel %vm1186, %v1171, %v1033
      %v1190 = vsel %vm1186, %v1173, %v1035
      %v1192 = vsel %vm1186, %v1175, %v1037
      %v1194 = vsel %vm1186, %v1177, %v1039
      %v1196 = vsel %vm1186, %v1179, %v1041
      %v1198 = vsel %vm1186, %v1181, %v1043
      %v1200 = vsel %vm1186, %v1183, %v1045
      %v1202 = vsel %vm1186, %v1185, %v1047
      %vm1203 = vcmask 392192
      %v1205 = vsel %vm1203, %v1188, %v1052
      %v1207 = vsel %vm1203, %v1190, %v1054
      %v1209 = vsel %vm1203, %v1192, %v1056
      %v1211 = vsel %vm1203, %v1194, %v1058
      %v1213 = vsel %vm1203, %v1196, %v1060
      %v1215 = vsel %vm1203, %v1198, %v1062
      %v1217 = vsel %vm1203, %v1200, %v1064
      %v1219 = vsel %vm1203, %v1202, %v1066
      %vm1220 = vcmask 457728
      %v1222 = vsel %vm1220, %v1205, %v1078
      %v1224 = vsel %vm1220, %v1207, %v1080
      %v1226 = vsel %vm1220, %v1209, %v1082
      %v1228 = vsel %vm1220, %v1211, %v1084
      %v1230 = vsel %vm1220, %v1213, %v1086
      %v1232 = vsel %vm1220, %v1215, %v1088
      %v1234 = vsel %vm1220, %v1217, %v1090
      %v1236 = vsel %vm1220, %v1219, %v1092
      %vm1237 = vcmask 523264
      %v1239 = vsel %vm1237, %v1222, %v1095
      %v1241 = vsel %vm1237, %v1224, %v1097
      %v1243 = vsel %vm1237, %v1226, %v1099
      %v1245 = vsel %vm1237, %v1228, %v1101
      %v1247 = vsel %vm1237, %v1230, %v1103
      %v1249 = vsel %vm1237, %v1232, %v1105
      %v1251 = vsel %vm1237, %v1234, %v1107
      %v1253 = vsel %vm1237, %v1236, %v1109
      %s1254 = scalar_lea.vmem %s2, 36
      %v1255 = vld [vmem:[%s1254] sm:$0xf]
      %v1256 = vld [vmem:[%s1254 + $0x4] sm:$0xf]
      %v1257 = vld [vmem:[%s1254 + $0x8] sm:$0xf]
      %v1258 = vld [vmem:[%s1254 + $0xc] sm:$0xf]
      %v1259 = vld [vmem:[%s1254 + $0x10] sm:$0xf]
      %v1260 = vld [vmem:[%s1254 + $0x14] sm:$0xf]
      %v1261 = vld [vmem:[%s1254 + $0x18] sm:$0xf]
      %v1262 = vld [vmem:[%s1254 + $0x1c] sm:$0xf]
      %v1263 = vld [vmem:[%s1254 + $0x20] sm:$0xf]
      %v1272 = vunpack.c.l.b16 %v1239
      %v1273 = vunpack.c.l.b16 %v1241
      %v1274 = vunpack.c.l.b16 %v1243
      %v1275 = vunpack.c.l.b16 %v1245
      %v1276 = vunpack.c.l.b16 %v1247
      %v1277 = vunpack.c.l.b16 %v1249
      %v1278 = vunpack.c.l.b16 %v1251
      %v1279 = vunpack.c.l.b16 %v1253
      %v1280 = vpack.c.b16 %v1273, %v1272
      %v1281 = vpack.c.b16 %v1275, %v1274
      %v1282 = vpack.c.b16 %v1277, %v1276
      %v1283 = vpack.c.b16 %v1279, %v1278
      %v1293 = vunpack.c.l.b16 %v1255
      %v1294 = vunpack.c.l.b16 %v1256
      %v1295 = vunpack.c.l.b16 %v1257
      %v1296 = vunpack.c.l.b16 %v1258
      %v1297 = vunpack.c.l.b16 %v1259
      %v1298 = vunpack.c.l.b16 %v1260
      %v1299 = vunpack.c.l.b16 %v1261
      %v1300 = vunpack.c.l.b16 %v1262
      %v1301 = vunpack.c.l.b16 %v1263
      %v1302 = vpack.c.b16 %v1294, %v1293
      %v1303 = vpack.c.b16 %v1296, %v1295
      %v1304 = vpack.c.b16 %v1298, %v1297
      %v1305 = vpack.c.b16 %v1300, %v1299
      %v1306 = vpack.c.b16 %v1301, %v1301
      %vm1311 = vcmask 588800
      %v1313 = vsel %vm1311, %v1280, 0
      %v1316 = vsel %vm1311, %v1281, 0
      %v1319 = vsel %vm1311, %v1282, 0
      %v1322 = vsel %vm1311, %v1283, 0
      %vm1324 = vcmask 1043456
      %v1326 = vsel %vm1324, %v1306, 0
      %1328 = vmatprep.subr.bf16.mxu0 0
      %1329 = vmatpush1.bf16.msra.mxu0 %v1302
      %1330 = vmatprep.subr.bf16.mxu0 0
      %1331 = vmatpush1.bf16.msra.mxu0 %v1303
      %1332 = vmatprep.subr.bf16.mxu0 0
      %1333 = vmatpush1.bf16.msra.mxu0 %v1304
      %1334 = vmatprep.subr.bf16.mxu0 0
      %1335 = vmatpush1.bf16.msra.mxu0 %v1305
      %1336 = vmatprep.subr.bf16.mxu0 0
      %1337 = vmatpush1.bf16.msra.mxu0 %v1326
      %1338 = vmatprep.subr.bf16.mxu0 0
      %1339 = vmatpush1.bf16.msra.mxu0 0
      %1340 = vmatprep.subr.bf16.mxu0 0
      %1341 = vmatpush1.bf16.msra.mxu0 0
      %1342 = vmatprep.subr.bf16.mxu0 0
      %1343 = vmatpush1.bf16.msra.mxu0 0
      %1344 = vmatprep.subr.bf16.mxu0 0
      %1345 = vmatpush1.bf16.msra.mxu0 0
      %1346 = vmatprep.subr.bf16.mxu0 0
      %1347 = vmatpush1.bf16.msra.mxu0 0
      %1348 = vmatprep.subr.bf16.mxu0 0
      %1349 = vmatpush1.bf16.msra.mxu0 0
      %1350 = vmatprep.subr.bf16.mxu0 0
      %1351 = vmatpush1.bf16.msra.mxu0 0
      %1352 = vmatprep.subr.bf16.mxu0 0
      %1353 = vmatpush1.bf16.msra.mxu0 0
      %1354 = vmatprep.subr.bf16.mxu0 0
      %1355 = vmatpush1.bf16.msra.mxu0 0
      %1356 = vmatprep.subr.bf16.mxu0 0
      %1357 = vmatpush1.bf16.msra.mxu0 0
      %1358 = vmatprep.subr.bf16.mxu0 0
      %1359 = vmatpush1.bf16.msra.mxu0 0
      %1360 = vmatprep.mubr.bf16.mxu0 0
      %1361 = vmatmul.mubr.bf16.gmra.mrb[0].mxu0 %v1313
      %v1362 = vpop.f32.mrb[0].mxu0
      %v1363 = vadd.f32 0.0, %v1362
      %v1364 = vpop.f32.mrb[0].mxu0
      %v1365 = vpop.f32.mrb[0].mxu0
      %v1366 = vadd.f32 0.0, %v1365
      %v1367 = vpop.f32.mrb[0].mxu0
      %1368 = vmatprep.mubr.bf16.mxu0 0
      %1369 = vmatmul.mubr.bf16.gmra.mrb[0].mxu0 %v1316
      %v1370 = vpop.f32.mrb[0].mxu0
      %v1371 = vadd.f32 0.0, %v1370
      %v1372 = vpop.f32.mrb[0].mxu0
      %v1373 = vpop.f32.mrb[0].mxu0
      %v1374 = vadd.f32 0.0, %v1373
      %v1375 = vpop.f32.mrb[0].mxu0
      %1376 = vmatprep.mubr.bf16.mxu0 0
      %1377 = vmatmul.mubr.bf16.gmra.mrb[0].mxu0 %v1319
      %v1378 = vpop.f32.mrb[0].mxu0
      %v1379 = vadd.f32 0.0, %v1378
      %v1380 = vpop.f32.mrb[0].mxu0
      %v1381 = vpop.f32.mrb[0].mxu0
      %v1382 = vadd.f32 0.0, %v1381
      %v1383 = vpop.f32.mrb[0].mxu0
      %1384 = vmatprep.mubr.bf16.mxu0 0
      %1385 = vmatmul.mubr.bf16.gmra.mrb[0].mxu0 %v1322
      %v1386 = vpop.f32.mrb[0].mxu0
      %v1387 = vadd.f32 0.0, %v1386
      %v1388 = vpop.f32.mrb[0].mxu0
      %v1389 = vpop.f32.mrb[0].mxu0
      %v1390 = vadd.f32 0.0, %v1389
      %v1391 = vpop.f32.mrb[0].mxu0
      %1392 = vdwg.mxu0
      %1393 = vst.msk [vmem:[#allocation3] sm:$0xff] %vm1110, %v1363
      %1394 = vst.msk [vmem:[#allocation3 + $0x8] sm:$0xff] %vm1110, %v1366
      %1395 = vst.msk [vmem:[#allocation3 + $0x10] sm:$0xff] %vm1110, %v1371
      %1396 = vst.msk [vmem:[#allocation3 + $0x18] sm:$0xff] %vm1110, %v1374
      %1397 = vst.msk [vmem:[#allocation3 + $0x20] sm:$0xff] %vm1110, %v1379
      %1398 = vst.msk [vmem:[#allocation3 + $0x28] sm:$0xff] %vm1110, %v1382
      %1399 = vst.msk [vmem:[#allocation3 + $0x30] sm:$0xff] %vm1110, %v1387
      %1400 = vst.msk [vmem:[#allocation3 + $0x38] sm:$0xff] %vm1110, %v1390
      %p1401 = scmp.gt.s32.totalorder %s24, 0
      // Predicated region
      $region49: #{double_conv_forward.4} parent=39 // pred_check
        %p1402 = pneg %p1401
      $region50: #{double_conv_forward.4} parent=39 // pred_check_branch
        %1404 = sbr.rel (%p1402) target = $region52
      $region51: #{double_conv_forward.4} parent=39 // pred_region
        %v1405 = vld [vmem:[#allocation3] sm:$0xff]
        %v1406 = vld [vmem:[#allocation3 + $0x8] sm:$0xff]
        %v1407 = vld [vmem:[#allocation3 + $0x10] sm:$0xff]
        %v1408 = vld [vmem:[#allocation3 + $0x18] sm:$0xff]
        %v1409 = vld [vmem:[#allocation3 + $0x20] sm:$0xff]
        %v1410 = vld [vmem:[#allocation3 + $0x28] sm:$0xff]
        %v1411 = vld [vmem:[#allocation3 + $0x30] sm:$0xff]
        %v1412 = vld [vmem:[#allocation3 + $0x38] sm:$0xff]
        %s1413 = ssub.s32 %s24, 1
        %p1414 = scmp.lt.s32.totalorder %s1413, 0
        %s1415 = ssub.s32 0, %s1413
        %s1416 = scalar_select %p1414, %s1415, %s1413
        %s1417 = sdiv.u32.pop %s1416, 3
        %s1418 = srem.u32.pop %s1416, 3
        %s1419 = ssub.s32 0, %s1418
        %s1420 = scalar_select %p1414, %s1419, %s1418
        %p1421 = scmp.ne.s32.totalorder %s1420, 0
        %p1422 = scmp.lt.s32.totalorder %s1420, 0
        %p1423 = pnand %p1422, %p1421
        %p1424 = pneg %p1423
        %s1425 = sadd.s32 %s1420, 3
        %s1426 = scalar_select %p1424, %s1425, %s1420
        %s1427 = smul.u32 %s1426, 20
        %s1428 = smul.addr %s1427, 4
        %s1429 = scalar_lea.vmem [#allocation2], %s1428
        %v1430 = vld [vmem:[%s1429] sm:$0xf]
        %v1431 = vld [vmem:[%s1429 + $0x4] sm:$0x1]
        %v1432 = vld [vmem:[%s1429 + $0x8] sm:$0xf]
        %v1433 = vld [vmem:[%s1429 + $0xc] sm:$0x1]
        %v1434 = vld [vmem:[%s1429 + $0x10] sm:$0xf]
        %v1435 = vld [vmem:[%s1429 + $0x14] sm:$0x1]
        %v1436 = vld [vmem:[%s1429 + $0x18] sm:$0xf]
        %v1437 = vld [vmem:[%s1429 + $0x1c] sm:$0x1]
        %v1438 = vld [vmem:[%s1429 + $0x20] sm:$0xf]
        %v1439 = vld [vmem:[%s1429 + $0x24] sm:$0x1]
        %v1440 = vld [vmem:[%s1429 + $0x28] sm:$0xf]
        %v1441 = vld [vmem:[%s1429 + $0x2c] sm:$0x1]
        %v1442 = vld [vmem:[%s1429 + $0x30] sm:$0xf]
        %v1443 = vld [vmem:[%s1429 + $0x34] sm:$0x1]
        %v1444 = vld [vmem:[%s1429 + $0x38] sm:$0xf]
        %v1445 = vld [vmem:[%s1429 + $0x3c] sm:$0x1]
        %v1446 = vld [vmem:[%s1429 + $0x40] sm:$0xf]
        %v1447 = vld [vmem:[%s1429 + $0x44] sm:$0x1]
        %v1448 = vld [vmem:[%s1429 + $0x48] sm:$0xf]
        %v1449 = vld [vmem:[%s1429 + $0x4c] sm:$0x1]
        %v1466 = vunpack.c.l.b16 %v1430
        %v1467 = vunpack.c.l.b16 %v1431
        %v1468 = vunpack.c.l.b16 %v1432
        %v1469 = vunpack.c.l.b16 %v1433
        %v1470 = vunpack.c.l.b16 %v1434
        %v1471 = vunpack.c.l.b16 %v1435
        %v1472 = vunpack.c.l.b16 %v1436
        %v1473 = vunpack.c.l.b16 %v1437
        %v1474 = vunpack.c.l.b16 %v1438
        %v1475 = vunpack.c.l.b16 %v1439
        %v1476 = vunpack.c.l.b16 %v1440
        %v1477 = vunpack.c.l.b16 %v1441
        %v1478 = vunpack.c.l.b16 %v1442
        %v1479 = vunpack.c.l.b16 %v1443
        %v1480 = vunpack.c.l.b16 %v1444
        %v1481 = vunpack.c.l.b16 %v1445
        %v1482 = vpack.c.b16 %v1467, %v1466
        %v1483 = vpack.c.b16 %v1469, %v1468
        %v1484 = vpack.c.b16 %v1471, %v1470
        %v1485 = vpack.c.b16 %v1473, %v1472
        %v1486 = vpack.c.b16 %v1475, %v1474
        %v1487 = vpack.c.b16 %v1477, %v1476
        %v1488 = vpack.c.b16 %v1479, %v1478
        %v1489 = vpack.c.b16 %v1481, %v1480
        %v1491 = vshrl.u32 %v1482, 16
        %v1493 = vshll.u32 %v1482, 16
        %v1495 = vrot.slane %v1493, 1
        %v1496 = vor.u32 %v1491, %v1495
        %v1498 = vshrl.u32 %v1483, 16
        %v1500 = vshll.u32 %v1483, 16
        %v1502 = vrot.slane %v1500, 1
        %v1503 = vor.u32 %v1498, %v1502
        %v1505 = vshrl.u32 %v1484, 16
        %v1507 = vshll.u32 %v1484, 16
        %v1509 = vrot.slane %v1507, 1
        %v1510 = vor.u32 %v1505, %v1509
        %v1512 = vshrl.u32 %v1485, 16
        %v1514 = vshll.u32 %v1485, 16
        %v1516 = vrot.slane %v1514, 1
        %v1517 = vor.u32 %v1512, %v1516
        %v1519 = vshrl.u32 %v1486, 16
        %v1521 = vshll.u32 %v1486, 16
        %v1523 = vrot.slane %v1521, 1
        %v1524 = vor.u32 %v1519, %v1523
        %v1526 = vshrl.u32 %v1487, 16
        %v1528 = vshll.u32 %v1487, 16
        %v1530 = vrot.slane %v1528, 1
        %v1531 = vor.u32 %v1526, %v1530
        %v1533 = vshrl.u32 %v1488, 16
        %v1535 = vshll.u32 %v1488, 16
        %v1537 = vrot.slane %v1535, 1
        %v1538 = vor.u32 %v1533, %v1537
        %v1540 = vshrl.u32 %v1489, 16
        %v1542 = vshll.u32 %v1489, 16
        %v1544 = vrot.slane %v1542, 1
        %v1545 = vor.u32 %v1540, %v1544
        %1546 = vrot.lane.b32.xlu0 %v1496, 8
        %v1547 = vpop.permute.xlu0 %1546
        %1548 = vrot.lane.b32.xlu0 %v1503, 8
        %v1549 = vpop.permute.xlu0 %1548
        %1550 = vrot.lane.b32.xlu0 %v1510, 8
        %v1551 = vpop.permute.xlu0 %1550
        %1552 = vrot.lane.b32.xlu0 %v1517, 8
        %v1553 = vpop.permute.xlu0 %1552
        %1554 = vrot.lane.b32.xlu0 %v1524, 8
        %v1555 = vpop.permute.xlu0 %1554
        %1556 = vrot.lane.b32.xlu0 %v1531, 8
        %v1557 = vpop.permute.xlu0 %1556
        %1558 = vrot.lane.b32.xlu0 %v1538, 8
        %v1559 = vpop.permute.xlu0 %1558
        %1560 = vrot.lane.b32.xlu0 %v1545, 8
        %v1561 = vpop.permute.xlu0 %1560
        %v1562 = vrot.slane %v1482, 1
        %v1563 = vrot.slane %v1483, 1
        %v1564 = vrot.slane %v1484, 1
        %v1565 = vrot.slane %v1485, 1
        %v1566 = vrot.slane %v1486, 1
        %v1567 = vrot.slane %v1487, 1
        %v1568 = vrot.slane %v1488, 1
        %v1569 = vrot.slane %v1489, 1
        %1570 = vrot.lane.b32.xlu0 %v1562, 16
        %v1571 = vpop.permute.xlu0 %1570
        %1572 = vrot.lane.b32.xlu0 %v1563, 16
        %v1573 = vpop.permute.xlu0 %1572
        %1574 = vrot.lane.b32.xlu0 %v1564, 16
        %v1575 = vpop.permute.xlu0 %1574
        %1576 = vrot.lane.b32.xlu0 %v1565, 16
        %v1577 = vpop.permute.xlu0 %1576
        %1578 = vrot.lane.b32.xlu0 %v1566, 16
        %v1579 = vpop.permute.xlu0 %1578
        %1580 = vrot.lane.b32.xlu0 %v1567, 16
        %v1581 = vpop.permute.xlu0 %1580
        %1582 = vrot.lane.b32.xlu0 %v1568, 16
        %v1583 = vpop.permute.xlu0 %1582
        %1584 = vrot.lane.b32.xlu0 %v1569, 16
        %v1585 = vpop.permute.xlu0 %1584
        %v1587 = vunpack.c.l.b16 %v1446
        %v1588 = vpack.c.b16 %v1468, %v1468
        %v1589 = vpack.c.b16 %v1470, %v1470
        %v1590 = vpack.c.b16 %v1472, %v1472
        %v1591 = vpack.c.b16 %v1474, %v1474
        %v1592 = vpack.c.b16 %v1476, %v1476
        %v1593 = vpack.c.b16 %v1478, %v1478
        %v1594 = vpack.c.b16 %v1480, %v1480
        %v1595 = vpack.c.b16 %v1587, %v1587
        %1596 = vrot.lane.b32.xlu0 %v1588, 24
        %v1597 = vpop.permute.xlu0 %1596
        %1598 = vrot.lane.b32.xlu0 %v1589, 24
        %v1599 = vpop.permute.xlu0 %1598
        %1600 = vrot.lane.b32.xlu0 %v1590, 24
        %v1601 = vpop.permute.xlu0 %1600
        %1602 = vrot.lane.b32.xlu0 %v1591, 24
        %v1603 = vpop.permute.xlu0 %1602
        %1604 = vrot.lane.b32.xlu0 %v1592, 24
        %v1605 = vpop.permute.xlu0 %1604
        %1606 = vrot.lane.b32.xlu0 %v1593, 24
        %v1607 = vpop.permute.xlu0 %1606
        %1608 = vrot.lane.b32.xlu0 %v1594, 24
        %v1609 = vpop.permute.xlu0 %1608
        %1610 = vrot.lane.b32.xlu0 %v1595, 24
        %v1611 = vpop.permute.xlu0 %1610
        %v1613 = vunpack.c.l.b16 %v1447
        %v1614 = vpack.c.b16 %v1613, %v1587
        %v1616 = vshrl.u32 %v1614, 16
        %v1618 = vshll.u32 %v1614, 16
        %v1620 = vrot.slane %v1618, 1
        %v1621 = vor.u32 %v1616, %v1620
        %1622 = vrot.lane.b32.xlu0 %v1503, 32
        %v1623 = vpop.permute.xlu0 %1622
        %1624 = vrot.lane.b32.xlu0 %v1510, 32
        %v1625 = vpop.permute.xlu0 %1624
        %1626 = vrot.lane.b32.xlu0 %v1517, 32
        %v1627 = vpop.permute.xlu0 %1626
        %1628 = vrot.lane.b32.xlu0 %v1524, 32
        %v1629 = vpop.permute.xlu0 %1628
        %1630 = vrot.lane.b32.xlu0 %v1531, 32
        %v1631 = vpop.permute.xlu0 %1630
        %1632 = vrot.lane.b32.xlu0 %v1538, 32
        %v1633 = vpop.permute.xlu0 %1632
        %1634 = vrot.lane.b32.xlu0 %v1545, 32
        %v1635 = vpop.permute.xlu0 %1634
        %1636 = vrot.lane.b32.xlu0 %v1621, 32
        %v1637 = vpop.permute.xlu0 %1636
        %v1638 = vrot.slane %v1614, 1
        %1639 = vrot.lane.b32.xlu0 %v1563, 40
        %v1640 = vpop.permute.xlu0 %1639
        %1641 = vrot.lane.b32.xlu0 %v1564, 40
        %v1642 = vpop.permute.xlu0 %1641
        %1643 = vrot.lane.b32.xlu0 %v1565, 40
        %v1644 = vpop.permute.xlu0 %1643
        %1645 = vrot.lane.b32.xlu0 %v1566, 40
        %v1646 = vpop.permute.xlu0 %1645
        %1647 = vrot.lane.b32.xlu0 %v1567, 40
        %v1648 = vpop.permute.xlu0 %1647
        %1649 = vrot.lane.b32.xlu0 %v1568, 40
        %v1650 = vpop.permute.xlu0 %1649
        %1651 = vrot.lane.b32.xlu0 %v1569, 40
        %v1652 = vpop.permute.xlu0 %1651
        %1653 = vrot.lane.b32.xlu0 %v1638, 40
        %v1654 = vpop.permute.xlu0 %1653
        %v1656 = vunpack.c.l.b16 %v1448
        %v1657 = vpack.c.b16 %v1656, %v1656
        %1658 = vrot.lane.b32.xlu0 %v1589, 48
        %v1659 = vpop.permute.xlu0 %1658
        %1660 = vrot.lane.b32.xlu0 %v1590, 48
        %v1661 = vpop.permute.xlu0 %1660
        %1662 = vrot.lane.b32.xlu0 %v1591, 48
        %v1663 = vpop.permute.xlu0 %1662
        %1664 = vrot.lane.b32.xlu0 %v1592, 48
        %v1665 = vpop.permute.xlu0 %1664
        %1666 = vrot.lane.b32.xlu0 %v1593, 48
        %v1667 = vpop.permute.xlu0 %1666
        %1668 = vrot.lane.b32.xlu0 %v1594, 48
        %v1669 = vpop.permute.xlu0 %1668
        %1670 = vrot.lane.b32.xlu0 %v1595, 48
        %v1671 = vpop.permute.xlu0 %1670
        %1672 = vrot.lane.b32.xlu0 %v1657, 48
        %v1673 = vpop.permute.xlu0 %1672
        %v1675 = vunpack.c.l.b16 %v1449
        %v1676 = vpack.c.b16 %v1675, %v1656
        %v1678 = vshrl.u32 %v1676, 16
        %v1680 = vshll.u32 %v1676, 16
        %v1682 = vrot.slane %v1680, 1
        %v1683 = vor.u32 %v1678, %v1682
        %1684 = vrot.lane.b32.xlu0 %v1510, 56
        %v1685 = vpop.permute.xlu0 %1684
        %1686 = vrot.lane.b32.xlu0 %v1517, 56
        %v1687 = vpop.permute.xlu0 %1686
        %1688 = vrot.lane.b32.xlu0 %v1524, 56
        %v1689 = vpop.permute.xlu0 %1688
        %1690 = vrot.lane.b32.xlu0 %v1531, 56
        %v1691 = vpop.permute.xlu0 %1690
        %1692 = vrot.lane.b32.xlu0 %v1538, 56
        %v1693 = vpop.permute.xlu0 %1692
        %1694 = vrot.lane.b32.xlu0 %v1545, 56
        %v1695 = vpop.permute.xlu0 %1694
        %1696 = vrot.lane.b32.xlu0 %v1621, 56
        %v1697 = vpop.permute.xlu0 %1696
        %1698 = vrot.lane.b32.xlu0 %v1683, 56
        %v1699 = vpop.permute.xlu0 %1698
        %v1700 = vrot.slane %v1676, 1
        %1701 = vrot.lane.b32.xlu0 %v1564, 64
        %v1702 = vpop.permute.xlu0 %1701
        %1703 = vrot.lane.b32.xlu0 %v1565, 64
        %v1704 = vpop.permute.xlu0 %1703
        %1705 = vrot.lane.b32.xlu0 %v1566, 64
        %v1706 = vpop.permute.xlu0 %1705
        %1707 = vrot.lane.b32.xlu0 %v1567, 64
        %v1708 = vpop.permute.xlu0 %1707
        %1709 = vrot.lane.b32.xlu0 %v1568, 64
        %v1710 = vpop.permute.xlu0 %1709
        %1711 = vrot.lane.b32.xlu0 %v1569, 64
        %v1712 = vpop.permute.xlu0 %1711
        %1713 = vrot.lane.b32.xlu0 %v1638, 64
        %v1714 = vpop.permute.xlu0 %1713
        %1715 = vrot.lane.b32.xlu0 %v1700, 64
        %v1716 = vpop.permute.xlu0 %1715
        %v1719 = vsel %vm1110, %v1430, %v1547
        %v1722 = vsel %vm1110, %v1432, %v1549
        %v1725 = vsel %vm1110, %v1434, %v1551
        %v1728 = vsel %vm1110, %v1436, %v1553
        %v1731 = vsel %vm1110, %v1438, %v1555
        %v1734 = vsel %vm1110, %v1440, %v1557
        %v1737 = vsel %vm1110, %v1442, %v1559
        %v1740 = vsel %vm1110, %v1444, %v1561
        %v1742 = vsel %vm1135, %v1719, %v1571
        %v1744 = vsel %vm1135, %v1722, %v1573
        %v1746 = vsel %vm1135, %v1725, %v1575
        %v1748 = vsel %vm1135, %v1728, %v1577
        %v1750 = vsel %vm1135, %v1731, %v1579
        %v1752 = vsel %vm1135, %v1734, %v1581
        %v1754 = vsel %vm1135, %v1737, %v1583
        %v1756 = vsel %vm1135, %v1740, %v1585
        %v1758 = vsel %vm1152, %v1742, %v1597
        %v1760 = vsel %vm1152, %v1744, %v1599
        %v1762 = vsel %vm1152, %v1746, %v1601
        %v1764 = vsel %vm1152, %v1748, %v1603
        %v1766 = vsel %vm1152, %v1750, %v1605
        %v1768 = vsel %vm1152, %v1752, %v1607
        %v1770 = vsel %vm1152, %v1754, %v1609
        %v1772 = vsel %vm1152, %v1756, %v1611
        %v1774 = vsel %vm1169, %v1758, %v1623
        %v1776 = vsel %vm1169, %v1760, %v1625
        %v1778 = vsel %vm1169, %v1762, %v1627
        %v1780 = vsel %vm1169, %v1764, %v1629
        %v1782 = vsel %vm1169, %v1766, %v1631
        %v1784 = vsel %vm1169, %v1768, %v1633
        %v1786 = vsel %vm1169, %v1770, %v1635
        %v1788 = vsel %vm1169, %v1772, %v1637
        %v1790 = vsel %vm1186, %v1774, %v1640
        %v1792 = vsel %vm1186, %v1776, %v1642
        %v1794 = vsel %vm1186, %v1778, %v1644
        %v1796 = vsel %vm1186, %v1780, %v1646
        %v1798 = vsel %vm1186, %v1782, %v1648
        %v1800 = vsel %vm1186, %v1784, %v1650
        %v1802 = vsel %vm1186, %v1786, %v1652
        %v1804 = vsel %vm1186, %v1788, %v1654
        %v1806 = vsel %vm1203, %v1790, %v1659
        %v1808 = vsel %vm1203, %v1792, %v1661
        %v1810 = vsel %vm1203, %v1794, %v1663
        %v1812 = vsel %vm1203, %v1796, %v1665
        %v1814 = vsel %vm1203, %v1798, %v1667
        %v1816 = vsel %vm1203, %v1800, %v1669
        %v1818 = vsel %vm1203, %v1802, %v1671
        %v1820 = vsel %vm1203, %v1804, %v1673
        %v1822 = vsel %vm1220, %v1806, %v1685
        %v1824 = vsel %vm1220, %v1808, %v1687
        %v1826 = vsel %vm1220, %v1810, %v1689
        %v1828 = vsel %vm1220, %v1812, %v1691
        %v1830 = vsel %vm1220, %v1814, %v1693
        %v1832 = vsel %vm1220, %v1816, %v1695
        %v1834 = vsel %vm1220, %v1818, %v1697
        %v1836 = vsel %vm1220, %v1820, %v1699
        %v1838 = vsel %vm1237, %v1822, %v1702
        %v1840 = vsel %vm1237, %v1824, %v1704
        %v1842 = vsel %vm1237, %v1826, %v1706
        %v1844 = vsel %vm1237, %v1828, %v1708
        %v1846 = vsel %vm1237, %v1830, %v1710
        %v1848 = vsel %vm1237, %v1832, %v1712
        %v1850 = vsel %vm1237, %v1834, %v1714
        %v1852 = vsel %vm1237, %v1836, %v1716
        %v1853 = vld [vmem:[%s2] sm:$0xf]
        %v1854 = vld [vmem:[%s2 + $0x4] sm:$0xf]
        %v1855 = vld [vmem:[%s2 + $0x8] sm:$0xf]
        %v1856 = vld [vmem:[%s2 + $0xc] sm:$0xf]
        %v1857 = vld [vmem:[%s2 + $0x10] sm:$0xf]
        %v1858 = vld [vmem:[%s2 + $0x14] sm:$0xf]
        %v1859 = vld [vmem:[%s2 + $0x18] sm:$0xf]
        %v1860 = vld [vmem:[%s2 + $0x1c] sm:$0xf]
        %v1861 = vld [vmem:[%s2 + $0x20] sm:$0xf]
        %v1870 = vunpack.c.l.b16 %v1838
        %v1871 = vunpack.c.l.b16 %v1840
        %v1872 = vunpack.c.l.b16 %v1842
        %v1873 = vunpack.c.l.b16 %v1844
        %v1874 = vunpack.c.l.b16 %v1846
        %v1875 = vunpack.c.l.b16 %v1848
        %v1876 = vunpack.c.l.b16 %v1850
        %v1877 = vunpack.c.l.b16 %v1852
        %v1878 = vpack.c.b16 %v1871, %v1870
        %v1879 = vpack.c.b16 %v1873, %v1872
        %v1880 = vpack.c.b16 %v1875, %v1874
        %v1881 = vpack.c.b16 %v1877, %v1876
        %v1891 = vunpack.c.l.b16 %v1853
        %v1892 = vunpack.c.l.b16 %v1854
        %v1893 = vunpack.c.l.b16 %v1855
        %v1894 = vunpack.c.l.b16 %v1856
        %v1895 = vunpack.c.l.b16 %v1857
        %v1896 = vunpack.c.l.b16 %v1858
        %v1897 = vunpack.c.l.b16 %v1859
        %v1898 = vunpack.c.l.b16 %v1860
        %v1899 = vunpack.c.l.b16 %v1861
        %v1900 = vpack.c.b16 %v1892, %v1891
        %v1901 = vpack.c.b16 %v1894, %v1893
        %v1902 = vpack.c.b16 %v1896, %v1895
        %v1903 = vpack.c.b16 %v1898, %v1897
        %v1904 = vpack.c.b16 %v1899, %v1899
        %v1910 = vsel %vm1311, %v1878, 0
        %v1913 = vsel %vm1311, %v1879, 0
        %v1916 = vsel %vm1311, %v1880, 0
        %v1919 = vsel %vm1311, %v1881, 0
        %v1922 = vsel %vm1324, %v1904, 0
        %1924 = vmatprep.subr.bf16.mxu0 0
        %1925 = vmatpush1.bf16.msra.mxu0 %v1900
        %1926 = vmatprep.subr.bf16.mxu0 0
        %1927 = vmatpush1.bf16.msra.mxu0 %v1901
        %1928 = vmatprep.subr.bf16.mxu0 0
        %1929 = vmatpush1.bf16.msra.mxu0 %v1902
        %1930 = vmatprep.subr.bf16.mxu0 0
        %1931 = vmatpush1.bf16.msra.mxu0 %v1903
        %1932 = vmatprep.subr.bf16.mxu0 0
        %1933 = vmatpush1.bf16.msra.mxu0 %v1922
        %1934 = vmatprep.subr.bf16.mxu0 0
        %1935 = vmatpush1.bf16.msra.mxu0 0
        %1936 = vmatprep.subr.bf16.mxu0 0
        %1937 = vmatpush1.bf16.msra.mxu0 0
        %1938 = vmatprep.subr.bf16.mxu0 0
        %1939 = vmatpush1.bf16.msra.mxu0 0
        %1940 = vmatprep.subr.bf16.mxu0 0
        %1941 = vmatpush1.bf16.msra.mxu0 0
        %1942 = vmatprep.subr.bf16.mxu0 0
        %1943 = vmatpush1.bf16.msra.mxu0 0
        %1944 = vmatprep.subr.bf16.mxu0 0
        %1945 = vmatpush1.bf16.msra.mxu0 0
        %1946 = vmatprep.subr.bf16.mxu0 0
        %1947 = vmatpush1.bf16.msra.mxu0 0
        %1948 = vmatprep.subr.bf16.mxu0 0
        %1949 = vmatpush1.bf16.msra.mxu0 0
        %1950 = vmatprep.subr.bf16.mxu0 0
        %1951 = vmatpush1.bf16.msra.mxu0 0
        %1952 = vmatprep.subr.bf16.mxu0 0
        %1953 = vmatpush1.bf16.msra.mxu0 0
        %1954 = vmatprep.subr.bf16.mxu0 0
        %1955 = vmatpush1.bf16.msra.mxu0 0
        %1956 = vmatprep.mubr.bf16.mxu0 0
        %1957 = vmatmul.mubr.bf16.gmra.mrb[0].mxu0 %v1910
        %v1958 = vpop.f32.mrb[0].mxu0
        %v1959 = vadd.f32 0.0, %v1958
        %v1960 = vpop.f32.mrb[0].mxu0
        %v1961 = vpop.f32.mrb[0].mxu0
        %v1962 = vadd.f32 0.0, %v1961
        %v1963 = vpop.f32.mrb[0].mxu0
        %1964 = vmatprep.mubr.bf16.mxu0 0
        %1965 = vmatmul.mubr.bf16.gmra.mrb[0].mxu0 %v1913
        %v1966 = vpop.f32.mrb[0].mxu0
        %v1967 = vadd.f32 0.0, %v1966
        %v1968 = vpop.f32.mrb[0].mxu0
        %v1969 = vpop.f32.mrb[0].mxu0
        %v1970 = vadd.f32 0.0, %v1969
        %v1971 = vpop.f32.mrb[0].mxu0
        %1972 = vmatprep.mubr.bf16.mxu0 0
        %1973 = vmatmul.mubr.bf16.gmra.mrb[0].mxu0 %v1916
        %v1974 = vpop.f32.mrb[0].mxu0
        %v1975 = vadd.f32 0.0, %v1974
        %v1976 = vpop.f32.mrb[0].mxu0
        %v1977 = vpop.f32.mrb[0].mxu0
        %v1978 = vadd.f32 0.0, %v1977
        %v1979 = vpop.f32.mrb[0].mxu0
        %1980 = vmatprep.mubr.bf16.mxu0 0
        %1981 = vmatmul.mubr.bf16.gmra.mrb[0].mxu0 %v1919
        %v1982 = vpop.f32.mrb[0].mxu0
        %v1983 = vadd.f32 0.0, %v1982
        %v1984 = vpop.f32.mrb[0].mxu0
        %v1985 = vpop.f32.mrb[0].mxu0
        %v1986 = vadd.f32 0.0, %v1985
        %v1987 = vpop.f32.mrb[0].mxu0
        %1988 = vdwg.mxu0
        %v1989 = vadd.f32 %v1405, %v1959
        %v1990 = vadd.f32 %v1406, %v1962
        %v1991 = vadd.f32 %v1407, %v1967
        %v1992 = vadd.f32 %v1408, %v1970
        %v1993 = vadd.f32 %v1409, %v1975
        %v1994 = vadd.f32 %v1410, %v1978
        %v1995 = vadd.f32 %v1411, %v1983
        %v1996 = vadd.f32 %v1412, %v1986
        %1997 = vst.msk [vmem:[#allocation3] sm:$0xff] %vm1110, %v1989
        %1998 = vst.msk [vmem:[#allocation3 + $0x8] sm:$0xff] %vm1110, %v1990
        %1999 = vst.msk [vmem:[#allocation3 + $0x10] sm:$0xff] %vm1110, %v1991
        %2000 = vst.msk [vmem:[#allocation3 + $0x18] sm:$0xff] %vm1110, %v1992
        %2001 = vst.msk [vmem:[#allocation3 + $0x20] sm:$0xff] %vm1110, %v1993
        %2002 = vst.msk [vmem:[#allocation3 + $0x28] sm:$0xff] %vm1110, %v1994
        %2003 = vst.msk [vmem:[#allocation3 + $0x30] sm:$0xff] %vm1110, %v1995
        %2004 = vst.msk [vmem:[#allocation3 + $0x38] sm:$0xff] %vm1110, %v1996
      $region52: #{double_conv_forward.4} parent=39 // pred_fallthru
        _
      // Predicated region
      $region53: #{double_conv_forward.4} parent=39 // pred_check
        %p2005 = pneg %p593
      $region54: #{double_conv_forward.4} parent=39 // pred_check_branch
        %2007 = sbr.rel (%p2005) target = $region56
      $region55: #{double_conv_forward.4} parent=39 // pred_region
        %v2008 = vld [vmem:[#allocation3] sm:$0xff]
        %v2009 = vld [vmem:[#allocation3 + $0x8] sm:$0xff]
        %v2010 = vld [vmem:[#allocation3 + $0x10] sm:$0xff]
        %v2011 = vld [vmem:[#allocation3 + $0x18] sm:$0xff]
        %v2012 = vld [vmem:[#allocation3 + $0x20] sm:$0xff]
        %v2013 = vld [vmem:[#allocation3 + $0x28] sm:$0xff]
        %v2014 = vld [vmem:[#allocation3 + $0x30] sm:$0xff]
        %v2015 = vld [vmem:[#allocation3 + $0x38] sm:$0xff]
        %p2016 = scmp.lt.s32.totalorder %s592, 0
        %s2017 = ssub.s32 0, %s592
        %s2018 = scalar_select %p2016, %s2017, %s592
        %s2019 = sdiv.u32.pop %s2018, 3
        %s2020 = srem.u32.pop %s2018, 3
        %s2021 = ssub.s32 0, %s2020
        %s2022 = scalar_select %p2016, %s2021, %s2020
        %p2023 = scmp.ne.s32.totalorder %s2022, 0
        %p2024 = scmp.lt.s32.totalorder %s2022, 0
        %p2025 = pnand %p2024, %p2023
        %p2026 = pneg %p2025
        %s2027 = sadd.s32 %s2022, 3
        %s2028 = scalar_select %p2026, %s2027, %s2022
        %s2029 = smul.u32 %s2028, 20
        %s2030 = smul.addr %s2029, 4
        %s2031 = scalar_lea.vmem [#allocation2], %s2030
        %v2032 = vld [vmem:[%s2031] sm:$0xf]
        %v2033 = vld [vmem:[%s2031 + $0x4] sm:$0x1]
        %v2034 = vld [vmem:[%s2031 + $0x8] sm:$0xf]
        %v2035 = vld [vmem:[%s2031 + $0xc] sm:$0x1]
        %v2036 = vld [vmem:[%s2031 + $0x10] sm:$0xf]
        %v2037 = vld [vmem:[%s2031 + $0x14] sm:$0x1]
        %v2038 = vld [vmem:[%s2031 + $0x18] sm:$0xf]
        %v2039 = vld [vmem:[%s2031 + $0x1c] sm:$0x1]
        %v2040 = vld [vmem:[%s2031 + $0x20] sm:$0xf]
        %v2041 = vld [vmem:[%s2031 + $0x24] sm:$0x1]
        %v2042 = vld [vmem:[%s2031 + $0x28] sm:$0xf]
        %v2043 = vld [vmem:[%s2031 + $0x2c] sm:$0x1]
        %v2044 = vld [vmem:[%s2031 + $0x30] sm:$0xf]
        %v2045 = vld [vmem:[%s2031 + $0x34] sm:$0x1]
        %v2046 = vld [vmem:[%s2031 + $0x38] sm:$0xf]
        %v2047 = vld [vmem:[%s2031 + $0x3c] sm:$0x1]
        %v2048 = vld [vmem:[%s2031 + $0x40] sm:$0xf]
        %v2049 = vld [vmem:[%s2031 + $0x44] sm:$0x1]
        %v2050 = vld [vmem:[%s2031 + $0x48] sm:$0xf]
        %v2051 = vld [vmem:[%s2031 + $0x4c] sm:$0x1]
        %v2068 = vunpack.c.l.b16 %v2032
        %v2069 = vunpack.c.l.b16 %v2033
        %v2070 = vunpack.c.l.b16 %v2034
        %v2071 = vunpack.c.l.b16 %v2035
        %v2072 = vunpack.c.l.b16 %v2036
        %v2073 = vunpack.c.l.b16 %v2037
        %v2074 = vunpack.c.l.b16 %v2038
        %v2075 = vunpack.c.l.b16 %v2039
        %v2076 = vunpack.c.l.b16 %v2040
        %v2077 = vunpack.c.l.b16 %v2041
        %v2078 = vunpack.c.l.b16 %v2042
        %v2079 = vunpack.c.l.b16 %v2043
        %v2080 = vunpack.c.l.b16 %v2044
        %v2081 = vunpack.c.l.b16 %v2045
        %v2082 = vunpack.c.l.b16 %v2046
        %v2083 = vunpack.c.l.b16 %v2047
        %v2084 = vpack.c.b16 %v2069, %v2068
        %v2085 = vpack.c.b16 %v2071, %v2070
        %v2086 = vpack.c.b16 %v2073, %v2072
        %v2087 = vpack.c.b16 %v2075, %v2074
        %v2088 = vpack.c.b16 %v2077, %v2076
        %v2089 = vpack.c.b16 %v2079, %v2078
        %v2090 = vpack.c.b16 %v2081, %v2080
        %v2091 = vpack.c.b16 %v2083, %v2082
        %v2093 = vshrl.u32 %v2084, 16
        %v2095 = vshll.u32 %v2084, 16
        %v2097 = vrot.slane %v2095, 1
        %v2098 = vor.u32 %v2093, %v2097
        %v2100 = vshrl.u32 %v2085, 16
        %v2102 = vshll.u32 %v2085, 16
        %v2104 = vrot.slane %v2102, 1
        %v2105 = vor.u32 %v2100, %v2104
        %v2107 = vshrl.u32 %v2086, 16
        %v2109 = vshll.u32 %v2086, 16
        %v2111 = vrot.slane %v2109, 1
        %v2112 = vor.u32 %v2107, %v2111
        %v2114 = vshrl.u32 %v2087, 16
        %v2116 = vshll.u32 %v2087, 16
        %v2118 = vrot.slane %v2116, 1
        %v2119 = vor.u32 %v2114, %v2118
        %v2121 = vshrl.u32 %v2088, 16
        %v2123 = vshll.u32 %v2088, 16
        %v2125 = vrot.slane %v2123, 1
        %v2126 = vor.u32 %v2121, %v2125
        %v2128 = vshrl.u32 %v2089, 16
        %v2130 = vshll.u32 %v2089, 16
        %v2132 = vrot.slane %v2130, 1
        %v2133 = vor.u32 %v2128, %v2132
        %v2135 = vshrl.u32 %v2090, 16
        %v2137 = vshll.u32 %v2090, 16
        %v2139 = vrot.slane %v2137, 1
        %v2140 = vor.u32 %v2135, %v2139
        %v2142 = vshrl.u32 %v2091, 16
        %v2144 = vshll.u32 %v2091, 16
        %v2146 = vrot.slane %v2144, 1
        %v2147 = vor.u32 %v2142, %v2146
        %2148 = vrot.lane.b32.xlu0 %v2098, 8
        %v2149 = vpop.permute.xlu0 %2148
        %2150 = vrot.lane.b32.xlu0 %v2105, 8
        %v2151 = vpop.permute.xlu0 %2150
        %2152 = vrot.lane.b32.xlu0 %v2112, 8
        %v2153 = vpop.permute.xlu0 %2152
        %2154 = vrot.lane.b32.xlu0 %v2119, 8
        %v2155 = vpop.permute.xlu0 %2154
        %2156 = vrot.lane.b32.xlu0 %v2126, 8
        %v2157 = vpop.permute.xlu0 %2156
        %2158 = vrot.lane.b32.xlu0 %v2133, 8
        %v2159 = vpop.permute.xlu0 %2158
        %2160 = vrot.lane.b32.xlu0 %v2140, 8
        %v2161 = vpop.permute.xlu0 %2160
        %2162 = vrot.lane.b32.xlu0 %v2147, 8
        %v2163 = vpop.permute.xlu0 %2162
        %v2164 = vrot.slane %v2084, 1
        %v2165 = vrot.slane %v2085, 1
        %v2166 = vrot.slane %v2086, 1
        %v2167 = vrot.slane %v2087, 1
        %v2168 = vrot.slane %v2088, 1
        %v2169 = vrot.slane %v2089, 1
        %v2170 = vrot.slane %v2090, 1
        %v2171 = vrot.slane %v2091, 1
        %2172 = vrot.lane.b32.xlu0 %v2164, 16
        %v2173 = vpop.permute.xlu0 %2172
        %2174 = vrot.lane.b32.xlu0 %v2165, 16
        %v2175 = vpop.permute.xlu0 %2174
        %2176 = vrot.lane.b32.xlu0 %v2166, 16
        %v2177 = vpop.permute.xlu0 %2176
        %2178 = vrot.lane.b32.xlu0 %v2167, 16
        %v2179 = vpop.permute.xlu0 %2178
        %2180 = vrot.lane.b32.xlu0 %v2168, 16
        %v2181 = vpop.permute.xlu0 %2180
        %2182 = vrot.lane.b32.xlu0 %v2169, 16
        %v2183 = vpop.permute.xlu0 %2182
        %2184 = vrot.lane.b32.xlu0 %v2170, 16
        %v2185 = vpop.permute.xlu0 %2184
        %2186 = vrot.lane.b32.xlu0 %v2171, 16
        %v2187 = vpop.permute.xlu0 %2186
        %v2189 = vunpack.c.l.b16 %v2048
        %v2190 = vpack.c.b16 %v2070, %v2070
        %v2191 = vpack.c.b16 %v2072, %v2072
        %v2192 = vpack.c.b16 %v2074, %v2074
        %v2193 = vpack.c.b16 %v2076, %v2076
        %v2194 = vpack.c.b16 %v2078, %v2078
        %v2195 = vpack.c.b16 %v2080, %v2080
        %v2196 = vpack.c.b16 %v2082, %v2082
        %v2197 = vpack.c.b16 %v2189, %v2189
        %2198 = vrot.lane.b32.xlu0 %v2190, 24
        %v2199 = vpop.permute.xlu0 %2198
        %2200 = vrot.lane.b32.xlu0 %v2191, 24
        %v2201 = vpop.permute.xlu0 %2200
        %2202 = vrot.lane.b32.xlu0 %v2192, 24
        %v2203 = vpop.permute.xlu0 %2202
        %2204 = vrot.lane.b32.xlu0 %v2193, 24
        %v2205 = vpop.permute.xlu0 %2204
        %2206 = vrot.lane.b32.xlu0 %v2194, 24
        %v2207 = vpop.permute.xlu0 %2206
        %2208 = vrot.lane.b32.xlu0 %v2195, 24
        %v2209 = vpop.permute.xlu0 %2208
        %2210 = vrot.lane.b32.xlu0 %v2196, 24
        %v2211 = vpop.permute.xlu0 %2210
        %2212 = vrot.lane.b32.xlu0 %v2197, 24
        %v2213 = vpop.permute.xlu0 %2212
        %v2215 = vunpack.c.l.b16 %v2049
        %v2216 = vpack.c.b16 %v2215, %v2189
        %v2218 = vshrl.u32 %v2216, 16
        %v2220 = vshll.u32 %v2216, 16
        %v2222 = vrot.slane %v2220, 1
        %v2223 = vor.u32 %v2218, %v2222
        %2224 = vrot.lane.b32.xlu0 %v2105, 32
        %v2225 = vpop.permute.xlu0 %2224
        %2226 = vrot.lane.b32.xlu0 %v2112, 32
        %v2227 = vpop.permute.xlu0 %2226
        %2228 = vrot.lane.b32.xlu0 %v2119, 32
        %v2229 = vpop.permute.xlu0 %2228
        %2230 = vrot.lane.b32.xlu0 %v2126, 32
        %v2231 = vpop.permute.xlu0 %2230
        %2232 = vrot.lane.b32.xlu0 %v2133, 32
        %v2233 = vpop.permute.xlu0 %2232
        %2234 = vrot.lane.b32.xlu0 %v2140, 32
        %v2235 = vpop.permute.xlu0 %2234
        %2236 = vrot.lane.b32.xlu0 %v2147, 32
        %v2237 = vpop.permute.xlu0 %2236
        %2238 = vrot.lane.b32.xlu0 %v2223, 32
        %v2239 = vpop.permute.xlu0 %2238
        %v2240 = vrot.slane %v2216, 1
        %2241 = vrot.lane.b32.xlu0 %v2165, 40
        %v2242 = vpop.permute.xlu0 %2241
        %2243 = vrot.lane.b32.xlu0 %v2166, 40
        %v2244 = vpop.permute.xlu0 %2243
        %2245 = vrot.lane.b32.xlu0 %v2167, 40
        %v2246 = vpop.permute.xlu0 %2245
        %2247 = vrot.lane.b32.xlu0 %v2168, 40
        %v2248 = vpop.permute.xlu0 %2247
        %2249 = vrot.lane.b32.xlu0 %v2169, 40
        %v2250 = vpop.permute.xlu0 %2249
        %2251 = vrot.lane.b32.xlu0 %v2170, 40
        %v2252 = vpop.permute.xlu0 %2251
        %2253 = vrot.lane.b32.xlu0 %v2171, 40
        %v2254 = vpop.permute.xlu0 %2253
        %2255 = vrot.lane.b32.xlu0 %v2240, 40
        %v2256 = vpop.permute.xlu0 %2255
        %v2258 = vunpack.c.l.b16 %v2050
        %v2259 = vpack.c.b16 %v2258, %v2258
        %2260 = vrot.lane.b32.xlu0 %v2191, 48
        %v2261 = vpop.permute.xlu0 %2260
        %2262 = vrot.lane.b32.xlu0 %v2192, 48
        %v2263 = vpop.permute.xlu0 %2262
        %2264 = vrot.lane.b32.xlu0 %v2193, 48
        %v2265 = vpop.permute.xlu0 %2264
        %2266 = vrot.lane.b32.xlu0 %v2194, 48
        %v2267 = vpop.permute.xlu0 %2266
        %2268 = vrot.lane.b32.xlu0 %v2195, 48
        %v2269 = vpop.permute.xlu0 %2268
        %2270 = vrot.lane.b32.xlu0 %v2196, 48
        %v2271 = vpop.permute.xlu0 %2270
        %2272 = vrot.lane.b32.xlu0 %v2197, 48
        %v2273 = vpop.permute.xlu0 %2272
        %2274 = vrot.lane.b32.xlu0 %v2259, 48
        %v2275 = vpop.permute.xlu0 %2274
        %v2277 = vunpack.c.l.b16 %v2051
        %v2278 = vpack.c.b16 %v2277, %v2258
        %v2280 = vshrl.u32 %v2278, 16
        %v2282 = vshll.u32 %v2278, 16
        %v2284 = vrot.slane %v2282, 1
        %v2285 = vor.u32 %v2280, %v2284
        %2286 = vrot.lane.b32.xlu0 %v2112, 56
        %v2287 = vpop.permute.xlu0 %2286
        %2288 = vrot.lane.b32.xlu0 %v2119, 56
        %v2289 = vpop.permute.xlu0 %2288
        %2290 = vrot.lane.b32.xlu0 %v2126, 56
        %v2291 = vpop.permute.xlu0 %2290
        %2292 = vrot.lane.b32.xlu0 %v2133, 56
        %v2293 = vpop.permute.xlu0 %2292
        %2294 = vrot.lane.b32.xlu0 %v2140, 56
        %v2295 = vpop.permute.xlu0 %2294
        %2296 = vrot.lane.b32.xlu0 %v2147, 56
        %v2297 = vpop.permute.xlu0 %2296
        %2298 = vrot.lane.b32.xlu0 %v2223, 56
        %v2299 = vpop.permute.xlu0 %2298
        %2300 = vrot.lane.b32.xlu0 %v2285, 56
        %v2301 = vpop.permute.xlu0 %2300
        %v2302 = vrot.slane %v2278, 1
        %2303 = vrot.lane.b32.xlu0 %v2166, 64
        %v2304 = vpop.permute.xlu0 %2303
        %2305 = vrot.lane.b32.xlu0 %v2167, 64
        %v2306 = vpop.permute.xlu0 %2305
        %2307 = vrot.lane.b32.xlu0 %v2168, 64
        %v2308 = vpop.permute.xlu0 %2307
        %2309 = vrot.lane.b32.xlu0 %v2169, 64
        %v2310 = vpop.permute.xlu0 %2309
        %2311 = vrot.lane.b32.xlu0 %v2170, 64
        %v2312 = vpop.permute.xlu0 %2311
        %2313 = vrot.lane.b32.xlu0 %v2171, 64
        %v2314 = vpop.permute.xlu0 %2313
        %2315 = vrot.lane.b32.xlu0 %v2240, 64
        %v2316 = vpop.permute.xlu0 %2315
        %2317 = vrot.lane.b32.xlu0 %v2302, 64
        %v2318 = vpop.permute.xlu0 %2317
        %v2321 = vsel %vm1110, %v2032, %v2149
        %v2324 = vsel %vm1110, %v2034, %v2151
        %v2327 = vsel %vm1110, %v2036, %v2153
        %v2330 = vsel %vm1110, %v2038, %v2155
        %v2333 = vsel %vm1110, %v2040, %v2157
        %v2336 = vsel %vm1110, %v2042, %v2159
        %v2339 = vsel %vm1110, %v2044, %v2161
        %v2342 = vsel %vm1110, %v2046, %v2163
        %v2344 = vsel %vm1135, %v2321, %v2173
        %v2346 = vsel %vm1135, %v2324, %v2175
        %v2348 = vsel %vm1135, %v2327, %v2177
        %v2350 = vsel %vm1135, %v2330, %v2179
        %v2352 = vsel %vm1135, %v2333, %v2181
        %v2354 = vsel %vm1135, %v2336, %v2183
        %v2356 = vsel %vm1135, %v2339, %v2185
        %v2358 = vsel %vm1135, %v2342, %v2187
        %v2360 = vsel %vm1152, %v2344, %v2199
        %v2362 = vsel %vm1152, %v2346, %v2201
        %v2364 = vsel %vm1152, %v2348, %v2203
        %v2366 = vsel %vm1152, %v2350, %v2205
        %v2368 = vsel %vm1152, %v2352, %v2207
        %v2370 = vsel %vm1152, %v2354, %v2209
        %v2372 = vsel %vm1152, %v2356, %v2211
        %v2374 = vsel %vm1152, %v2358, %v2213
        %v2376 = vsel %vm1169, %v2360, %v2225
        %v2378 = vsel %vm1169, %v2362, %v2227
        %v2380 = vsel %vm1169, %v2364, %v2229
        %v2382 = vsel %vm1169, %v2366, %v2231
        %v2384 = vsel %vm1169, %v2368, %v2233
        %v2386 = vsel %vm1169, %v2370, %v2235
        %v2388 = vsel %vm1169, %v2372, %v2237
        %v2390 = vsel %vm1169, %v2374, %v2239
        %v2392 = vsel %vm1186, %v2376, %v2242
        %v2394 = vsel %vm1186, %v2378, %v2244
        %v2396 = vsel %vm1186, %v2380, %v2246
        %v2398 = vsel %vm1186, %v2382, %v2248
        %v2400 = vsel %vm1186, %v2384, %v2250
        %v2402 = vsel %vm1186, %v2386, %v2252
        %v2404 = vsel %vm1186, %v2388, %v2254
        %v2406 = vsel %vm1186, %v2390, %v2256
        %v2408 = vsel %vm1203, %v2392, %v2261
        %v2410 = vsel %vm1203, %v2394, %v2263
        %v2412 = vsel %vm1203, %v2396, %v2265
        %v2414 = vsel %vm1203, %v2398, %v2267
        %v2416 = vsel %vm1203, %v2400, %v2269
        %v2418 = vsel %vm1203, %v2402, %v2271
        %v2420 = vsel %vm1203, %v2404, %v2273
        %v2422 = vsel %vm1203, %v2406, %v2275
        %v2424 = vsel %vm1220, %v2408, %v2287
        %v2426 = vsel %vm1220, %v2410, %v2289
        %v2428 = vsel %vm1220, %v2412, %v2291
        %v2430 = vsel %vm1220, %v2414, %v2293
        %v2432 = vsel %vm1220, %v2416, %v2295
        %v2434 = vsel %vm1220, %v2418, %v2297
        %v2436 = vsel %vm1220, %v2420, %v2299
        %v2438 = vsel %vm1220, %v2422, %v2301
        %v2440 = vsel %vm1237, %v2424, %v2304
        %v2442 = vsel %vm1237, %v2426, %v2306
        %v2444 = vsel %vm1237, %v2428, %v2308
        %v2446 = vsel %vm1237, %v2430, %v2310
        %v2448 = vsel %vm1237, %v2432, %v2312
        %v2450 = vsel %vm1237, %v2434, %v2314
        %v2452 = vsel %vm1237, %v2436, %v2316
        %v2454 = vsel %vm1237, %v2438, %v2318
        %s2455 = scalar_lea.vmem %s2, 72
        %v2456 = vld [vmem:[%s2455] sm:$0xf]
        %v2457 = vld [vmem:[%s2455 + $0x4] sm:$0xf]
        %v2458 = vld [vmem:[%s2455 + $0x8] sm:$0xf]
        %v2459 = vld [vmem:[%s2455 + $0xc] sm:$0xf]
        %v2460 = vld [vmem:[%s2455 + $0x10] sm:$0xf]
        %v2461 = vld [vmem:[%s2455 + $0x14] sm:$0xf]
        %v2462 = vld [vmem:[%s2455 + $0x18] sm:$0xf]
        %v2463 = vld [vmem:[%s2455 + $0x1c] sm:$0xf]
        %v2464 = vld [vmem:[%s2455 + $0x20] sm:$0xf]
        %v2473 = vunpack.c.l.b16 %v2440
        %v2474 = vunpack.c.l.b16 %v2442
        %v2475 = vunpack.c.l.b16 %v2444
        %v2476 = vunpack.c.l.b16 %v2446
        %v2477 = vunpack.c.l.b16 %v2448
        %v2478 = vunpack.c.l.b16 %v2450
        %v2479 = vunpack.c.l.b16 %v2452
        %v2480 = vunpack.c.l.b16 %v2454
        %v2481 = vpack.c.b16 %v2474, %v2473
        %v2482 = vpack.c.b16 %v2476, %v2475
        %v2483 = vpack.c.b16 %v2478, %v2477
        %v2484 = vpack.c.b16 %v2480, %v2479
        %v2494 = vunpack.c.l.b16 %v2456
        %v2495 = vunpack.c.l.b16 %v2457
        %v2496 = vunpack.c.l.b16 %v2458
        %v2497 = vunpack.c.l.b16 %v2459
        %v2498 = vunpack.c.l.b16 %v2460
        %v2499 = vunpack.c.l.b16 %v2461
        %v2500 = vunpack.c.l.b16 %v2462
        %v2501 = vunpack.c.l.b16 %v2463
        %v2502 = vunpack.c.l.b16 %v2464
        %v2503 = vpack.c.b16 %v2495, %v2494
        %v2504 = vpack.c.b16 %v2497, %v2496
        %v2505 = vpack.c.b16 %v2499, %v2498
        %v2506 = vpack.c.b16 %v2501, %v2500
        %v2507 = vpack.c.b16 %v2502, %v2502
        %v2513 = vsel %vm1311, %v2481, 0
        %v2516 = vsel %vm1311, %v2482, 0
        %v2519 = vsel %vm1311, %v2483, 0
        %v2522 = vsel %vm1311, %v2484, 0
        %v2525 = vsel %vm1324, %v2507, 0
        %2527 = vmatprep.subr.bf16.mxu0 0
        %2528 = vmatpush1.bf16.msra.mxu0 %v2503
        %2529 = vmatprep.subr.bf16.mxu0 0
        %2530 = vmatpush1.bf16.msra.mxu0 %v2504
        %2531 = vmatprep.subr.bf16.mxu0 0
        %2532 = vmatpush1.bf16.msra.mxu0 %v2505
        %2533 = vmatprep.subr.bf16.mxu0 0
        %2534 = vmatpush1.bf16.msra.mxu0 %v2506
        %2535 = vmatprep.subr.bf16.mxu0 0
        %2536 = vmatpush1.bf16.msra.mxu0 %v2525
        %2537 = vmatprep.subr.bf16.mxu0 0
        %2538 = vmatpush1.bf16.msra.mxu0 0
        %2539 = vmatprep.subr.bf16.mxu0 0
        %2540 = vmatpush1.bf16.msra.mxu0 0
        %2541 = vmatprep.subr.bf16.mxu0 0
        %2542 = vmatpush1.bf16.msra.mxu0 0
        %2543 = vmatprep.subr.bf16.mxu0 0
        %2544 = vmatpush1.bf16.msra.mxu0 0
        %2545 = vmatprep.subr.bf16.mxu0 0
        %2546 = vmatpush1.bf16.msra.mxu0 0
        %2547 = vmatprep.subr.bf16.mxu0 0
        %2548 = vmatpush1.bf16.msra.mxu0 0
        %2549 = vmatprep.subr.bf16.mxu0 0
        %2550 = vmatpush1.bf16.msra.mxu0 0
        %2551 = vmatprep.subr.bf16.mxu0 0
        %2552 = vmatpush1.bf16.msra.mxu0 0
        %2553 = vmatprep.subr.bf16.mxu0 0
        %2554 = vmatpush1.bf16.msra.mxu0 0
        %2555 = vmatprep.subr.bf16.mxu0 0
        %2556 = vmatpush1.bf16.msra.mxu0 0
        %2557 = vmatprep.subr.bf16.mxu0 0
        %2558 = vmatpush1.bf16.msra.mxu0 0
        %2559 = vmatprep.mubr.bf16.mxu0 0
        %2560 = vmatmul.mubr.bf16.gmra.mrb[0].mxu0 %v2513
        %v2561 = vpop.f32.mrb[0].mxu0
        %v2562 = vadd.f32 0.0, %v2561
        %v2563 = vpop.f32.mrb[0].mxu0
        %v2564 = vpop.f32.mrb[0].mxu0
        %v2565 = vadd.f32 0.0, %v2564
        %v2566 = vpop.f32.mrb[0].mxu0
        %2567 = vmatprep.mubr.bf16.mxu0 0
        %2568 = vmatmul.mubr.bf16.gmra.mrb[0].mxu0 %v2516
        %v2569 = vpop.f32.mrb[0].mxu0
        %v2570 = vadd.f32 0.0, %v2569
        %v2571 = vpop.f32.mrb[0].mxu0
        %v2572 = vpop.f32.mrb[0].mxu0
        %v2573 = vadd.f32 0.0, %v2572
        %v2574 = vpop.f32.mrb[0].mxu0
        %2575 = vmatprep.mubr.bf16.mxu0 0
        %2576 = vmatmul.mubr.bf16.gmra.mrb[0].mxu0 %v2519
        %v2577 = vpop.f32.mrb[0].mxu0
        %v2578 = vadd.f32 0.0, %v2577
        %v2579 = vpop.f32.mrb[0].mxu0
        %v2580 = vpop.f32.mrb[0].mxu0
        %v2581 = vadd.f32 0.0, %v2580
        %v2582 = vpop.f32.mrb[0].mxu0
        %2583 = vmatprep.mubr.bf16.mxu0 0
        %2584 = vmatmul.mubr.bf16.gmra.mrb[0].mxu0 %v2522
        %v2585 = vpop.f32.mrb[0].mxu0
        %v2586 = vadd.f32 0.0, %v2585
        %v2587 = vpop.f32.mrb[0].mxu0
        %v2588 = vpop.f32.mrb[0].mxu0
        %v2589 = vadd.f32 0.0, %v2588
        %v2590 = vpop.f32.mrb[0].mxu0
        %2591 = vdwg.mxu0
        %v2592 = vadd.f32 %v2008, %v2562
        %v2593 = vadd.f32 %v2009, %v2565
        %v2594 = vadd.f32 %v2010, %v2570
        %v2595 = vadd.f32 %v2011, %v2573
        %v2596 = vadd.f32 %v2012, %v2578
        %v2597 = vadd.f32 %v2013, %v2581
        %v2598 = vadd.f32 %v2014, %v2586
        %v2599 = vadd.f32 %v2015, %v2589
        %2600 = vst.msk [vmem:[#allocation3] sm:$0xff] %vm1110, %v2592
        %2601 = vst.msk [vmem:[#allocation3 + $0x8] sm:$0xff] %vm1110, %v2593
        %2602 = vst.msk [vmem:[#allocation3 + $0x10] sm:$0xff] %vm1110, %v2594
        %2603 = vst.msk [vmem:[#allocation3 + $0x18] sm:$0xff] %vm1110, %v2595
        %2604 = vst.msk [vmem:[#allocation3 + $0x20] sm:$0xff] %vm1110, %v2596
        %2605 = vst.msk [vmem:[#allocation3 + $0x28] sm:$0xff] %vm1110, %v2597
        %2606 = vst.msk [vmem:[#allocation3 + $0x30] sm:$0xff] %vm1110, %v2598
        %2607 = vst.msk [vmem:[#allocation3 + $0x38] sm:$0xff] %vm1110, %v2599
      $region56: #{double_conv_forward.4} parent=39 // pred_fallthru
        _
      %v2608 = vld [vmem:[#allocation3] sm:$0xff]
      %v2609 = vld [vmem:[#allocation3 + $0x8] sm:$0xff]
      %v2610 = vld [vmem:[#allocation3 + $0x10] sm:$0xff]
      %v2611 = vld [vmem:[#allocation3 + $0x18] sm:$0xff]
      %v2612 = vld [vmem:[#allocation3 + $0x20] sm:$0xff]
      %v2613 = vld [vmem:[#allocation3 + $0x28] sm:$0xff]
      %v2614 = vld [vmem:[#allocation3 + $0x30] sm:$0xff]
      %v2615 = vld [vmem:[#allocation3 + $0x38] sm:$0xff]
      %2616 = vst.msk [vmem:[%s378] sm:$0xff] %vm1110, %v2608
      %2617 = vst.msk [vmem:[%s378 + $0x8] sm:$0xff] %vm1110, %v2609
      %2618 = vst.msk [vmem:[%s378 + $0x10] sm:$0xff] %vm1110, %v2610
      %2619 = vst.msk [vmem:[%s378 + $0x18] sm:$0xff] %vm1110, %v2611
      %2620 = vst.msk [vmem:[%s378 + $0x20] sm:$0xff] %vm1110, %v2612
      %2621 = vst.msk [vmem:[%s378 + $0x28] sm:$0xff] %vm1110, %v2613
      %2622 = vst.msk [vmem:[%s378 + $0x30] sm:$0xff] %vm1110, %v2614
      %2623 = vst.msk [vmem:[%s378 + $0x38] sm:$0xff] %vm1110, %v2615
      %v2624 = vsel %vm1110, %v2608, 0.0
      %v2625 = vsel %vm1110, %v2609, 0.0
      %v2626 = vadd.f32 %v2624, %v2625
      %v2627 = vsel %vm1110, %v2610, 0.0
      %v2628 = vadd.f32 %v2626, %v2627
      %v2629 = vsel %vm1110, %v2611, 0.0
      %v2630 = vadd.f32 %v2628, %v2629
      %v2631 = vsel %vm1110, %v2612, 0.0
      %v2632 = vadd.f32 %v2630, %v2631
      %v2633 = vsel %vm1110, %v2613, 0.0
      %v2634 = vadd.f32 %v2632, %v2633
      %v2635 = vsel %vm1110, %v2614, 0.0
      %v2636 = vadd.f32 %v2634, %v2635
      %v2637 = vsel %vm1110, %v2615, 0.0
      %v2638 = vadd.f32 %v2636, %v2637
      %v2639 = vrot.slane %v2638, 4
      %v2640 = vadd.f32 %v2638, %v2639
      %v2641 = vrot.slane %v2640, 2
      %v2642 = vadd.f32 %v2640, %v2641
      %v2643 = vrot.slane %v2642, 1
      %v2644 = vadd.f32 %v2642, %v2643
      %vm2645 = vcmask 57344
      %2646 = vst.msk [vmem:[%s385] sm:$0x1] %vm2645, %v2644
      %v2647 = vmul.f32 %v2608, %v2608
      %v2648 = vmul.f32 %v2609, %v2609
      %v2649 = vmul.f32 %v2610, %v2610
      %v2650 = vmul.f32 %v2611, %v2611
      %v2651 = vmul.f32 %v2612, %v2612
      %v2652 = vmul.f32 %v2613, %v2613
      %v2653 = vmul.f32 %v2614, %v2614
      %v2654 = vmul.f32 %v2615, %v2615
      %v2655 = vsel %vm1110, %v2647, 0.0
      %v2656 = vsel %vm1110, %v2648, 0.0
      %v2657 = vadd.f32 %v2655, %v2656
      %v2658 = vsel %vm1110, %v2649, 0.0
      %v2659 = vadd.f32 %v2657, %v2658
      %v2660 = vsel %vm1110, %v2650, 0.0
      %v2661 = vadd.f32 %v2659, %v2660
      %v2662 = vsel %vm1110, %v2651, 0.0
      %v2663 = vadd.f32 %v2661, %v2662
      %v2664 = vsel %vm1110, %v2652, 0.0
      %v2665 = vadd.f32 %v2663, %v2664
      %v2666 = vsel %vm1110, %v2653, 0.0
      %v2667 = vadd.f32 %v2665, %v2666
      %v2668 = vsel %vm1110, %v2654, 0.0
      %v2669 = vadd.f32 %v2667, %v2668
      %v2670 = vrot.slane %v2669, 4
      %v2671 = vadd.f32 %v2669, %v2670
      %v2672 = vrot.slane %v2671, 2
      %v2673 = vadd.f32 %v2671, %v2672
      %v2674 = vrot.slane %v2673, 1
      %v2675 = vadd.f32 %v2673, %v2674
      %2676 = vst.msk [vmem:[%s392] sm:$0x1] %vm2645, %v2675
      %p2677 = scmp.lt.s32.totalorder %s23, 1
      %s2678 = scalar_select %p2677, %s23, 1
      %p2679 = scmp.lt.s32.totalorder %s24, 7
      %s2680 = scalar_select %p2679, %s24, 7
      %s2681 = smul.addr %s2680, 8
      %s2682 = smul.addr %s2678, 64
      %s2683 = sadd.s32 %s2681, %s2682
      %s2684 = smul.addr %s2683, 8
      %s2685 = scalar_lea.vmem %s5, %s2684
      %p2686 = scmp.lt.s32.totalorder %s23, 1
      %s2687 = scalar_select %p2686, %s23, 1
      %p2688 = scmp.lt.s32.totalorder %s24, 7
      %s2689 = scalar_select %p2688, %s24, 7
      %s2690 = smul.addr %s2687, 8
      %s2691 = sadd.s32 %s2689, %s2690
      %s2692 = scalar_lea.vmem %s6, %s2691
      %p2693 = scmp.lt.s32.totalorder %s23, 1
      %s2694 = scalar_select %p2693, %s23, 1
      %p2695 = scmp.lt.s32.totalorder %s24, 7
      %s2696 = scalar_select %p2695, %s24, 7
      %s2697 = smul.addr %s2694, 8
      %s2698 = sadd.s32 %s2696, %s2697
      %s2699 = scalar_lea.vmem %s7, %s2698
      // Predicated region
      $region57: #{double_conv_forward.4} parent=39 // pred_check
        %p2700 = pneg %p174
      $region58: #{double_conv_forward.4} parent=39 // pred_check_branch
        %2702 = sbr.rel (%p2700) target = $region60
      $region59: #{double_conv_forward.4} parent=39 // pred_region
        _
      $region60: #{double_conv_forward.4} parent=39 // pred_fallthru
        _
      // Predicated region
      $region61: #{double_conv_forward.4} parent=39 // pred_check
        %p2703 = pneg %p202
      $region62: #{double_conv_forward.4} parent=39 // pred_check_branch
        %2705 = sbr.rel (%p2703) target = $region64
      $region63: #{double_conv_forward.4} parent=39 // pred_region
        _
      $region64: #{double_conv_forward.4} parent=39 // pred_fallthru
        _
      // Predicated region
      $region65: #{double_conv_forward.4} parent=39 // pred_check
        %p2706 = pneg %p230
      $region66: #{double_conv_forward.4} parent=39 // pred_check_branch
        %2708 = sbr.rel (%p2706) target = $region68
      $region67: #{double_conv_forward.4} parent=39 // pred_region
        _
      $region68: #{double_conv_forward.4} parent=39 // pred_fallthru
        _
    $region40: #{double_conv_forward.4} parent=5 // pred_fallthru
      _
    %p2709 = scmp.le.s32.totalorder 2, %s14
    // Predicated region
    $region69: #{double_conv_forward.4} parent=5 // pred_check
      %p2710 = pneg %p2709
    $region70: #{double_conv_forward.4} parent=5 // pred_check_branch
      %2712 = sbr.rel (%p2710) target = $region72
    $region71: #{double_conv_forward.4} parent=5 // pred_region
      %s2713 = ssub.s32 %s14, 2
      // Predicated region
      $region73: #{double_conv_forward.4} parent=71 // pred_check
        %p2714 = pneg %p180
      $region74: #{double_conv_forward.4} parent=71 // pred_check_branch
        %2716 = sbr.rel (%p2714) target = $region76
      $region75: #{double_conv_forward.4} parent=71 // pred_region
        %p2717 = scmp.lt.s32.totalorder %s25, 1
        %s2718 = scalar_select %p2717, %s25, 1
        %p2719 = scmp.lt.s32.totalorder %s26, 7
        %s2720 = scalar_select %p2719, %s26, 7
        %s2721 = smul.addr %s2720, 8
        %s2722 = smul.addr %s2718, 64
        %s2723 = sadd.s32 %s2721, %s2722
        %s2724 = smul.addr %s2723, 8
        %s2725 = scalar_lea.vmem %s5, %s2724
      $region76: #{double_conv_forward.4} parent=71 // pred_fallthru
        _
      // Predicated region
      $region77: #{double_conv_forward.4} parent=71 // pred_check
        %p2726 = pneg %p208
      $region78: #{double_conv_forward.4} parent=71 // pred_check_branch
        %2728 = sbr.rel (%p2726) target = $region80
      $region79: #{double_conv_forward.4} parent=71 // pred_region
        %p2729 = scmp.lt.s32.totalorder %s25, 1
        %s2730 = scalar_select %p2729, %s25, 1
        %p2731 = scmp.lt.s32.totalorder %s26, 7
        %s2732 = scalar_select %p2731, %s26, 7
        %s2733 = smul.addr %s2730, 8
        %s2734 = sadd.s32 %s2732, %s2733
        %s2735 = scalar_lea.vmem %s6, %s2734
      $region80: #{double_conv_forward.4} parent=71 // pred_fallthru
        _
      // Predicated region
      $region81: #{double_conv_forward.4} parent=71 // pred_check
        %p2736 = pneg %p236
      $region82: #{double_conv_forward.4} parent=71 // pred_check_branch
        %2738 = sbr.rel (%p2736) target = $region84
      $region83: #{double_conv_forward.4} parent=71 // pred_region
        %p2739 = scmp.lt.s32.totalorder %s25, 1
        %s2740 = scalar_select %p2739, %s25, 1
        %p2741 = scmp.lt.s32.totalorder %s26, 7
        %s2742 = scalar_select %p2741, %s26, 7
        %s2743 = smul.addr %s2740, 8
        %s2744 = sadd.s32 %s2742, %s2743
        %s2745 = scalar_lea.vmem %s7, %s2744
      $region84: #{double_conv_forward.4} parent=71 // pred_fallthru
        _
    $region72: #{double_conv_forward.4} parent=5 // pred_fallthru
      _
  $region6: #{double_conv_forward.4} parent=0 // loop_footer
    %s18 = sadd.s32 1, %s14
  $region7: #{double_conv_forward.4} parent=0 // loop_footer_branch
    %13 = sbr.rel target = $region3
  $region8: #{double_conv_forward.4} parent=0 // loop_exit
    _

</llo_original>
